<compile_context>
chip_gen: v5e
topology: v5e:2x2
jax: 0.10.0
libtpu: 0.0.40
codegen_flags: <defaults>
</compile_context>

<pallas_src>
from functools import partial

import jax
import jax.numpy as jnp
from jax.experimental import pallas as pl
from jax.experimental.pallas import tpu as pltpu


def _relu_group_conv_kernel(x_ref, w_ref, o_ref):
    # x_ref: (Gs, cg*9, P)   bf16  -- im2col slab, taps*cin on sublanes, spatial on lanes
    # w_ref: (Gs, cg_out, cg*9) bf16
    # o_ref: (Gs, cg_out, P) f32
    x = jnp.maximum(x_ref[...], 0)            # ReLU (exact in bf16; relu(0)=0 so pad ok)
    w = w_ref[...]
    # One batched contraction over all groups in this step: K = cg*9 = 216.
    res = jnp.einsum("gok,gkp->gop", w, x, preferred_element_type=jnp.float32)
    o_ref[...] = res.astype(o_ref.dtype)


def relu_grouped_conv2d(x, w, *, groups, stride=2, padding=1):
    """ReLU followed by grouped conv2d (k=3, stride=2, pad=1, no bias), NCHW."""
    n, c, h, wd = x.shape
    cout, cg_in, kh, kw = w.shape
    assert n == 1, "kernel specialized to batch 1 (matches the module)"
    assert c % groups == 0 and cout % groups == 0
    cg = c // groups
    cog = cout // groups
    assert cg_in == cg and kh == 3 and kw == 3 and stride == 2 and padding == 1

    hout = (h + 2 * padding - kh) // stride + 1
    wout = (wd + 2 * padding - kw) // stride + 1
    p = hout * wout
    k_taps = kh * kw

    # --- single fused layout pass: pad + stride-2 tap slices + pack + bf16 cast ---
    # (per review: cheapest acceptable prep; produces exactly the lane-dense slab
    #  the kernel wants. K index ordering is tap*cg + ci for both x and w.)
    xp = jnp.pad(x[0], ((0, 0), (padding, padding), (padding, padding)))      # (C,Hp,Wp)
    taps = jnp.stack(
        [xp[:, i:i + stride * hout:stride, j:j + stride * wout:stride]
         for i in range(kh) for j in range(kw)], axis=0)                      # (9,C,ho,wo)
    xcol = taps.reshape(k_taps, groups, cg, p)                                # (9,G,cg,P)
    xcol = xcol.transpose(1, 0, 2, 3).reshape(groups, k_taps * cg, p)
    xcol = xcol.astype(jnp.bfloat16)                                          # (G,216,49)

    w2 = w.reshape(groups, cog, cg, k_taps).transpose(0, 1, 3, 2)             # (G,co,9,cg)
    w2 = w2.reshape(groups, cog, k_taps * cg).astype(jnp.bfloat16)            # (G,24,216)

    # 2 grid steps when possible so v7x can shard groups across its 2 TensorCores.
    steps = 2 if groups % 2 == 0 else 1
    gs = groups // steps

    out = pl.pallas_call(
        _relu_group_conv_kernel,
        out_shape=jax.ShapeDtypeStruct((groups, cog, p), jnp.float32),
        grid=(steps,),
        in_specs=[
            pl.BlockSpec((gs, k_taps * cg, p), lambda s: (s, 0, 0)),
            pl.BlockSpec((gs, cog, k_taps * cg), lambda s: (s, 0, 0)),
        ],
        out_specs=pl.BlockSpec((gs, cog, p), lambda s: (s, 0, 0)),
        compiler_params=pltpu.CompilerParams(
            dimension_semantics=("parallel",)),
    )(xcol, w2)

    # (G, cg_out, Hout*Wout) -> (1, C, Hout, Wout): contiguous reshape, no transpose.
    return out.reshape(n, cout, hout, wout).astype(x.dtype)


if __name__ == "__main__":
    key = jax.random.PRNGKey(0)
    kx, kw_ = jax.random.split(key)

    # Shapes implied by the module: x173 = randn([1, 912, 14, 14]),
    # Conv2d(912, 912, 3x3, stride 2, pad 1, groups=38) -> [1, 912, 7, 7]
    N, C, H, W = 1, 912, 14, 14
    GROUPS = 38
    CG = C // GROUPS  # 24

    x = jax.random.normal(kx, (N, C, H, W), dtype=jnp.float32)
    w = jax.random.normal(kw_, (C, CG, 3, 3), dtype=jnp.float32) * 0.05

    fn = jax.jit(partial(relu_grouped_conv2d, groups=GROUPS))
    out = jax.block_until_ready(fn(x, w))
    assert out.shape == (N, C, 7, 7), out.shape

    # reference check against XLA's grouped conv (f32); tolerance loosened for
    # the bf16 matmul inputs (fp32 accumulation).
    ref = jax.lax.conv_general_dilated(
        jnp.maximum(x, 0.0), w,
        window_strides=(2, 2), padding=((1, 1), (1, 1)),
        dimension_numbers=("NCHW", "OIHW", "NCHW"),
        feature_group_count=GROUPS)
    max_err = float(jnp.max(jnp.abs(out - ref)))
    assert jnp.allclose(out, ref, atol=3e-2, rtol=3e-2), max_err

    print("KERNEL_OK")
</pallas_src>

<mosaic_0001>
module attributes {stable_mosaic.version = 11 : i64} {
  func.func @_relu_group_conv_kernel(%arg0: i32, %arg1: memref<19x216x49xbf16, #tpu.memory_space<vmem>>, %arg2: memref<19x24x216xbf16, #tpu.memory_space<vmem>>, %arg3: memref<19x24x49xf32, #tpu.memory_space<vmem>>) attributes {dimension_semantics = [#tpu.dimension_semantics<parallel>], iteration_bounds = array<i64: 2>, scalar_prefetch = 0 : i64, scratch_operands = 0 : i64, tpu.core_type = #tpu.core_type<tc>, window_params = [{transform_indices = @transform_0, window_bounds = array<i64: 19, 216, 49>}, {transform_indices = @transform_1, window_bounds = array<i64: 19, 24, 216>}, {transform_indices = @transform_2, window_bounds = array<i64: 19, 24, 49>}]} {
    %c0 = arith.constant 0 : index
    %c0_0 = arith.constant 0 : index
    %c0_1 = arith.constant 0 : index
    %0 = vector.load %arg1[%c0, %c0_0, %c0_1] : memref<19x216x49xbf16, #tpu.memory_space<vmem>>, vector<19x216x49xbf16>
    %cst = arith.constant 0.000000e+00 : bf16
    %1 = vector.broadcast %cst : bf16 to vector<19x216x49xbf16>
    %2 = arith.maximumf %0, %1 : vector<19x216x49xbf16>
    %c0_2 = arith.constant 0 : index
    %c0_3 = arith.constant 0 : index
    %c0_4 = arith.constant 0 : index
    %3 = vector.load %arg2[%c0_2, %c0_3, %c0_4] : memref<19x24x216xbf16, #tpu.memory_space<vmem>>, vector<19x24x216xbf16>
    "tpu.trace_start"() <{level = 10 : i32, message = "gok,gkp->gop"}> : () -> ()
    %cst_5 = arith.constant dense<0.000000e+00> : vector<19x24x49xf32>
    %4 = tpu.matmul %3, %2, %cst_5 {dimension_numbers = #tpu.dot_dimension_numbers<[2], [1], [1], [2], [0, 0, 0, 1, 1, 2], [0], [0]>} : vector<19x24x216xbf16>, vector<19x216x49xbf16>, vector<19x24x49xf32> -> vector<19x24x49xf32>
    "tpu.trace_stop"() : () -> ()
    %c0_6 = arith.constant 0 : index
    %c0_7 = arith.constant 0 : index
    %c0_8 = arith.constant 0 : index
    %5 = vector.load %arg3[%c0_6, %c0_7, %c0_8] : memref<19x24x49xf32, #tpu.memory_space<vmem>>, vector<19x24x49xf32>
    tpu.vector_store %arg3[%c0_6, %c0_7, %c0_8], %4 {strides = array<i32>} : memref<19x24x49xf32, #tpu.memory_space<vmem>>, vector<19x24x49xf32>,
    return
  }
  func.func @transform_0(%arg0: i32) -> (i32, i32, i32) {
    %c0_i32 = arith.constant 0 : i32
    %c0_i32_0 = arith.constant 0 : i32
    %c0_i32_1 = arith.constant 0 : i32
    return %arg0, %c0_i32, %c0_i32_0 : i32, i32, i32
  }
  func.func @transform_1(%arg0: i32) -> (i32, i32, i32) {
    %c0_i32 = arith.constant 0 : i32
    %c0_i32_0 = arith.constant 0 : i32
    %c0_i32_1 = arith.constant 0 : i32
    return %arg0, %c0_i32, %c0_i32_0 : i32, i32, i32
  }
  func.func @transform_2(%arg0: i32) -> (i32, i32, i32) {
    %c0_i32 = arith.constant 0 : i32
    %c0_i32_0 = arith.constant 0 : i32
    %c0_i32_1 = arith.constant 0 : i32
    return %arg0, %c0_i32, %c0_i32_0 : i32, i32, i32
  }
}

</mosaic_0001>

<llo_original>
// kernel: relu_grouped_conv2d.1
$region0: #{relu_grouped_conv2d.1}
  #allocation0 [shape = 'u32[]', space=smem, size = 0x4, offset = 0x4, fixed_abs, tag = 'smem constant byte address 0x4 - core index']
  #allocation1 [shape = 'u32[72,128]{1,0:T(1,128)}', space=vmem, size = 0x9000, scoped, tag = 'internal scratch']
  %s0 = inlined_call_operand.vmem [shape: bf16[38,216,49], index: 0, kind: input, shape index: {}]
  %s1 = inlined_call_operand.vmem [shape: bf16[38,24,216], index: 1, kind: input, shape index: {}]
  %s2 = inlined_call_operand.vmem [shape: f32[38,24,49], index: 2, kind: output, shape index: {}]
  %s3 = sld [smem:[#allocation0]]
  $region41: #{relu_grouped_conv2d.1} parent=0
    _
  %s5 = ssub.s32 1, %s3
  %s6 = scalar_select 0, %s5, %s3
  loop: start=0, step=1, limit=4
  $region2: #{relu_grouped_conv2d.1} parent=0 // loop_pre_header
    _
  $region3: #{relu_grouped_conv2d.1} parent=0 // loop_header
    %s8 = sphi 0, %s12
    %p9 = scmp.ge.s32.totalorder %s8, 4
    %s18 = sphi 0, %s20
    %s21 = sphi 0, %s18
    %s22 = sphi 0, %s21
    %s38 = sphi 0, %s22
    %s44 = sphi 0, %s46
    %s47 = sphi 0, %s44
    %s48 = sphi 0, %s47
    %s64 = sphi 0, %s48
    %s70 = sphi 0, %s72
    %s73 = sphi 0, %s70
    %s74 = sphi 0, %s73
    %s90 = sphi 0, %s74
  $region4: #{relu_grouped_conv2d.1} parent=0 // loop_header_branch
    %11 = sbr.rel (%p9) target = $region8
  $region5: #{relu_grouped_conv2d.1} parent=0 // loop_body
    %s13 = ssub.s32 %s8, 1
    %s14 = ssub.s32 %s8, 2
    %s15 = sadd.s32 %s8, 1
    %s16 = ssub.s32 %s8, %s15
    %p17 = scmp.eq.s32.totalorder %s16, 0
    %s19 = sadd.s32 %s18, 1
    %s20 = scalar_select %p17, %s18, %s19
    %p23 = pneg %p17
    %p24 = scmp.eq.s32.totalorder %s8, 1
    %p25 = por %p23, %p24
    %p26 = scmp.ne.s32.totalorder %s18, %s21
    %p27 = scmp.eq.s32.totalorder %s8, 0
    %p28 = por %p26, %p27
    %p29 = scmp.ne.s32.totalorder %s18, %s21
    %p30 = scmp.eq.s32.totalorder %s13, 1
    %p31 = por %p29, %p30
    %p32 = scmp.ne.s32.totalorder %s21, %s22
    %p33 = scmp.eq.s32.totalorder %s13, 0
    %p34 = por %p32, %p33
    %p35 = scmp.ne.s32.totalorder %s21, %s22
    %p36 = scmp.eq.s32.totalorder %s14, 1
    %p37 = por %p35, %p36
    %p39 = scmp.ne.s32.totalorder %s22, %s38
    %p40 = scmp.eq.s32.totalorder %s14, 0
    %p41 = por %p39, %p40
    %s42 = ssub.s32 %s8, %s15
    %p43 = scmp.eq.s32.totalorder %s42, 0
    %s45 = sadd.s32 %s44, 1
    %s46 = scalar_select %p43, %s44, %s45
    %p49 = pneg %p43
    %p50 = scmp.eq.s32.totalorder %s8, 1
    %p51 = por %p49, %p50
    %p52 = scmp.ne.s32.totalorder %s44, %s47
    %p53 = scmp.eq.s32.totalorder %s8, 0
    %p54 = por %p52, %p53
    %p55 = scmp.ne.s32.totalorder %s44, %s47
    %p56 = scmp.eq.s32.totalorder %s13, 1
    %p57 = por %p55, %p56
    %p58 = scmp.ne.s32.totalorder %s47, %s48
    %p59 = scmp.eq.s32.totalorder %s13, 0
    %p60 = por %p58, %p59
    %p61 = scmp.ne.s32.totalorder %s47, %s48
    %p62 = scmp.eq.s32.totalorder %s14, 1
    %p63 = por %p61, %p62
    %p65 = scmp.ne.s32.totalorder %s48, %s64
    %p66 = scmp.eq.s32.totalorder %s14, 0
    %p67 = por %p65, %p66
    %s68 = ssub.s32 %s8, %s15
    %p69 = scmp.eq.s32.totalorder %s68, 0
    %s71 = sadd.s32 %s70, 1
    %s72 = scalar_select %p69, %s70, %s71
    %p75 = pneg %p69
    %p76 = scmp.eq.s32.totalorder %s8, 1
    %p77 = por %p75, %p76
    %p78 = scmp.ne.s32.totalorder %s70, %s73
    %p79 = scmp.eq.s32.totalorder %s8, 0
    %p80 = por %p78, %p79
    %p81 = scmp.ne.s32.totalorder %s70, %s73
    %p82 = scmp.eq.s32.totalorder %s13, 1
    %p83 = por %p81, %p82
    %p84 = scmp.ne.s32.totalorder %s73, %s74
    %p85 = scmp.eq.s32.totalorder %s13, 0
    %p86 = por %p84, %p85
    %p87 = scmp.ne.s32.totalorder %s73, %s74
    %p88 = scmp.eq.s32.totalorder %s14, 1
    %p89 = por %p87, %p88
    %p91 = scmp.ne.s32.totalorder %s74, %s90
    %p92 = scmp.eq.s32.totalorder %s14, 0
    %p93 = por %p91, %p92
    %p94 = scmp.le.s32.totalorder 1, %s8
    %p95 = scmp.lt.s32.totalorder %s8, 3
    %p96 = pnand %p94, %p95
    %p97 = pneg %p96
    // Predicated region
    $region9: #{relu_grouped_conv2d.1} parent=5 // pred_check
      _
    $region10: #{relu_grouped_conv2d.1} parent=5 // pred_check_branch
      %99 = sbr.rel (%p96) target = $region12
    $region11: #{relu_grouped_conv2d.1} parent=5 // pred_region
      %s100 = ssub.s32 %s8, 1
    $region12: #{relu_grouped_conv2d.1} parent=5 // pred_fallthru
      _
    %p101 = scmp.lt.s32.totalorder %s8, 2
    // Predicated region
    $region13: #{relu_grouped_conv2d.1} parent=5 // pred_check
      %p102 = pneg %p101
    $region14: #{relu_grouped_conv2d.1} parent=5 // pred_check_branch
      %104 = sbr.rel (%p102) target = $region16
    $region15: #{relu_grouped_conv2d.1} parent=5 // pred_region
      // Predicated region
      $region17: #{relu_grouped_conv2d.1} parent=15 // pred_check
        %p105 = pneg %p28
      $region18: #{relu_grouped_conv2d.1} parent=15 // pred_check_branch
        %107 = sbr.rel (%p105) target = $region20
      $region19: #{relu_grouped_conv2d.1} parent=15 // pred_region
        %s108 = smul.u32 19, %s8
        %p109 = scmp.lt.s32.totalorder %s108, 37
        %s110 = scalar_select %p109, %s108, 37
        %s111 = smul.addr %s110, 27
        %s112 = smul.addr %s111, 4
        %s113 = scalar_lea.vmem %s0, %s112
        %s114 = smul.u32 19, %s8
      $region20: #{relu_grouped_conv2d.1} parent=15 // pred_fallthru
        _
      // Predicated region
      $region21: #{relu_grouped_conv2d.1} parent=15 // pred_check
        %p115 = pneg %p54
      $region22: #{relu_grouped_conv2d.1} parent=15 // pred_check_branch
        %117 = sbr.rel (%p115) target = $region24
      $region23: #{relu_grouped_conv2d.1} parent=15 // pred_region
        %s118 = smul.u32 19, %s8
        %p119 = scmp.lt.s32.totalorder %s118, 37
        %s120 = scalar_select %p119, %s118, 37
        %s121 = smul.addr %s120, 6
        %s122 = smul.addr %s121, 4
        %s123 = scalar_lea.vmem %s1, %s122
        %s124 = smul.u32 19, %s8
      $region24: #{relu_grouped_conv2d.1} parent=15 // pred_fallthru
        _
    $region16: #{relu_grouped_conv2d.1} parent=5 // pred_fallthru
      _
    %p125 = scmp.le.s32.totalorder 1, %s8
    %p126 = scmp.lt.s32.totalorder %s8, 3
    %p127 = pnand %p125, %p126
    %p128 = pneg %p127
    // Predicated region
    $region25: #{relu_grouped_conv2d.1} parent=5 // pred_check
      _
    $region26: #{relu_grouped_conv2d.1} parent=5 // pred_check_branch
      %130 = sbr.rel (%p127) target = $region28
    $region27: #{relu_grouped_conv2d.1} parent=5 // pred_region
      %s131 = ssub.s32 %s8, 1
      %s132 = smul.u32 19, %s13
      %p133 = scmp.lt.s32.totalorder %s132, 37
      %s134 = scalar_select %p133, %s132, 37
      %s135 = smul.addr %s134, 27
      %s136 = smul.addr %s135, 4
      %s137 = scalar_lea.vmem %s0, %s136
      %p138 = pneg %p34
      %p139 = pneg %p31
      %s140 = smul.u32 19, %s13
      %p141 = scmp.lt.s32.totalorder %s140, 37
      %s142 = scalar_select %p141, %s140, 37
      %s143 = smul.addr %s142, 6
      %s144 = smul.addr %s143, 4
      %s145 = scalar_lea.vmem %s1, %s144
      %p146 = pneg %p60
      %p147 = pneg %p57
      %p148 = pneg %p86
      %p149 = pneg %p83
      %s150 = smul.u32 19, %s13
      %p151 = scmp.lt.s32.totalorder %s150, 37
      %s152 = scalar_select %p151, %s150, 37
      %s153 = smul.addr %s152, 3
      %s154 = smul.addr %s153, 8
      %s155 = scalar_lea.vmem %s2, %s154
      %s156 = smul.u32 19, %s13
      %p157 = scmp.lt.s32.totalorder %s156, 37
      %s158 = scalar_select %p157, %s156, 37
      %s159 = smul.addr %s158, 27
      %s160 = smul.addr %s159, 4
      %s161 = scalar_lea.vmem %s0, %s160
      %s162 = smul.u32 19, %s13
      %s163 = smul.u32 19, %s13
      %p164 = scmp.lt.s32.totalorder %s163, 37
      %s165 = scalar_select %p164, %s163, 37
      %s166 = smul.addr %s165, 6
      %s167 = smul.addr %s166, 4
      %s168 = scalar_lea.vmem %s1, %s167
      %s169 = smul.u32 19, %s13
      %s170 = smul.u32 19, %s13
      %p171 = scmp.lt.s32.totalorder %s170, 37
      %s172 = scalar_select %p171, %s170, 37
      %s173 = smul.addr %s172, 3
      %s174 = smul.addr %s173, 8
      %s175 = scalar_lea.vmem %s2, %s174
      %s176 = smul.u32 19, %s13
      %v178 = vld [vmem:[%s161] sm:$0xf]
      %v179 = vld [vmem:[%s161 + $0x4] sm:$0xf]
      %v180 = vld [vmem:[%s161 + $0x8] sm:$0xf]
      %v181 = vld [vmem:[%s161 + $0xc] sm:$0xf]
      %v182 = vld [vmem:[%s161 + $0x10] sm:$0xf]
      %v183 = vld [vmem:[%s161 + $0x14] sm:$0xf]
      %v184 = vld [vmem:[%s161 + $0x18] sm:$0xf]
      %v185 = vld [vmem:[%s161 + $0x1c] sm:$0xf]
      %v186 = vld [vmem:[%s161 + $0x20] sm:$0xf]
      %v187 = vld [vmem:[%s161 + $0x24] sm:$0xf]
      %v188 = vld [vmem:[%s161 + $0x28] sm:$0xf]
      %v189 = vld [vmem:[%s161 + $0x2c] sm:$0xf]
      %v190 = vld [vmem:[%s161 + $0x30] sm:$0xf]
      %v191 = vld [vmem:[%s161 + $0x34] sm:$0xf]
      %v192 = vld [vmem:[%s161 + $0x38] sm:$0xf]
      %v193 = vld [vmem:[%s161 + $0x3c] sm:$0xf]
      %v194 = vld [vmem:[%s161 + $0x40] sm:$0xf]
      %v195 = vld [vmem:[%s161 + $0x44] sm:$0xf]
      %v196 = vld [vmem:[%s161 + $0x48] sm:$0xf]
      %v197 = vld [vmem:[%s161 + $0x4c] sm:$0xf]
      %v198 = vld [vmem:[%s161 + $0x50] sm:$0xf]
      %v199 = vld [vmem:[%s161 + $0x54] sm:$0xf]
      %v200 = vld [vmem:[%s161 + $0x58] sm:$0xf]
      %v201 = vld [vmem:[%s161 + $0x5c] sm:$0xf]
      %v202 = vld [vmem:[%s161 + $0x60] sm:$0xf]
      %v203 = vld [vmem:[%s161 + $0x64] sm:$0xf]
      %v204 = vld [vmem:[%s161 + $0x68] sm:$0xf]
      %v205 = vld [vmem:[%s161 + $0x6c] sm:$0xf]
      %v206 = vld [vmem:[%s161 + $0x70] sm:$0xf]
      %v207 = vld [vmem:[%s161 + $0x74] sm:$0xf]
      %v208 = vld [vmem:[%s161 + $0x78] sm:$0xf]
      %v209 = vld [vmem:[%s161 + $0x7c] sm:$0xf]
      %v210 = vld [vmem:[%s161 + $0x80] sm:$0xf]
      %v211 = vld [vmem:[%s161 + $0x84] sm:$0xf]
      %v212 = vld [vmem:[%s161 + $0x88] sm:$0xf]
      %v213 = vld [vmem:[%s161 + $0x8c] sm:$0xf]
      %v214 = vld [vmem:[%s161 + $0x90] sm:$0xf]
      %v215 = vld [vmem:[%s161 + $0x94] sm:$0xf]
      %v216 = vld [vmem:[%s161 + $0x98] sm:$0xf]
      %v217 = vld [vmem:[%s161 + $0x9c] sm:$0xf]
      %v218 = vld [vmem:[%s161 + $0xa0] sm:$0xf]
      %v219 = vld [vmem:[%s161 + $0xa4] sm:$0xf]
      %v220 = vld [vmem:[%s161 + $0xa8] sm:$0xf]
      %v221 = vld [vmem:[%s161 + $0xac] sm:$0xf]
      %v222 = vld [vmem:[%s161 + $0xb0] sm:$0xf]
      %v223 = vld [vmem:[%s161 + $0xb4] sm:$0xf]
      %v224 = vld [vmem:[%s161 + $0xb8] sm:$0xf]
      %v225 = vld [vmem:[%s161 + $0xbc] sm:$0xf]
      %v226 = vld [vmem:[%s161 + $0xc0] sm:$0xf]
      %v227 = vld [vmem:[%s161 + $0xc4] sm:$0xf]
      %v228 = vld [vmem:[%s161 + $0xc8] sm:$0xf]
      %v229 = vld [vmem:[%s161 + $0xcc] sm:$0xf]
      %v230 = vld [vmem:[%s161 + $0xd0] sm:$0xf]
      %v231 = vld [vmem:[%s161 + $0xd4] sm:$0xf]
      %v232 = vld [vmem:[%s161 + $0xd8] sm:$0xf]
      %v233 = vld [vmem:[%s161 + $0xdc] sm:$0xf]
      %v234 = vld [vmem:[%s161 + $0xe0] sm:$0xf]
      %v235 = vld [vmem:[%s161 + $0xe4] sm:$0xf]
      %v236 = vld [vmem:[%s161 + $0xe8] sm:$0xf]
      %v237 = vld [vmem:[%s161 + $0xec] sm:$0xf]
      %v238 = vld [vmem:[%s161 + $0xf0] sm:$0xf]
      %v239 = vld [vmem:[%s161 + $0xf4] sm:$0xf]
      %v240 = vld [vmem:[%s161 + $0xf8] sm:$0xf]
      %v241 = vld [vmem:[%s161 + $0xfc] sm:$0xf]
      %v242 = vld [vmem:[%s161 + $0x100] sm:$0xf]
      %v243 = vld [vmem:[%s161 + $0x104] sm:$0xf]
      %v244 = vld [vmem:[%s161 + $0x108] sm:$0xf]
      %v245 = vld [vmem:[%s161 + $0x10c] sm:$0xf]
      %v246 = vld [vmem:[%s161 + $0x110] sm:$0xf]
      %v247 = vld [vmem:[%s161 + $0x114] sm:$0xf]
      %v248 = vld [vmem:[%s161 + $0x118] sm:$0xf]
      %v249 = vld [vmem:[%s161 + $0x11c] sm:$0xf]
      %v250 = vld [vmem:[%s161 + $0x120] sm:$0xf]
      %v251 = vld [vmem:[%s161 + $0x124] sm:$0xf]
      %v252 = vld [vmem:[%s161 + $0x128] sm:$0xf]
      %v253 = vld [vmem:[%s161 + $0x12c] sm:$0xf]
      %v254 = vld [vmem:[%s161 + $0x130] sm:$0xf]
      %v255 = vld [vmem:[%s161 + $0x134] sm:$0xf]
      %v256 = vld [vmem:[%s161 + $0x138] sm:$0xf]
      %v257 = vld [vmem:[%s161 + $0x13c] sm:$0xf]
      %v258 = vld [vmem:[%s161 + $0x140] sm:$0xf]
      %v259 = vld [vmem:[%s161 + $0x144] sm:$0xf]
      %v260 = vld [vmem:[%s161 + $0x148] sm:$0xf]
      %v261 = vld [vmem:[%s161 + $0x14c] sm:$0xf]
      %v262 = vld [vmem:[%s161 + $0x150] sm:$0xf]
      %v263 = vld [vmem:[%s161 + $0x154] sm:$0xf]
      %v264 = vld [vmem:[%s161 + $0x158] sm:$0xf]
      %v265 = vld [vmem:[%s161 + $0x15c] sm:$0xf]
      %v266 = vld [vmem:[%s161 + $0x160] sm:$0xf]
      %v267 = vld [vmem:[%s161 + $0x164] sm:$0xf]
      %v268 = vld [vmem:[%s161 + $0x168] sm:$0xf]
      %v269 = vld [vmem:[%s161 + $0x16c] sm:$0xf]
      %v270 = vld [vmem:[%s161 + $0x170] sm:$0xf]
      %v271 = vld [vmem:[%s161 + $0x174] sm:$0xf]
      %v272 = vld [vmem:[%s161 + $0x178] sm:$0xf]
      %v273 = vld [vmem:[%s161 + $0x17c] sm:$0xf]
      %v274 = vld [vmem:[%s161 + $0x180] sm:$0xf]
      %v275 = vld [vmem:[%s161 + $0x184] sm:$0xf]
      %v276 = vld [vmem:[%s161 + $0x188] sm:$0xf]
      %v277 = vld [vmem:[%s161 + $0x18c] sm:$0xf]
      %v278 = vld [vmem:[%s161 + $0x190] sm:$0xf]
      %v279 = vld [vmem:[%s161 + $0x194] sm:$0xf]
      %v280 = vld [vmem:[%s161 + $0x198] sm:$0xf]
      %v281 = vld [vmem:[%s161 + $0x19c] sm:$0xf]
      %v282 = vld [vmem:[%s161 + $0x1a0] sm:$0xf]
      %v283 = vld [vmem:[%s161 + $0x1a4] sm:$0xf]
      %v284 = vld [vmem:[%s161 + $0x1a8] sm:$0xf]
      %v285 = vld [vmem:[%s161 + $0x1ac] sm:$0xf]
      %v286 = vld [vmem:[%s161 + $0x1b0] sm:$0xf]
      %v287 = vld [vmem:[%s161 + $0x1b4] sm:$0xf]
      %v288 = vld [vmem:[%s161 + $0x1b8] sm:$0xf]
      %v289 = vld [vmem:[%s161 + $0x1bc] sm:$0xf]
      %v290 = vld [vmem:[%s161 + $0x1c0] sm:$0xf]
      %v291 = vld [vmem:[%s161 + $0x1c4] sm:$0xf]
      %v292 = vld [vmem:[%s161 + $0x1c8] sm:$0xf]
      %v293 = vld [vmem:[%s161 + $0x1cc] sm:$0xf]
      %v294 = vld [vmem:[%s161 + $0x1d0] sm:$0xf]
      %v295 = vld [vmem:[%s161 + $0x1d4] sm:$0xf]
      %v296 = vld [vmem:[%s161 + $0x1d8] sm:$0xf]
      %v297 = vld [vmem:[%s161 + $0x1dc] sm:$0xf]
      %v298 = vld [vmem:[%s161 + $0x1e0] sm:$0xf]
      %v299 = vld [vmem:[%s161 + $0x1e4] sm:$0xf]
      %v300 = vld [vmem:[%s161 + $0x1e8] sm:$0xf]
      %v301 = vld [vmem:[%s161 + $0x1ec] sm:$0xf]
      %v302 = vld [vmem:[%s161 + $0x1f0] sm:$0xf]
      %v303 = vld [vmem:[%s161 + $0x1f4] sm:$0xf]
      %v304 = vld [vmem:[%s161 + $0x1f8] sm:$0xf]
      %v305 = vld [vmem:[%s161 + $0x1fc] sm:$0xf]
      %v306 = vld [vmem:[%s161 + $0x200] sm:$0xf]
      %v307 = vld [vmem:[%s161 + $0x204] sm:$0xf]
      %v308 = vld [vmem:[%s161 + $0x208] sm:$0xf]
      %v309 = vld [vmem:[%s161 + $0x20c] sm:$0xf]
      %v310 = vld [vmem:[%s161 + $0x210] sm:$0xf]
      %v311 = vld [vmem:[%s161 + $0x214] sm:$0xf]
      %v312 = vld [vmem:[%s161 + $0x218] sm:$0xf]
      %v313 = vld [vmem:[%s161 + $0x21c] sm:$0xf]
      %v314 = vld [vmem:[%s161 + $0x220] sm:$0xf]
      %v315 = vld [vmem:[%s161 + $0x224] sm:$0xf]
      %v316 = vld [vmem:[%s161 + $0x228] sm:$0xf]
      %v317 = vld [vmem:[%s161 + $0x22c] sm:$0xf]
      %v318 = vld [vmem:[%s161 + $0x230] sm:$0xf]
      %v319 = vld [vmem:[%s161 + $0x234] sm:$0xf]
      %v320 = vld [vmem:[%s161 + $0x238] sm:$0xf]
      %v321 = vld [vmem:[%s161 + $0x23c] sm:$0xf]
      %v322 = vld [vmem:[%s161 + $0x240] sm:$0xf]
      %v323 = vld [vmem:[%s161 + $0x244] sm:$0xf]
      %v324 = vld [vmem:[%s161 + $0x248] sm:$0xf]
      %v325 = vld [vmem:[%s161 + $0x24c] sm:$0xf]
      %v326 = vld [vmem:[%s161 + $0x250] sm:$0xf]
      %v327 = vld [vmem:[%s161 + $0x254] sm:$0xf]
      %v328 = vld [vmem:[%s161 + $0x258] sm:$0xf]
      %v329 = vld [vmem:[%s161 + $0x25c] sm:$0xf]
      %v330 = vld [vmem:[%s161 + $0x260] sm:$0xf]
      %v331 = vld [vmem:[%s161 + $0x264] sm:$0xf]
      %v332 = vld [vmem:[%s161 + $0x268] sm:$0xf]
      %v333 = vld [vmem:[%s161 + $0x26c] sm:$0xf]
      %v334 = vld [vmem:[%s161 + $0x270] sm:$0xf]
      %v335 = vld [vmem:[%s161 + $0x274] sm:$0xf]
      %v336 = vld [vmem:[%s161 + $0x278] sm:$0xf]
      %v337 = vld [vmem:[%s161 + $0x27c] sm:$0xf]
      %v338 = vld [vmem:[%s161 + $0x280] sm:$0xf]
      %v339 = vld [vmem:[%s161 + $0x284] sm:$0xf]
      %v340 = vld [vmem:[%s161 + $0x288] sm:$0xf]
      %v341 = vld [vmem:[%s161 + $0x28c] sm:$0xf]
      %v342 = vld [vmem:[%s161 + $0x290] sm:$0xf]
      %v343 = vld [vmem:[%s161 + $0x294] sm:$0xf]
      %v344 = vld [vmem:[%s161 + $0x298] sm:$0xf]
      %v345 = vld [vmem:[%s161 + $0x29c] sm:$0xf]
      %v346 = vld [vmem:[%s161 + $0x2a0] sm:$0xf]
      %v347 = vld [vmem:[%s161 + $0x2a4] sm:$0xf]
      %v348 = vld [vmem:[%s161 + $0x2a8] sm:$0xf]
      %v349 = vld [vmem:[%s161 + $0x2ac] sm:$0xf]
      %v350 = vld [vmem:[%s161 + $0x2b0] sm:$0xf]
      %v351 = vld [vmem:[%s161 + $0x2b4] sm:$0xf]
      %v352 = vld [vmem:[%s161 + $0x2b8] sm:$0xf]
      %v353 = vld [vmem:[%s161 + $0x2bc] sm:$0xf]
      %v354 = vld [vmem:[%s161 + $0x2c0] sm:$0xf]
      %v355 = vld [vmem:[%s161 + $0x2c4] sm:$0xf]
      %v356 = vld [vmem:[%s161 + $0x2c8] sm:$0xf]
      %v357 = vld [vmem:[%s161 + $0x2cc] sm:$0xf]
      %v358 = vld [vmem:[%s161 + $0x2d0] sm:$0xf]
      %v359 = vld [vmem:[%s161 + $0x2d4] sm:$0xf]
      %v360 = vld [vmem:[%s161 + $0x2d8] sm:$0xf]
      %v361 = vld [vmem:[%s161 + $0x2dc] sm:$0xf]
      %v362 = vld [vmem:[%s161 + $0x2e0] sm:$0xf]
      %v363 = vld [vmem:[%s161 + $0x2e4] sm:$0xf]
      %v364 = vld [vmem:[%s161 + $0x2e8] sm:$0xf]
      %v365 = vld [vmem:[%s161 + $0x2ec] sm:$0xf]
      %v366 = vld [vmem:[%s161 + $0x2f0] sm:$0xf]
      %v367 = vld [vmem:[%s161 + $0x2f4] sm:$0xf]
      %v368 = vld [vmem:[%s161 + $0x2f8] sm:$0xf]
      %v369 = vld [vmem:[%s161 + $0x2fc] sm:$0xf]
      %v370 = vld [vmem:[%s161 + $0x300] sm:$0xf]
      %v371 = vld [vmem:[%s161 + $0x304] sm:$0xf]
      %v372 = vld [vmem:[%s161 + $0x308] sm:$0xf]
      %v373 = vld [vmem:[%s161 + $0x30c] sm:$0xf]
      %v374 = vld [vmem:[%s161 + $0x310] sm:$0xf]
      %v375 = vld [vmem:[%s161 + $0x314] sm:$0xf]
      %v376 = vld [vmem:[%s161 + $0x318] sm:$0xf]
      %v377 = vld [vmem:[%s161 + $0x31c] sm:$0xf]
      %v378 = vld [vmem:[%s161 + $0x320] sm:$0xf]
      %v379 = vld [vmem:[%s161 + $0x324] sm:$0xf]
      %v380 = vld [vmem:[%s161 + $0x328] sm:$0xf]
      %v381 = vld [vmem:[%s161 + $0x32c] sm:$0xf]
      %v382 = vld [vmem:[%s161 + $0x330] sm:$0xf]
      %v383 = vld [vmem:[%s161 + $0x334] sm:$0xf]
      %v384 = vld [vmem:[%s161 + $0x338] sm:$0xf]
      %v385 = vld [vmem:[%s161 + $0x33c] sm:$0xf]
      %v386 = vld [vmem:[%s161 + $0x340] sm:$0xf]
      %v387 = vld [vmem:[%s161 + $0x344] sm:$0xf]
      %v388 = vld [vmem:[%s161 + $0x348] sm:$0xf]
      %v389 = vld [vmem:[%s161 + $0x34c] sm:$0xf]
      %v390 = vld [vmem:[%s161 + $0x350] sm:$0xf]
      %v391 = vld [vmem:[%s161 + $0x354] sm:$0xf]
      %v392 = vld [vmem:[%s161 + $0x358] sm:$0xf]
      %v393 = vld [vmem:[%s161 + $0x35c] sm:$0xf]
      %v394 = vld [vmem:[%s161 + $0x360] sm:$0xf]
      %v395 = vld [vmem:[%s161 + $0x364] sm:$0xf]
      %v396 = vld [vmem:[%s161 + $0x368] sm:$0xf]
      %v397 = vld [vmem:[%s161 + $0x36c] sm:$0xf]
      %v398 = vld [vmem:[%s161 + $0x370] sm:$0xf]
      %v399 = vld [vmem:[%s161 + $0x374] sm:$0xf]
      %v400 = vld [vmem:[%s161 + $0x378] sm:$0xf]
      %v401 = vld [vmem:[%s161 + $0x37c] sm:$0xf]
      %v402 = vld [vmem:[%s161 + $0x380] sm:$0xf]
      %v403 = vld [vmem:[%s161 + $0x384] sm:$0xf]
      %v404 = vld [vmem:[%s161 + $0x388] sm:$0xf]
      %v405 = vld [vmem:[%s161 + $0x38c] sm:$0xf]
      %v406 = vld [vmem:[%s161 + $0x390] sm:$0xf]
      %v407 = vld [vmem:[%s161 + $0x394] sm:$0xf]
      %v408 = vld [vmem:[%s161 + $0x398] sm:$0xf]
      %v409 = vld [vmem:[%s161 + $0x39c] sm:$0xf]
      %v410 = vld [vmem:[%s161 + $0x3a0] sm:$0xf]
      %v411 = vld [vmem:[%s161 + $0x3a4] sm:$0xf]
      %v412 = vld [vmem:[%s161 + $0x3a8] sm:$0xf]
      %v413 = vld [vmem:[%s161 + $0x3ac] sm:$0xf]
      %v414 = vld [vmem:[%s161 + $0x3b0] sm:$0xf]
      %v415 = vld [vmem:[%s161 + $0x3b4] sm:$0xf]
      %v416 = vld [vmem:[%s161 + $0x3b8] sm:$0xf]
      %v417 = vld [vmem:[%s161 + $0x3bc] sm:$0xf]
      %v418 = vld [vmem:[%s161 + $0x3c0] sm:$0xf]
      %v419 = vld [vmem:[%s161 + $0x3c4] sm:$0xf]
      %v420 = vld [vmem:[%s161 + $0x3c8] sm:$0xf]
      %v421 = vld [vmem:[%s161 + $0x3cc] sm:$0xf]
      %v422 = vld [vmem:[%s161 + $0x3d0] sm:$0xf]
      %v423 = vld [vmem:[%s161 + $0x3d4] sm:$0xf]
      %v424 = vld [vmem:[%s161 + $0x3d8] sm:$0xf]
      %v425 = vld [vmem:[%s161 + $0x3dc] sm:$0xf]
      %v426 = vld [vmem:[%s161 + $0x3e0] sm:$0xf]
      %v427 = vld [vmem:[%s161 + $0x3e4] sm:$0xf]
      %v428 = vld [vmem:[%s161 + $0x3e8] sm:$0xf]
      %v429 = vld [vmem:[%s161 + $0x3ec] sm:$0xf]
      %v430 = vld [vmem:[%s161 + $0x3f0] sm:$0xf]
      %v431 = vld [vmem:[%s161 + $0x3f4] sm:$0xf]
      %v432 = vld [vmem:[%s161 + $0x3f8] sm:$0xf]
      %v433 = vld [vmem:[%s161 + $0x3fc] sm:$0xf]
      %v434 = vld [vmem:[%s161 + $0x400] sm:$0xf]
      %v435 = vld [vmem:[%s161 + $0x404] sm:$0xf]
      %v436 = vld [vmem:[%s161 + $0x408] sm:$0xf]
      %v437 = vld [vmem:[%s161 + $0x40c] sm:$0xf]
      %v438 = vld [vmem:[%s161 + $0x410] sm:$0xf]
      %v439 = vld [vmem:[%s161 + $0x414] sm:$0xf]
      %v440 = vld [vmem:[%s161 + $0x418] sm:$0xf]
      %v441 = vld [vmem:[%s161 + $0x41c] sm:$0xf]
      %v442 = vld [vmem:[%s161 + $0x420] sm:$0xf]
      %v443 = vld [vmem:[%s161 + $0x424] sm:$0xf]
      %v444 = vld [vmem:[%s161 + $0x428] sm:$0xf]
      %v445 = vld [vmem:[%s161 + $0x42c] sm:$0xf]
      %v446 = vld [vmem:[%s161 + $0x430] sm:$0xf]
      %v447 = vld [vmem:[%s161 + $0x434] sm:$0xf]
      %v448 = vld [vmem:[%s161 + $0x438] sm:$0xf]
      %v449 = vld [vmem:[%s161 + $0x43c] sm:$0xf]
      %v450 = vld [vmem:[%s161 + $0x440] sm:$0xf]
      %v451 = vld [vmem:[%s161 + $0x444] sm:$0xf]
      %v452 = vld [vmem:[%s161 + $0x448] sm:$0xf]
      %v453 = vld [vmem:[%s161 + $0x44c] sm:$0xf]
      %v454 = vld [vmem:[%s161 + $0x450] sm:$0xf]
      %v455 = vld [vmem:[%s161 + $0x454] sm:$0xf]
      %v456 = vld [vmem:[%s161 + $0x458] sm:$0xf]
      %v457 = vld [vmem:[%s161 + $0x45c] sm:$0xf]
      %v458 = vld [vmem:[%s161 + $0x460] sm:$0xf]
      %v459 = vld [vmem:[%s161 + $0x464] sm:$0xf]
      %v460 = vld [vmem:[%s161 + $0x468] sm:$0xf]
      %v461 = vld [vmem:[%s161 + $0x46c] sm:$0xf]
      %v462 = vld [vmem:[%s161 + $0x470] sm:$0xf]
      %v463 = vld [vmem:[%s161 + $0x474] sm:$0xf]
      %v464 = vld [vmem:[%s161 + $0x478] sm:$0xf]
      %v465 = vld [vmem:[%s161 + $0x47c] sm:$0xf]
      %v466 = vld [vmem:[%s161 + $0x480] sm:$0xf]
      %v467 = vld [vmem:[%s161 + $0x484] sm:$0xf]
      %v468 = vld [vmem:[%s161 + $0x488] sm:$0xf]
      %v469 = vld [vmem:[%s161 + $0x48c] sm:$0xf]
      %v470 = vld [vmem:[%s161 + $0x490] sm:$0xf]
      %v471 = vld [vmem:[%s161 + $0x494] sm:$0xf]
      %v472 = vld [vmem:[%s161 + $0x498] sm:$0xf]
      %v473 = vld [vmem:[%s161 + $0x49c] sm:$0xf]
      %v474 = vld [vmem:[%s161 + $0x4a0] sm:$0xf]
      %v475 = vld [vmem:[%s161 + $0x4a4] sm:$0xf]
      %v476 = vld [vmem:[%s161 + $0x4a8] sm:$0xf]
      %v477 = vld [vmem:[%s161 + $0x4ac] sm:$0xf]
      %v478 = vld [vmem:[%s161 + $0x4b0] sm:$0xf]
      %v479 = vld [vmem:[%s161 + $0x4b4] sm:$0xf]
      %v480 = vld [vmem:[%s161 + $0x4b8] sm:$0xf]
      %v481 = vld [vmem:[%s161 + $0x4bc] sm:$0xf]
      %v482 = vld [vmem:[%s161 + $0x4c0] sm:$0xf]
      %v483 = vld [vmem:[%s161 + $0x4c4] sm:$0xf]
      %v484 = vld [vmem:[%s161 + $0x4c8] sm:$0xf]
      %v485 = vld [vmem:[%s161 + $0x4cc] sm:$0xf]
      %v486 = vld [vmem:[%s161 + $0x4d0] sm:$0xf]
      %v487 = vld [vmem:[%s161 + $0x4d4] sm:$0xf]
      %v488 = vld [vmem:[%s161 + $0x4d8] sm:$0xf]
      %v489 = vld [vmem:[%s161 + $0x4dc] sm:$0xf]
      %v490 = vld [vmem:[%s161 + $0x4e0] sm:$0xf]
      %v491 = vld [vmem:[%s161 + $0x4e4] sm:$0xf]
      %v492 = vld [vmem:[%s161 + $0x4e8] sm:$0xf]
      %v493 = vld [vmem:[%s161 + $0x4ec] sm:$0xf]
      %v494 = vld [vmem:[%s161 + $0x4f0] sm:$0xf]
      %v495 = vld [vmem:[%s161 + $0x4f4] sm:$0xf]
      %v496 = vld [vmem:[%s161 + $0x4f8] sm:$0xf]
      %v497 = vld [vmem:[%s161 + $0x4fc] sm:$0xf]
      %v498 = vld [vmem:[%s161 + $0x500] sm:$0xf]
      %v499 = vld [vmem:[%s161 + $0x504] sm:$0xf]
      %v500 = vld [vmem:[%s161 + $0x508] sm:$0xf]
      %v501 = vld [vmem:[%s161 + $0x50c] sm:$0xf]
      %v502 = vld [vmem:[%s161 + $0x510] sm:$0xf]
      %v503 = vld [vmem:[%s161 + $0x514] sm:$0xf]
      %v504 = vld [vmem:[%s161 + $0x518] sm:$0xf]
      %v505 = vld [vmem:[%s161 + $0x51c] sm:$0xf]
      %v506 = vld [vmem:[%s161 + $0x520] sm:$0xf]
      %v507 = vld [vmem:[%s161 + $0x524] sm:$0xf]
      %v508 = vld [vmem:[%s161 + $0x528] sm:$0xf]
      %v509 = vld [vmem:[%s161 + $0x52c] sm:$0xf]
      %v510 = vld [vmem:[%s161 + $0x530] sm:$0xf]
      %v511 = vld [vmem:[%s161 + $0x534] sm:$0xf]
      %v512 = vld [vmem:[%s161 + $0x538] sm:$0xf]
      %v513 = vld [vmem:[%s161 + $0x53c] sm:$0xf]
      %v514 = vld [vmem:[%s161 + $0x540] sm:$0xf]
      %v515 = vld [vmem:[%s161 + $0x544] sm:$0xf]
      %v516 = vld [vmem:[%s161 + $0x548] sm:$0xf]
      %v517 = vld [vmem:[%s161 + $0x54c] sm:$0xf]
      %v518 = vld [vmem:[%s161 + $0x550] sm:$0xf]
      %v519 = vld [vmem:[%s161 + $0x554] sm:$0xf]
      %v520 = vld [vmem:[%s161 + $0x558] sm:$0xf]
      %v521 = vld [vmem:[%s161 + $0x55c] sm:$0xf]
      %v522 = vld [vmem:[%s161 + $0x560] sm:$0xf]
      %v523 = vld [vmem:[%s161 + $0x564] sm:$0xf]
      %v524 = vld [vmem:[%s161 + $0x568] sm:$0xf]
      %v525 = vld [vmem:[%s161 + $0x56c] sm:$0xf]
      %v526 = vld [vmem:[%s161 + $0x570] sm:$0xf]
      %v527 = vld [vmem:[%s161 + $0x574] sm:$0xf]
      %v528 = vld [vmem:[%s161 + $0x578] sm:$0xf]
      %v529 = vld [vmem:[%s161 + $0x57c] sm:$0xf]
      %v530 = vld [vmem:[%s161 + $0x580] sm:$0xf]
      %v531 = vld [vmem:[%s161 + $0x584] sm:$0xf]
      %v532 = vld [vmem:[%s161 + $0x588] sm:$0xf]
      %v533 = vld [vmem:[%s161 + $0x58c] sm:$0xf]
      %v534 = vld [vmem:[%s161 + $0x590] sm:$0xf]
      %v535 = vld [vmem:[%s161 + $0x594] sm:$0xf]
      %v536 = vld [vmem:[%s161 + $0x598] sm:$0xf]
      %v537 = vld [vmem:[%s161 + $0x59c] sm:$0xf]
      %v538 = vld [vmem:[%s161 + $0x5a0] sm:$0xf]
      %v539 = vld [vmem:[%s161 + $0x5a4] sm:$0xf]
      %v540 = vld [vmem:[%s161 + $0x5a8] sm:$0xf]
      %v541 = vld [vmem:[%s161 + $0x5ac] sm:$0xf]
      %v542 = vld [vmem:[%s161 + $0x5b0] sm:$0xf]
      %v543 = vld [vmem:[%s161 + $0x5b4] sm:$0xf]
      %v544 = vld [vmem:[%s161 + $0x5b8] sm:$0xf]
      %v545 = vld [vmem:[%s161 + $0x5bc] sm:$0xf]
      %v546 = vld [vmem:[%s161 + $0x5c0] sm:$0xf]
      %v547 = vld [vmem:[%s161 + $0x5c4] sm:$0xf]
      %v548 = vld [vmem:[%s161 + $0x5c8] sm:$0xf]
      %v549 = vld [vmem:[%s161 + $0x5cc] sm:$0xf]
      %v550 = vld [vmem:[%s161 + $0x5d0] sm:$0xf]
      %v551 = vld [vmem:[%s161 + $0x5d4] sm:$0xf]
      %v552 = vld [vmem:[%s161 + $0x5d8] sm:$0xf]
      %v553 = vld [vmem:[%s161 + $0x5dc] sm:$0xf]
      %v554 = vld [vmem:[%s161 + $0x5e0] sm:$0xf]
      %v555 = vld [vmem:[%s161 + $0x5e4] sm:$0xf]
      %v556 = vld [vmem:[%s161 + $0x5e8] sm:$0xf]
      %v557 = vld [vmem:[%s161 + $0x5ec] sm:$0xf]
      %v558 = vld [vmem:[%s161 + $0x5f0] sm:$0xf]
      %v559 = vld [vmem:[%s161 + $0x5f4] sm:$0xf]
      %v560 = vld [vmem:[%s161 + $0x5f8] sm:$0xf]
      %v561 = vld [vmem:[%s161 + $0x5fc] sm:$0xf]
      %v562 = vld [vmem:[%s161 + $0x600] sm:$0xf]
      %v563 = vld [vmem:[%s161 + $0x604] sm:$0xf]
      %v564 = vld [vmem:[%s161 + $0x608] sm:$0xf]
      %v565 = vld [vmem:[%s161 + $0x60c] sm:$0xf]
      %v566 = vld [vmem:[%s161 + $0x610] sm:$0xf]
      %v567 = vld [vmem:[%s161 + $0x614] sm:$0xf]
      %v568 = vld [vmem:[%s161 + $0x618] sm:$0xf]
      %v569 = vld [vmem:[%s161 + $0x61c] sm:$0xf]
      %v570 = vld [vmem:[%s161 + $0x620] sm:$0xf]
      %v571 = vld [vmem:[%s161 + $0x624] sm:$0xf]
      %v572 = vld [vmem:[%s161 + $0x628] sm:$0xf]
      %v573 = vld [vmem:[%s161 + $0x62c] sm:$0xf]
      %v574 = vld [vmem:[%s161 + $0x630] sm:$0xf]
      %v575 = vld [vmem:[%s161 + $0x634] sm:$0xf]
      %v576 = vld [vmem:[%s161 + $0x638] sm:$0xf]
      %v577 = vld [vmem:[%s161 + $0x63c] sm:$0xf]
      %v578 = vld [vmem:[%s161 + $0x640] sm:$0xf]
      %v579 = vld [vmem:[%s161 + $0x644] sm:$0xf]
      %v580 = vld [vmem:[%s161 + $0x648] sm:$0xf]
      %v581 = vld [vmem:[%s161 + $0x64c] sm:$0xf]
      %v582 = vld [vmem:[%s161 + $0x650] sm:$0xf]
      %v583 = vld [vmem:[%s161 + $0x654] sm:$0xf]
      %v584 = vld [vmem:[%s161 + $0x658] sm:$0xf]
      %v585 = vld [vmem:[%s161 + $0x65c] sm:$0xf]
      %v586 = vld [vmem:[%s161 + $0x660] sm:$0xf]
      %v587 = vld [vmem:[%s161 + $0x664] sm:$0xf]
      %v588 = vld [vmem:[%s161 + $0x668] sm:$0xf]
      %v589 = vld [vmem:[%s161 + $0x66c] sm:$0xf]
      %v590 = vld [vmem:[%s161 + $0x670] sm:$0xf]
      %v591 = vld [vmem:[%s161 + $0x674] sm:$0xf]
      %v592 = vld [vmem:[%s161 + $0x678] sm:$0xf]
      %v593 = vld [vmem:[%s161 + $0x67c] sm:$0xf]
      %v594 = vld [vmem:[%s161 + $0x680] sm:$0xf]
      %v595 = vld [vmem:[%s161 + $0x684] sm:$0xf]
      %v596 = vld [vmem:[%s161 + $0x688] sm:$0xf]
      %v597 = vld [vmem:[%s161 + $0x68c] sm:$0xf]
      %v598 = vld [vmem:[%s161 + $0x690] sm:$0xf]
      %v599 = vld [vmem:[%s161 + $0x694] sm:$0xf]
      %v600 = vld [vmem:[%s161 + $0x698] sm:$0xf]
      %v601 = vld [vmem:[%s161 + $0x69c] sm:$0xf]
      %v602 = vld [vmem:[%s161 + $0x6a0] sm:$0xf]
      %v603 = vld [vmem:[%s161 + $0x6a4] sm:$0xf]
      %v604 = vld [vmem:[%s161 + $0x6a8] sm:$0xf]
      %v605 = vld [vmem:[%s161 + $0x6ac] sm:$0xf]
      %v606 = vld [vmem:[%s161 + $0x6b0] sm:$0xf]
      %v607 = vld [vmem:[%s161 + $0x6b4] sm:$0xf]
      %v608 = vld [vmem:[%s161 + $0x6b8] sm:$0xf]
      %v609 = vld [vmem:[%s161 + $0x6bc] sm:$0xf]
      %v610 = vld [vmem:[%s161 + $0x6c0] sm:$0xf]
      %v611 = vld [vmem:[%s161 + $0x6c4] sm:$0xf]
      %v612 = vld [vmem:[%s161 + $0x6c8] sm:$0xf]
      %v613 = vld [vmem:[%s161 + $0x6cc] sm:$0xf]
      %v614 = vld [vmem:[%s161 + $0x6d0] sm:$0xf]
      %v615 = vld [vmem:[%s161 + $0x6d4] sm:$0xf]
      %v616 = vld [vmem:[%s161 + $0x6d8] sm:$0xf]
      %v617 = vld [vmem:[%s161 + $0x6dc] sm:$0xf]
      %v618 = vld [vmem:[%s161 + $0x6e0] sm:$0xf]
      %v619 = vld [vmem:[%s161 + $0x6e4] sm:$0xf]
      %v620 = vld [vmem:[%s161 + $0x6e8] sm:$0xf]
      %v621 = vld [vmem:[%s161 + $0x6ec] sm:$0xf]
      %v622 = vld [vmem:[%s161 + $0x6f0] sm:$0xf]
      %v623 = vld [vmem:[%s161 + $0x6f4] sm:$0xf]
      %v624 = vld [vmem:[%s161 + $0x6f8] sm:$0xf]
      %v625 = vld [vmem:[%s161 + $0x6fc] sm:$0xf]
      %v626 = vld [vmem:[%s161 + $0x700] sm:$0xf]
      %v627 = vld [vmem:[%s161 + $0x704] sm:$0xf]
      %v628 = vld [vmem:[%s161 + $0x708] sm:$0xf]
      %v629 = vld [vmem:[%s161 + $0x70c] sm:$0xf]
      %v630 = vld [vmem:[%s161 + $0x710] sm:$0xf]
      %v631 = vld [vmem:[%s161 + $0x714] sm:$0xf]
      %v632 = vld [vmem:[%s161 + $0x718] sm:$0xf]
      %v633 = vld [vmem:[%s161 + $0x71c] sm:$0xf]
      %v634 = vld [vmem:[%s161 + $0x720] sm:$0xf]
      %v635 = vld [vmem:[%s161 + $0x724] sm:$0xf]
      %v636 = vld [vmem:[%s161 + $0x728] sm:$0xf]
      %v637 = vld [vmem:[%s161 + $0x72c] sm:$0xf]
      %v638 = vld [vmem:[%s161 + $0x730] sm:$0xf]
      %v639 = vld [vmem:[%s161 + $0x734] sm:$0xf]
      %v640 = vld [vmem:[%s161 + $0x738] sm:$0xf]
      %v641 = vld [vmem:[%s161 + $0x73c] sm:$0xf]
      %v642 = vld [vmem:[%s161 + $0x740] sm:$0xf]
      %v643 = vld [vmem:[%s161 + $0x744] sm:$0xf]
      %v644 = vld [vmem:[%s161 + $0x748] sm:$0xf]
      %v645 = vld [vmem:[%s161 + $0x74c] sm:$0xf]
      %v646 = vld [vmem:[%s161 + $0x750] sm:$0xf]
      %v647 = vld [vmem:[%s161 + $0x754] sm:$0xf]
      %v648 = vld [vmem:[%s161 + $0x758] sm:$0xf]
      %v649 = vld [vmem:[%s161 + $0x75c] sm:$0xf]
      %v650 = vld [vmem:[%s161 + $0x760] sm:$0xf]
      %v651 = vld [vmem:[%s161 + $0x764] sm:$0xf]
      %v652 = vld [vmem:[%s161 + $0x768] sm:$0xf]
      %v653 = vld [vmem:[%s161 + $0x76c] sm:$0xf]
      %v654 = vld [vmem:[%s161 + $0x770] sm:$0xf]
      %v655 = vld [vmem:[%s161 + $0x774] sm:$0xf]
      %v656 = vld [vmem:[%s161 + $0x778] sm:$0xf]
      %v657 = vld [vmem:[%s161 + $0x77c] sm:$0xf]
      %v658 = vld [vmem:[%s161 + $0x780] sm:$0xf]
      %v659 = vld [vmem:[%s161 + $0x784] sm:$0xf]
      %v660 = vld [vmem:[%s161 + $0x788] sm:$0xf]
      %v661 = vld [vmem:[%s161 + $0x78c] sm:$0xf]
      %v662 = vld [vmem:[%s161 + $0x790] sm:$0xf]
      %v663 = vld [vmem:[%s161 + $0x794] sm:$0xf]
      %v664 = vld [vmem:[%s161 + $0x798] sm:$0xf]
      %v665 = vld [vmem:[%s161 + $0x79c] sm:$0xf]
      %v666 = vld [vmem:[%s161 + $0x7a0] sm:$0xf]
      %v667 = vld [vmem:[%s161 + $0x7a4] sm:$0xf]
      %v668 = vld [vmem:[%s161 + $0x7a8] sm:$0xf]
      %v669 = vld [vmem:[%s161 + $0x7ac] sm:$0xf]
      %v670 = vld [vmem:[%s161 + $0x7b0] sm:$0xf]
      %v671 = vld [vmem:[%s161 + $0x7b4] sm:$0xf]
      %v672 = vld [vmem:[%s161 + $0x7b8] sm:$0xf]
      %v673 = vld [vmem:[%s161 + $0x7bc] sm:$0xf]
      %v674 = vld [vmem:[%s161 + $0x7c0] sm:$0xf]
      %v675 = vld [vmem:[%s161 + $0x7c4] sm:$0xf]
      %v676 = vld [vmem:[%s161 + $0x7c8] sm:$0xf]
      %v677 = vld [vmem:[%s161 + $0x7cc] sm:$0xf]
      %v678 = vld [vmem:[%s161 + $0x7d0] sm:$0xf]
      %v679 = vld [vmem:[%s161 + $0x7d4] sm:$0xf]
      %v680 = vld [vmem:[%s161 + $0x7d8] sm:$0xf]
      %v681 = vld [vmem:[%s161 + $0x7dc] sm:$0xf]
      %v682 = vld [vmem:[%s161 + $0x7e0] sm:$0xf]
      %v683 = vld [vmem:[%s161 + $0x7e4] sm:$0xf]
      %v684 = vld [vmem:[%s161 + $0x7e8] sm:$0xf]
      %v685 = vld [vmem:[%s161 + $0x7ec] sm:$0xf]
      %v686 = vld [vmem:[%s161 + $0x7f0] sm:$0xf]
      %v687 = vld [vmem:[%s161 + $0x7f4] sm:$0xf]
      %v688 = vld [vmem:[%s161 + $0x7f8] sm:$0xf]
      %v689 = vld [vmem:[%s161 + $0x7fc] sm:$0xf]
      %v690 = vld [vmem:[%s161 + $0x800] sm:$0xf]
      %v691 = vunpack.c.l.bf16 %v178
      %v692 = vunpack.c.l.bf16 %v179
      %v693 = vunpack.c.l.bf16 %v180
      %v694 = vunpack.c.l.bf16 %v181
      %v695 = vunpack.c.l.bf16 %v182
      %v696 = vunpack.c.l.bf16 %v183
      %v697 = vunpack.c.l.bf16 %v184
      %v698 = vunpack.c.l.bf16 %v185
      %v699 = vunpack.c.l.bf16 %v186
      %v700 = vunpack.c.l.bf16 %v187
      %v701 = vunpack.c.l.bf16 %v188
      %v702 = vunpack.c.l.bf16 %v189
      %v703 = vunpack.c.l.bf16 %v190
      %v704 = vunpack.c.l.bf16 %v191
      %v705 = vunpack.c.l.bf16 %v192
      %v706 = vunpack.c.l.bf16 %v193
      %v707 = vunpack.c.l.bf16 %v194
      %v708 = vunpack.c.l.bf16 %v195
      %v709 = vunpack.c.l.bf16 %v196
      %v710 = vunpack.c.l.bf16 %v197
      %v711 = vunpack.c.l.bf16 %v198
      %v712 = vunpack.c.l.bf16 %v199
      %v713 = vunpack.c.l.bf16 %v200
      %v714 = vunpack.c.l.bf16 %v201
      %v715 = vunpack.c.l.bf16 %v202
      %v716 = vunpack.c.l.bf16 %v203
      %v717 = vunpack.c.l.bf16 %v204
      %v718 = vunpack.c.l.bf16 %v205
      %v719 = vunpack.c.l.bf16 %v206
      %v720 = vunpack.c.l.bf16 %v207
      %v721 = vunpack.c.l.bf16 %v208
      %v722 = vunpack.c.l.bf16 %v209
      %v723 = vunpack.c.l.bf16 %v210
      %v724 = vunpack.c.l.bf16 %v211
      %v725 = vunpack.c.l.bf16 %v212
      %v726 = vunpack.c.l.bf16 %v213
      %v727 = vunpack.c.l.bf16 %v214
      %v728 = vunpack.c.l.bf16 %v215
      %v729 = vunpack.c.l.bf16 %v216
      %v730 = vunpack.c.l.bf16 %v217
      %v731 = vunpack.c.l.bf16 %v218
      %v732 = vunpack.c.l.bf16 %v219
      %v733 = vunpack.c.l.bf16 %v220
      %v734 = vunpack.c.l.bf16 %v221
      %v735 = vunpack.c.l.bf16 %v222
      %v736 = vunpack.c.l.bf16 %v223
      %v737 = vunpack.c.l.bf16 %v224
      %v738 = vunpack.c.l.bf16 %v225
      %v739 = vunpack.c.l.bf16 %v226
      %v740 = vunpack.c.l.bf16 %v227
      %v741 = vunpack.c.l.bf16 %v228
      %v742 = vunpack.c.l.bf16 %v229
      %v743 = vunpack.c.l.bf16 %v230
      %v744 = vunpack.c.l.bf16 %v231
      %v745 = vunpack.c.l.bf16 %v232
      %v746 = vunpack.c.l.bf16 %v233
      %v747 = vunpack.c.l.bf16 %v234
      %v748 = vunpack.c.l.bf16 %v235
      %v749 = vunpack.c.l.bf16 %v236
      %v750 = vunpack.c.l.bf16 %v237
      %v751 = vunpack.c.l.bf16 %v238
      %v752 = vunpack.c.l.bf16 %v239
      %v753 = vunpack.c.l.bf16 %v240
      %v754 = vunpack.c.l.bf16 %v241
      %v755 = vunpack.c.l.bf16 %v242
      %v756 = vunpack.c.l.bf16 %v243
      %v757 = vunpack.c.l.bf16 %v244
      %v758 = vunpack.c.l.bf16 %v245
      %v759 = vunpack.c.l.bf16 %v246
      %v760 = vunpack.c.l.bf16 %v247
      %v761 = vunpack.c.l.bf16 %v248
      %v762 = vunpack.c.l.bf16 %v249
      %v763 = vunpack.c.l.bf16 %v250
      %v764 = vunpack.c.l.bf16 %v251
      %v765 = vunpack.c.l.bf16 %v252
      %v766 = vunpack.c.l.bf16 %v253
      %v767 = vunpack.c.l.bf16 %v254
      %v768 = vunpack.c.l.bf16 %v255
      %v769 = vunpack.c.l.bf16 %v256
      %v770 = vunpack.c.l.bf16 %v257
      %v771 = vunpack.c.l.bf16 %v258
      %v772 = vunpack.c.l.bf16 %v259
      %v773 = vunpack.c.l.bf16 %v260
      %v774 = vunpack.c.l.bf16 %v261
      %v775 = vunpack.c.l.bf16 %v262
      %v776 = vunpack.c.l.bf16 %v263
      %v777 = vunpack.c.l.bf16 %v264
      %v778 = vunpack.c.l.bf16 %v265
      %v779 = vunpack.c.l.bf16 %v266
      %v780 = vunpack.c.l.bf16 %v267
      %v781 = vunpack.c.l.bf16 %v268
      %v782 = vunpack.c.l.bf16 %v269
      %v783 = vunpack.c.l.bf16 %v270
      %v784 = vunpack.c.l.bf16 %v271
      %v785 = vunpack.c.l.bf16 %v272
      %v786 = vunpack.c.l.bf16 %v273
      %v787 = vunpack.c.l.bf16 %v274
      %v788 = vunpack.c.l.bf16 %v275
      %v789 = vunpack.c.l.bf16 %v276
      %v790 = vunpack.c.l.bf16 %v277
      %v791 = vunpack.c.l.bf16 %v278
      %v792 = vunpack.c.l.bf16 %v279
      %v793 = vunpack.c.l.bf16 %v280
      %v794 = vunpack.c.l.bf16 %v281
      %v795 = vunpack.c.l.bf16 %v282
      %v796 = vunpack.c.l.bf16 %v283
      %v797 = vunpack.c.l.bf16 %v284
      %v798 = vunpack.c.l.bf16 %v285
      %v799 = vunpack.c.l.bf16 %v286
      %v800 = vunpack.c.l.bf16 %v287
      %v801 = vunpack.c.l.bf16 %v288
      %v802 = vunpack.c.l.bf16 %v289
      %v803 = vunpack.c.l.bf16 %v290
      %v804 = vunpack.c.l.bf16 %v291
      %v805 = vunpack.c.l.bf16 %v292
      %v806 = vunpack.c.l.bf16 %v293
      %v807 = vunpack.c.l.bf16 %v294
      %v808 = vunpack.c.l.bf16 %v295
      %v809 = vunpack.c.l.bf16 %v296
      %v810 = vunpack.c.l.bf16 %v297
      %v811 = vunpack.c.l.bf16 %v298
      %v812 = vunpack.c.l.bf16 %v299
      %v813 = vunpack.c.l.bf16 %v300
      %v814 = vunpack.c.l.bf16 %v301
      %v815 = vunpack.c.l.bf16 %v302
      %v816 = vunpack.c.l.bf16 %v303
      %v817 = vunpack.c.l.bf16 %v304
      %v818 = vunpack.c.l.bf16 %v305
      %v819 = vunpack.c.l.bf16 %v306
      %v820 = vunpack.c.l.bf16 %v307
      %v821 = vunpack.c.l.bf16 %v308
      %v822 = vunpack.c.l.bf16 %v309
      %v823 = vunpack.c.l.bf16 %v310
      %v824 = vunpack.c.l.bf16 %v311
      %v825 = vunpack.c.l.bf16 %v312
      %v826 = vunpack.c.l.bf16 %v313
      %v827 = vunpack.c.l.bf16 %v314
      %v828 = vunpack.c.l.bf16 %v315
      %v829 = vunpack.c.l.bf16 %v316
      %v830 = vunpack.c.l.bf16 %v317
      %v831 = vunpack.c.l.bf16 %v318
      %v832 = vunpack.c.l.bf16 %v319
      %v833 = vunpack.c.l.bf16 %v320
      %v834 = vunpack.c.l.bf16 %v321
      %v835 = vunpack.c.l.bf16 %v322
      %v836 = vunpack.c.l.bf16 %v323
      %v837 = vunpack.c.l.bf16 %v324
      %v838 = vunpack.c.l.bf16 %v325
      %v839 = vunpack.c.l.bf16 %v326
      %v840 = vunpack.c.l.bf16 %v327
      %v841 = vunpack.c.l.bf16 %v328
      %v842 = vunpack.c.l.bf16 %v329
      %v843 = vunpack.c.l.bf16 %v330
      %v844 = vunpack.c.l.bf16 %v331
      %v845 = vunpack.c.l.bf16 %v332
      %v846 = vunpack.c.l.bf16 %v333
      %v847 = vunpack.c.l.bf16 %v334
      %v848 = vunpack.c.l.bf16 %v335
      %v849 = vunpack.c.l.bf16 %v336
      %v850 = vunpack.c.l.bf16 %v337
      %v851 = vunpack.c.l.bf16 %v338
      %v852 = vunpack.c.l.bf16 %v339
      %v853 = vunpack.c.l.bf16 %v340
      %v854 = vunpack.c.l.bf16 %v341
      %v855 = vunpack.c.l.bf16 %v342
      %v856 = vunpack.c.l.bf16 %v343
      %v857 = vunpack.c.l.bf16 %v344
      %v858 = vunpack.c.l.bf16 %v345
      %v859 = vunpack.c.l.bf16 %v346
      %v860 = vunpack.c.l.bf16 %v347
      %v861 = vunpack.c.l.bf16 %v348
      %v862 = vunpack.c.l.bf16 %v349
      %v863 = vunpack.c.l.bf16 %v350
      %v864 = vunpack.c.l.bf16 %v351
      %v865 = vunpack.c.l.bf16 %v352
      %v866 = vunpack.c.l.bf16 %v353
      %v867 = vunpack.c.l.bf16 %v354
      %v868 = vunpack.c.l.bf16 %v355
      %v869 = vunpack.c.l.bf16 %v356
      %v870 = vunpack.c.l.bf16 %v357
      %v871 = vunpack.c.l.bf16 %v358
      %v872 = vunpack.c.l.bf16 %v359
      %v873 = vunpack.c.l.bf16 %v360
      %v874 = vunpack.c.l.bf16 %v361
      %v875 = vunpack.c.l.bf16 %v362
      %v876 = vunpack.c.l.bf16 %v363
      %v877 = vunpack.c.l.bf16 %v364
      %v878 = vunpack.c.l.bf16 %v365
      %v879 = vunpack.c.l.bf16 %v366
      %v880 = vunpack.c.l.bf16 %v367
      %v881 = vunpack.c.l.bf16 %v368
      %v882 = vunpack.c.l.bf16 %v369
      %v883 = vunpack.c.l.bf16 %v370
      %v884 = vunpack.c.l.bf16 %v371
      %v885 = vunpack.c.l.bf16 %v372
      %v886 = vunpack.c.l.bf16 %v373
      %v887 = vunpack.c.l.bf16 %v374
      %v888 = vunpack.c.l.bf16 %v375
      %v889 = vunpack.c.l.bf16 %v376
      %v890 = vunpack.c.l.bf16 %v377
      %v891 = vunpack.c.l.bf16 %v378
      %v892 = vunpack.c.l.bf16 %v379
      %v893 = vunpack.c.l.bf16 %v380
      %v894 = vunpack.c.l.bf16 %v381
      %v895 = vunpack.c.l.bf16 %v382
      %v896 = vunpack.c.l.bf16 %v383
      %v897 = vunpack.c.l.bf16 %v384
      %v898 = vunpack.c.l.bf16 %v385
      %v899 = vunpack.c.l.bf16 %v386
      %v900 = vunpack.c.l.bf16 %v387
      %v901 = vunpack.c.l.bf16 %v388
      %v902 = vunpack.c.l.bf16 %v389
      %v903 = vunpack.c.l.bf16 %v390
      %v904 = vunpack.c.l.bf16 %v391
      %v905 = vunpack.c.l.bf16 %v392
      %v906 = vunpack.c.l.bf16 %v393
      %v907 = vunpack.c.l.bf16 %v394
      %v908 = vunpack.c.l.bf16 %v395
      %v909 = vunpack.c.l.bf16 %v396
      %v910 = vunpack.c.l.bf16 %v397
      %v911 = vunpack.c.l.bf16 %v398
      %v912 = vunpack.c.l.bf16 %v399
      %v913 = vunpack.c.l.bf16 %v400
      %v914 = vunpack.c.l.bf16 %v401
      %v915 = vunpack.c.l.bf16 %v402
      %v916 = vunpack.c.l.bf16 %v403
      %v917 = vunpack.c.l.bf16 %v404
      %v918 = vunpack.c.l.bf16 %v405
      %v919 = vunpack.c.l.bf16 %v406
      %v920 = vunpack.c.l.bf16 %v407
      %v921 = vunpack.c.l.bf16 %v408
      %v922 = vunpack.c.l.bf16 %v409
      %v923 = vunpack.c.l.bf16 %v410
      %v924 = vunpack.c.l.bf16 %v411
      %v925 = vunpack.c.l.bf16 %v412
      %v926 = vunpack.c.l.bf16 %v413
      %v927 = vunpack.c.l.bf16 %v414
      %v928 = vunpack.c.l.bf16 %v415
      %v929 = vunpack.c.l.bf16 %v416
      %v930 = vunpack.c.l.bf16 %v417
      %v931 = vunpack.c.l.bf16 %v418
      %v932 = vunpack.c.l.bf16 %v419
      %v933 = vunpack.c.l.bf16 %v420
      %v934 = vunpack.c.l.bf16 %v421
      %v935 = vunpack.c.l.bf16 %v422
      %v936 = vunpack.c.l.bf16 %v423
      %v937 = vunpack.c.l.bf16 %v424
      %v938 = vunpack.c.l.bf16 %v425
      %v939 = vunpack.c.l.bf16 %v426
      %v940 = vunpack.c.l.bf16 %v427
      %v941 = vunpack.c.l.bf16 %v428
      %v942 = vunpack.c.l.bf16 %v429
      %v943 = vunpack.c.l.bf16 %v430
      %v944 = vunpack.c.l.bf16 %v431
      %v945 = vunpack.c.l.bf16 %v432
      %v946 = vunpack.c.l.bf16 %v433
      %v947 = vunpack.c.l.bf16 %v434
      %v948 = vunpack.c.l.bf16 %v435
      %v949 = vunpack.c.l.bf16 %v436
      %v950 = vunpack.c.l.bf16 %v437
      %v951 = vunpack.c.l.bf16 %v438
      %v952 = vunpack.c.l.bf16 %v439
      %v953 = vunpack.c.l.bf16 %v440
      %v954 = vunpack.c.l.bf16 %v441
      %v955 = vunpack.c.l.bf16 %v442
      %v956 = vunpack.c.l.bf16 %v443
      %v957 = vunpack.c.l.bf16 %v444
      %v958 = vunpack.c.l.bf16 %v445
      %v959 = vunpack.c.l.bf16 %v446
      %v960 = vunpack.c.l.bf16 %v447
      %v961 = vunpack.c.l.bf16 %v448
      %v962 = vunpack.c.l.bf16 %v449
      %v963 = vunpack.c.l.bf16 %v450
      %v964 = vunpack.c.l.bf16 %v451
      %v965 = vunpack.c.l.bf16 %v452
      %v966 = vunpack.c.l.bf16 %v453
      %v967 = vunpack.c.l.bf16 %v454
      %v968 = vunpack.c.l.bf16 %v455
      %v969 = vunpack.c.l.bf16 %v456
      %v970 = vunpack.c.l.bf16 %v457
      %v971 = vunpack.c.l.bf16 %v458
      %v972 = vunpack.c.l.bf16 %v459
      %v973 = vunpack.c.l.bf16 %v460
      %v974 = vunpack.c.l.bf16 %v461
      %v975 = vunpack.c.l.bf16 %v462
      %v976 = vunpack.c.l.bf16 %v463
      %v977 = vunpack.c.l.bf16 %v464
      %v978 = vunpack.c.l.bf16 %v465
      %v979 = vunpack.c.l.bf16 %v466
      %v980 = vunpack.c.l.bf16 %v467
      %v981 = vunpack.c.l.bf16 %v468
      %v982 = vunpack.c.l.bf16 %v469
      %v983 = vunpack.c.l.bf16 %v470
      %v984 = vunpack.c.l.bf16 %v471
      %v985 = vunpack.c.l.bf16 %v472
      %v986 = vunpack.c.l.bf16 %v473
      %v987 = vunpack.c.l.bf16 %v474
      %v988 = vunpack.c.l.bf16 %v475
      %v989 = vunpack.c.l.bf16 %v476
      %v990 = vunpack.c.l.bf16 %v477
      %v991 = vunpack.c.l.bf16 %v478
      %v992 = vunpack.c.l.bf16 %v479
      %v993 = vunpack.c.l.bf16 %v480
      %v994 = vunpack.c.l.bf16 %v481
      %v995 = vunpack.c.l.bf16 %v482
      %v996 = vunpack.c.l.bf16 %v483
      %v997 = vunpack.c.l.bf16 %v484
      %v998 = vunpack.c.l.bf16 %v485
      %v999 = vunpack.c.l.bf16 %v486
      %v1000 = vunpack.c.l.bf16 %v487
      %v1001 = vunpack.c.l.bf16 %v488
      %v1002 = vunpack.c.l.bf16 %v489
      %v1003 = vunpack.c.l.bf16 %v490
      %v1004 = vunpack.c.l.bf16 %v491
      %v1005 = vunpack.c.l.bf16 %v492
      %v1006 = vunpack.c.l.bf16 %v493
      %v1007 = vunpack.c.l.bf16 %v494
      %v1008 = vunpack.c.l.bf16 %v495
      %v1009 = vunpack.c.l.bf16 %v496
      %v1010 = vunpack.c.l.bf16 %v497
      %v1011 = vunpack.c.l.bf16 %v498
      %v1012 = vunpack.c.l.bf16 %v499
      %v1013 = vunpack.c.l.bf16 %v500
      %v1014 = vunpack.c.l.bf16 %v501
      %v1015 = vunpack.c.l.bf16 %v502
      %v1016 = vunpack.c.l.bf16 %v503
      %v1017 = vunpack.c.l.bf16 %v504
      %v1018 = vunpack.c.l.bf16 %v505
      %v1019 = vunpack.c.l.bf16 %v506
      %v1020 = vunpack.c.l.bf16 %v507
      %v1021 = vunpack.c.l.bf16 %v508
      %v1022 = vunpack.c.l.bf16 %v509
      %v1023 = vunpack.c.l.bf16 %v510
      %v1024 = vunpack.c.l.bf16 %v511
      %v1025 = vunpack.c.l.bf16 %v512
      %v1026 = vunpack.c.l.bf16 %v513
      %v1027 = vunpack.c.l.bf16 %v514
      %v1028 = vunpack.c.l.bf16 %v515
      %v1029 = vunpack.c.l.bf16 %v516
      %v1030 = vunpack.c.l.bf16 %v517
      %v1031 = vunpack.c.l.bf16 %v518
      %v1032 = vunpack.c.l.bf16 %v519
      %v1033 = vunpack.c.l.bf16 %v520
      %v1034 = vunpack.c.l.bf16 %v521
      %v1035 = vunpack.c.l.bf16 %v522
      %v1036 = vunpack.c.l.bf16 %v523
      %v1037 = vunpack.c.l.bf16 %v524
      %v1038 = vunpack.c.l.bf16 %v525
      %v1039 = vunpack.c.l.bf16 %v526
      %v1040 = vunpack.c.l.bf16 %v527
      %v1041 = vunpack.c.l.bf16 %v528
      %v1042 = vunpack.c.l.bf16 %v529
      %v1043 = vunpack.c.l.bf16 %v530
      %v1044 = vunpack.c.l.bf16 %v531
      %v1045 = vunpack.c.l.bf16 %v532
      %v1046 = vunpack.c.l.bf16 %v533
      %v1047 = vunpack.c.l.bf16 %v534
      %v1048 = vunpack.c.l.bf16 %v535
      %v1049 = vunpack.c.l.bf16 %v536
      %v1050 = vunpack.c.l.bf16 %v537
      %v1051 = vunpack.c.l.bf16 %v538
      %v1052 = vunpack.c.l.bf16 %v539
      %v1053 = vunpack.c.l.bf16 %v540
      %v1054 = vunpack.c.l.bf16 %v541
      %v1055 = vunpack.c.l.bf16 %v542
      %v1056 = vunpack.c.l.bf16 %v543
      %v1057 = vunpack.c.l.bf16 %v544
      %v1058 = vunpack.c.l.bf16 %v545
      %v1059 = vunpack.c.l.bf16 %v546
      %v1060 = vunpack.c.l.bf16 %v547
      %v1061 = vunpack.c.l.bf16 %v548
      %v1062 = vunpack.c.l.bf16 %v549
      %v1063 = vunpack.c.l.bf16 %v550
      %v1064 = vunpack.c.l.bf16 %v551
      %v1065 = vunpack.c.l.bf16 %v552
      %v1066 = vunpack.c.l.bf16 %v553
      %v1067 = vunpack.c.l.bf16 %v554
      %v1068 = vunpack.c.l.bf16 %v555
      %v1069 = vunpack.c.l.bf16 %v556
      %v1070 = vunpack.c.l.bf16 %v557
      %v1071 = vunpack.c.l.bf16 %v558
      %v1072 = vunpack.c.l.bf16 %v559
      %v1073 = vunpack.c.l.bf16 %v560
      %v1074 = vunpack.c.l.bf16 %v561
      %v1075 = vunpack.c.l.bf16 %v562
      %v1076 = vunpack.c.l.bf16 %v563
      %v1077 = vunpack.c.l.bf16 %v564
      %v1078 = vunpack.c.l.bf16 %v565
      %v1079 = vunpack.c.l.bf16 %v566
      %v1080 = vunpack.c.l.bf16 %v567
      %v1081 = vunpack.c.l.bf16 %v568
      %v1082 = vunpack.c.l.bf16 %v569
      %v1083 = vunpack.c.l.bf16 %v570
      %v1084 = vunpack.c.l.bf16 %v571
      %v1085 = vunpack.c.l.bf16 %v572
      %v1086 = vunpack.c.l.bf16 %v573
      %v1087 = vunpack.c.l.bf16 %v574
      %v1088 = vunpack.c.l.bf16 %v575
      %v1089 = vunpack.c.l.bf16 %v576
      %v1090 = vunpack.c.l.bf16 %v577
      %v1091 = vunpack.c.l.bf16 %v578
      %v1092 = vunpack.c.l.bf16 %v579
      %v1093 = vunpack.c.l.bf16 %v580
      %v1094 = vunpack.c.l.bf16 %v581
      %v1095 = vunpack.c.l.bf16 %v582
      %v1096 = vunpack.c.l.bf16 %v583
      %v1097 = vunpack.c.l.bf16 %v584
      %v1098 = vunpack.c.l.bf16 %v585
      %v1099 = vunpack.c.l.bf16 %v586
      %v1100 = vunpack.c.l.bf16 %v587
      %v1101 = vunpack.c.l.bf16 %v588
      %v1102 = vunpack.c.l.bf16 %v589
      %v1103 = vunpack.c.l.bf16 %v590
      %v1104 = vunpack.c.l.bf16 %v591
      %v1105 = vunpack.c.l.bf16 %v592
      %v1106 = vunpack.c.l.bf16 %v593
      %v1107 = vunpack.c.l.bf16 %v594
      %v1108 = vunpack.c.l.bf16 %v595
      %v1109 = vunpack.c.l.bf16 %v596
      %v1110 = vunpack.c.l.bf16 %v597
      %v1111 = vunpack.c.l.bf16 %v598
      %v1112 = vunpack.c.l.bf16 %v599
      %v1113 = vunpack.c.l.bf16 %v600
      %v1114 = vunpack.c.l.bf16 %v601
      %v1115 = vunpack.c.l.bf16 %v602
      %v1116 = vunpack.c.l.bf16 %v603
      %v1117 = vunpack.c.l.bf16 %v604
      %v1118 = vunpack.c.l.bf16 %v605
      %v1119 = vunpack.c.l.bf16 %v606
      %v1120 = vunpack.c.l.bf16 %v607
      %v1121 = vunpack.c.l.bf16 %v608
      %v1122 = vunpack.c.l.bf16 %v609
      %v1123 = vunpack.c.l.bf16 %v610
      %v1124 = vunpack.c.l.bf16 %v611
      %v1125 = vunpack.c.l.bf16 %v612
      %v1126 = vunpack.c.l.bf16 %v613
      %v1127 = vunpack.c.l.bf16 %v614
      %v1128 = vunpack.c.l.bf16 %v615
      %v1129 = vunpack.c.l.bf16 %v616
      %v1130 = vunpack.c.l.bf16 %v617
      %v1131 = vunpack.c.l.bf16 %v618
      %v1132 = vunpack.c.l.bf16 %v619
      %v1133 = vunpack.c.l.bf16 %v620
      %v1134 = vunpack.c.l.bf16 %v621
      %v1135 = vunpack.c.l.bf16 %v622
      %v1136 = vunpack.c.l.bf16 %v623
      %v1137 = vunpack.c.l.bf16 %v624
      %v1138 = vunpack.c.l.bf16 %v625
      %v1139 = vunpack.c.l.bf16 %v626
      %v1140 = vunpack.c.l.bf16 %v627
      %v1141 = vunpack.c.l.bf16 %v628
      %v1142 = vunpack.c.l.bf16 %v629
      %v1143 = vunpack.c.l.bf16 %v630
      %v1144 = vunpack.c.l.bf16 %v631
      %v1145 = vunpack.c.l.bf16 %v632
      %v1146 = vunpack.c.l.bf16 %v633
      %v1147 = vunpack.c.l.bf16 %v634
      %v1148 = vunpack.c.l.bf16 %v635
      %v1149 = vunpack.c.l.bf16 %v636
      %v1150 = vunpack.c.l.bf16 %v637
      %v1151 = vunpack.c.l.bf16 %v638
      %v1152 = vunpack.c.l.bf16 %v639
      %v1153 = vunpack.c.l.bf16 %v640
      %v1154 = vunpack.c.l.bf16 %v641
      %v1155 = vunpack.c.l.bf16 %v642
      %v1156 = vunpack.c.l.bf16 %v643
      %v1157 = vunpack.c.l.bf16 %v644
      %v1158 = vunpack.c.l.bf16 %v645
      %v1159 = vunpack.c.l.bf16 %v646
      %v1160 = vunpack.c.l.bf16 %v647
      %v1161 = vunpack.c.l.bf16 %v648
      %v1162 = vunpack.c.l.bf16 %v649
      %v1163 = vunpack.c.l.bf16 %v650
      %v1164 = vunpack.c.l.bf16 %v651
      %v1165 = vunpack.c.l.bf16 %v652
      %v1166 = vunpack.c.l.bf16 %v653
      %v1167 = vunpack.c.l.bf16 %v654
      %v1168 = vunpack.c.l.bf16 %v655
      %v1169 = vunpack.c.l.bf16 %v656
      %v1170 = vunpack.c.l.bf16 %v657
      %v1171 = vunpack.c.l.bf16 %v658
      %v1172 = vunpack.c.l.bf16 %v659
      %v1173 = vunpack.c.l.bf16 %v660
      %v1174 = vunpack.c.l.bf16 %v661
      %v1175 = vunpack.c.l.bf16 %v662
      %v1176 = vunpack.c.l.bf16 %v663
      %v1177 = vunpack.c.l.bf16 %v664
      %v1178 = vunpack.c.l.bf16 %v665
      %v1179 = vunpack.c.l.bf16 %v666
      %v1180 = vunpack.c.l.bf16 %v667
      %v1181 = vunpack.c.l.bf16 %v668
      %v1182 = vunpack.c.l.bf16 %v669
      %v1183 = vunpack.c.l.bf16 %v670
      %v1184 = vunpack.c.l.bf16 %v671
      %v1185 = vunpack.c.l.bf16 %v672
      %v1186 = vunpack.c.l.bf16 %v673
      %v1187 = vunpack.c.l.bf16 %v674
      %v1188 = vunpack.c.l.bf16 %v675
      %v1189 = vunpack.c.l.bf16 %v676
      %v1190 = vunpack.c.l.bf16 %v677
      %v1191 = vunpack.c.l.bf16 %v678
      %v1192 = vunpack.c.l.bf16 %v679
      %v1193 = vunpack.c.l.bf16 %v680
      %v1194 = vunpack.c.l.bf16 %v681
      %v1195 = vunpack.c.l.bf16 %v682
      %v1196 = vunpack.c.l.bf16 %v683
      %v1197 = vunpack.c.l.bf16 %v684
      %v1198 = vunpack.c.l.bf16 %v685
      %v1199 = vunpack.c.l.bf16 %v686
      %v1200 = vunpack.c.l.bf16 %v687
      %v1201 = vunpack.c.l.bf16 %v688
      %v1202 = vunpack.c.l.bf16 %v689
      %v1203 = vunpack.c.l.bf16 %v690
      %v1204 = vmax.f32 %v691, 0.0
      %v1205 = vmax.f32 %v692, 0.0
      %v1206 = vmax.f32 %v693, 0.0
      %v1207 = vmax.f32 %v694, 0.0
      %v1208 = vmax.f32 %v695, 0.0
      %v1209 = vmax.f32 %v696, 0.0
      %v1210 = vmax.f32 %v697, 0.0
      %v1211 = vmax.f32 %v698, 0.0
      %v1212 = vmax.f32 %v699, 0.0
      %v1213 = vmax.f32 %v700, 0.0
      %v1214 = vmax.f32 %v701, 0.0
      %v1215 = vmax.f32 %v702, 0.0
      %v1216 = vmax.f32 %v703, 0.0
      %v1217 = vmax.f32 %v704, 0.0
      %v1218 = vmax.f32 %v705, 0.0
      %v1219 = vmax.f32 %v706, 0.0
      %v1220 = vmax.f32 %v707, 0.0
      %v1221 = vmax.f32 %v708, 0.0
      %v1222 = vmax.f32 %v709, 0.0
      %v1223 = vmax.f32 %v710, 0.0
      %v1224 = vmax.f32 %v711, 0.0
      %v1225 = vmax.f32 %v712, 0.0
      %v1226 = vmax.f32 %v713, 0.0
      %v1227 = vmax.f32 %v714, 0.0
      %v1228 = vmax.f32 %v715, 0.0
      %v1229 = vmax.f32 %v716, 0.0
      %v1230 = vmax.f32 %v717, 0.0
      %v1231 = vmax.f32 %v718, 0.0
      %v1232 = vmax.f32 %v719, 0.0
      %v1233 = vmax.f32 %v720, 0.0
      %v1234 = vmax.f32 %v721, 0.0
      %v1235 = vmax.f32 %v722, 0.0
      %v1236 = vmax.f32 %v723, 0.0
      %v1237 = vmax.f32 %v724, 0.0
      %v1238 = vmax.f32 %v725, 0.0
      %v1239 = vmax.f32 %v726, 0.0
      %v1240 = vmax.f32 %v727, 0.0
      %v1241 = vmax.f32 %v728, 0.0
      %v1242 = vmax.f32 %v729, 0.0
      %v1243 = vmax.f32 %v730, 0.0
      %v1244 = vmax.f32 %v731, 0.0
      %v1245 = vmax.f32 %v732, 0.0
      %v1246 = vmax.f32 %v733, 0.0
      %v1247 = vmax.f32 %v734, 0.0
      %v1248 = vmax.f32 %v735, 0.0
      %v1249 = vmax.f32 %v736, 0.0
      %v1250 = vmax.f32 %v737, 0.0
      %v1251 = vmax.f32 %v738, 0.0
      %v1252 = vmax.f32 %v739, 0.0
      %v1253 = vmax.f32 %v740, 0.0
      %v1254 = vmax.f32 %v741, 0.0
      %v1255 = vmax.f32 %v742, 0.0
      %v1256 = vmax.f32 %v743, 0.0
      %v1257 = vmax.f32 %v744, 0.0
      %v1258 = vmax.f32 %v745, 0.0
      %v1259 = vmax.f32 %v746, 0.0
      %v1260 = vmax.f32 %v747, 0.0
      %v1261 = vmax.f32 %v748, 0.0
      %v1262 = vmax.f32 %v749, 0.0
      %v1263 = vmax.f32 %v750, 0.0
      %v1264 = vmax.f32 %v751, 0.0
      %v1265 = vmax.f32 %v752, 0.0
      %v1266 = vmax.f32 %v753, 0.0
      %v1267 = vmax.f32 %v754, 0.0
      %v1268 = vmax.f32 %v755, 0.0
      %v1269 = vmax.f32 %v756, 0.0
      %v1270 = vmax.f32 %v757, 0.0
      %v1271 = vmax.f32 %v758, 0.0
      %v1272 = vmax.f32 %v759, 0.0
      %v1273 = vmax.f32 %v760, 0.0
      %v1274 = vmax.f32 %v761, 0.0
      %v1275 = vmax.f32 %v762, 0.0
      %v1276 = vmax.f32 %v763, 0.0
      %v1277 = vmax.f32 %v764, 0.0
      %v1278 = vmax.f32 %v765, 0.0
      %v1279 = vmax.f32 %v766, 0.0
      %v1280 = vmax.f32 %v767, 0.0
      %v1281 = vmax.f32 %v768, 0.0
      %v1282 = vmax.f32 %v769, 0.0
      %v1283 = vmax.f32 %v770, 0.0
      %v1284 = vmax.f32 %v771, 0.0
      %v1285 = vmax.f32 %v772, 0.0
      %v1286 = vmax.f32 %v773, 0.0
      %v1287 = vmax.f32 %v774, 0.0
      %v1288 = vmax.f32 %v775, 0.0
      %v1289 = vmax.f32 %v776, 0.0
      %v1290 = vmax.f32 %v777, 0.0
      %v1291 = vmax.f32 %v778, 0.0
      %v1292 = vmax.f32 %v779, 0.0
      %v1293 = vmax.f32 %v780, 0.0
      %v1294 = vmax.f32 %v781, 0.0
      %v1295 = vmax.f32 %v782, 0.0
      %v1296 = vmax.f32 %v783, 0.0
      %v1297 = vmax.f32 %v784, 0.0
      %v1298 = vmax.f32 %v785, 0.0
      %v1299 = vmax.f32 %v786, 0.0
      %v1300 = vmax.f32 %v787, 0.0
      %v1301 = vmax.f32 %v788, 0.0
      %v1302 = vmax.f32 %v789, 0.0
      %v1303 = vmax.f32 %v790, 0.0
      %v1304 = vmax.f32 %v791, 0.0
      %v1305 = vmax.f32 %v792, 0.0
      %v1306 = vmax.f32 %v793, 0.0
      %v1307 = vmax.f32 %v794, 0.0
      %v1308 = vmax.f32 %v795, 0.0
      %v1309 = vmax.f32 %v796, 0.0
      %v1310 = vmax.f32 %v797, 0.0
      %v1311 = vmax.f32 %v798, 0.0
      %v1312 = vmax.f32 %v799, 0.0
      %v1313 = vmax.f32 %v800, 0.0
      %v1314 = vmax.f32 %v801, 0.0
      %v1315 = vmax.f32 %v802, 0.0
      %v1316 = vmax.f32 %v803, 0.0
      %v1317 = vmax.f32 %v804, 0.0
      %v1318 = vmax.f32 %v805, 0.0
      %v1319 = vmax.f32 %v806, 0.0
      %v1320 = vmax.f32 %v807, 0.0
      %v1321 = vmax.f32 %v808, 0.0
      %v1322 = vmax.f32 %v809, 0.0
      %v1323 = vmax.f32 %v810, 0.0
      %v1324 = vmax.f32 %v811, 0.0
      %v1325 = vmax.f32 %v812, 0.0
      %v1326 = vmax.f32 %v813, 0.0
      %v1327 = vmax.f32 %v814, 0.0
      %v1328 = vmax.f32 %v815, 0.0
      %v1329 = vmax.f32 %v816, 0.0
      %v1330 = vmax.f32 %v817, 0.0
      %v1331 = vmax.f32 %v818, 0.0
      %v1332 = vmax.f32 %v819, 0.0
      %v1333 = vmax.f32 %v820, 0.0
      %v1334 = vmax.f32 %v821, 0.0
      %v1335 = vmax.f32 %v822, 0.0
      %v1336 = vmax.f32 %v823, 0.0
      %v1337 = vmax.f32 %v824, 0.0
      %v1338 = vmax.f32 %v825, 0.0
      %v1339 = vmax.f32 %v826, 0.0
      %v1340 = vmax.f32 %v827, 0.0
      %v1341 = vmax.f32 %v828, 0.0
      %v1342 = vmax.f32 %v829, 0.0
      %v1343 = vmax.f32 %v830, 0.0
      %v1344 = vmax.f32 %v831, 0.0
      %v1345 = vmax.f32 %v832, 0.0
      %v1346 = vmax.f32 %v833, 0.0
      %v1347 = vmax.f32 %v834, 0.0
      %v1348 = vmax.f32 %v835, 0.0
      %v1349 = vmax.f32 %v836, 0.0
      %v1350 = vmax.f32 %v837, 0.0
      %v1351 = vmax.f32 %v838, 0.0
      %v1352 = vmax.f32 %v839, 0.0
      %v1353 = vmax.f32 %v840, 0.0
      %v1354 = vmax.f32 %v841, 0.0
      %v1355 = vmax.f32 %v842, 0.0
      %v1356 = vmax.f32 %v843, 0.0
      %v1357 = vmax.f32 %v844, 0.0
      %v1358 = vmax.f32 %v845, 0.0
      %v1359 = vmax.f32 %v846, 0.0
      %v1360 = vmax.f32 %v847, 0.0
      %v1361 = vmax.f32 %v848, 0.0
      %v1362 = vmax.f32 %v849, 0.0
      %v1363 = vmax.f32 %v850, 0.0
      %v1364 = vmax.f32 %v851, 0.0
      %v1365 = vmax.f32 %v852, 0.0
      %v1366 = vmax.f32 %v853, 0.0
      %v1367 = vmax.f32 %v854, 0.0
      %v1368 = vmax.f32 %v855, 0.0
      %v1369 = vmax.f32 %v856, 0.0
      %v1370 = vmax.f32 %v857, 0.0
      %v1371 = vmax.f32 %v858, 0.0
      %v1372 = vmax.f32 %v859, 0.0
      %v1373 = vmax.f32 %v860, 0.0
      %v1374 = vmax.f32 %v861, 0.0
      %v1375 = vmax.f32 %v862, 0.0
      %v1376 = vmax.f32 %v863, 0.0
      %v1377 = vmax.f32 %v864, 0.0
      %v1378 = vmax.f32 %v865, 0.0
      %v1379 = vmax.f32 %v866, 0.0
      %v1380 = vmax.f32 %v867, 0.0
      %v1381 = vmax.f32 %v868, 0.0
      %v1382 = vmax.f32 %v869, 0.0
      %v1383 = vmax.f32 %v870, 0.0
      %v1384 = vmax.f32 %v871, 0.0
      %v1385 = vmax.f32 %v872, 0.0
      %v1386 = vmax.f32 %v873, 0.0
      %v1387 = vmax.f32 %v874, 0.0
      %v1388 = vmax.f32 %v875, 0.0
      %v1389 = vmax.f32 %v876, 0.0
      %v1390 = vmax.f32 %v877, 0.0
      %v1391 = vmax.f32 %v878, 0.0
      %v1392 = vmax.f32 %v879, 0.0
      %v1393 = vmax.f32 %v880, 0.0
      %v1394 = vmax.f32 %v881, 0.0
      %v1395 = vmax.f32 %v882, 0.0
      %v1396 = vmax.f32 %v883, 0.0
      %v1397 = vmax.f32 %v884, 0.0
      %v1398 = vmax.f32 %v885, 0.0
      %v1399 = vmax.f32 %v886, 0.0
      %v1400 = vmax.f32 %v887, 0.0
      %v1401 = vmax.f32 %v888, 0.0
      %v1402 = vmax.f32 %v889, 0.0
      %v1403 = vmax.f32 %v890, 0.0
      %v1404 = vmax.f32 %v891, 0.0
      %v1405 = vmax.f32 %v892, 0.0
      %v1406 = vmax.f32 %v893, 0.0
      %v1407 = vmax.f32 %v894, 0.0
      %v1408 = vmax.f32 %v895, 0.0
      %v1409 = vmax.f32 %v896, 0.0
      %v1410 = vmax.f32 %v897, 0.0
      %v1411 = vmax.f32 %v898, 0.0
      %v1412 = vmax.f32 %v899, 0.0
      %v1413 = vmax.f32 %v900, 0.0
      %v1414 = vmax.f32 %v901, 0.0
      %v1415 = vmax.f32 %v902, 0.0
      %v1416 = vmax.f32 %v903, 0.0
      %v1417 = vmax.f32 %v904, 0.0
      %v1418 = vmax.f32 %v905, 0.0
      %v1419 = vmax.f32 %v906, 0.0
      %v1420 = vmax.f32 %v907, 0.0
      %v1421 = vmax.f32 %v908, 0.0
      %v1422 = vmax.f32 %v909, 0.0
      %v1423 = vmax.f32 %v910, 0.0
      %v1424 = vmax.f32 %v911, 0.0
      %v1425 = vmax.f32 %v912, 0.0
      %v1426 = vmax.f32 %v913, 0.0
      %v1427 = vmax.f32 %v914, 0.0
      %v1428 = vmax.f32 %v915, 0.0
      %v1429 = vmax.f32 %v916, 0.0
      %v1430 = vmax.f32 %v917, 0.0
      %v1431 = vmax.f32 %v918, 0.0
      %v1432 = vmax.f32 %v919, 0.0
      %v1433 = vmax.f32 %v920, 0.0
      %v1434 = vmax.f32 %v921, 0.0
      %v1435 = vmax.f32 %v922, 0.0
      %v1436 = vmax.f32 %v923, 0.0
      %v1437 = vmax.f32 %v924, 0.0
      %v1438 = vmax.f32 %v925, 0.0
      %v1439 = vmax.f32 %v926, 0.0
      %v1440 = vmax.f32 %v927, 0.0
      %v1441 = vmax.f32 %v928, 0.0
      %v1442 = vmax.f32 %v929, 0.0
      %v1443 = vmax.f32 %v930, 0.0
      %v1444 = vmax.f32 %v931, 0.0
      %v1445 = vmax.f32 %v932, 0.0
      %v1446 = vmax.f32 %v933, 0.0
      %v1447 = vmax.f32 %v934, 0.0
      %v1448 = vmax.f32 %v935, 0.0
      %v1449 = vmax.f32 %v936, 0.0
      %v1450 = vmax.f32 %v937, 0.0
      %v1451 = vmax.f32 %v938, 0.0
      %v1452 = vmax.f32 %v939, 0.0
      %v1453 = vmax.f32 %v940, 0.0
      %v1454 = vmax.f32 %v941, 0.0
      %v1455 = vmax.f32 %v942, 0.0
      %v1456 = vmax.f32 %v943, 0.0
      %v1457 = vmax.f32 %v944, 0.0
      %v1458 = vmax.f32 %v945, 0.0
      %v1459 = vmax.f32 %v946, 0.0
      %v1460 = vmax.f32 %v947, 0.0
      %v1461 = vmax.f32 %v948, 0.0
      %v1462 = vmax.f32 %v949, 0.0
      %v1463 = vmax.f32 %v950, 0.0
      %v1464 = vmax.f32 %v951, 0.0
      %v1465 = vmax.f32 %v952, 0.0
      %v1466 = vmax.f32 %v953, 0.0
      %v1467 = vmax.f32 %v954, 0.0
      %v1468 = vmax.f32 %v955, 0.0
      %v1469 = vmax.f32 %v956, 0.0
      %v1470 = vmax.f32 %v957, 0.0
      %v1471 = vmax.f32 %v958, 0.0
      %v1472 = vmax.f32 %v959, 0.0
      %v1473 = vmax.f32 %v960, 0.0
      %v1474 = vmax.f32 %v961, 0.0
      %v1475 = vmax.f32 %v962, 0.0
      %v1476 = vmax.f32 %v963, 0.0
      %v1477 = vmax.f32 %v964, 0.0
      %v1478 = vmax.f32 %v965, 0.0
      %v1479 = vmax.f32 %v966, 0.0
      %v1480 = vmax.f32 %v967, 0.0
      %v1481 = vmax.f32 %v968, 0.0
      %v1482 = vmax.f32 %v969, 0.0
      %v1483 = vmax.f32 %v970, 0.0
      %v1484 = vmax.f32 %v971, 0.0
      %v1485 = vmax.f32 %v972, 0.0
      %v1486 = vmax.f32 %v973, 0.0
      %v1487 = vmax.f32 %v974, 0.0
      %v1488 = vmax.f32 %v975, 0.0
      %v1489 = vmax.f32 %v976, 0.0
      %v1490 = vmax.f32 %v977, 0.0
      %v1491 = vmax.f32 %v978, 0.0
      %v1492 = vmax.f32 %v979, 0.0
      %v1493 = vmax.f32 %v980, 0.0
      %v1494 = vmax.f32 %v981, 0.0
      %v1495 = vmax.f32 %v982, 0.0
      %v1496 = vmax.f32 %v983, 0.0
      %v1497 = vmax.f32 %v984, 0.0
      %v1498 = vmax.f32 %v985, 0.0
      %v1499 = vmax.f32 %v986, 0.0
      %v1500 = vmax.f32 %v987, 0.0
      %v1501 = vmax.f32 %v988, 0.0
      %v1502 = vmax.f32 %v989, 0.0
      %v1503 = vmax.f32 %v990, 0.0
      %v1504 = vmax.f32 %v991, 0.0
      %v1505 = vmax.f32 %v992, 0.0
      %v1506 = vmax.f32 %v993, 0.0
      %v1507 = vmax.f32 %v994, 0.0
      %v1508 = vmax.f32 %v995, 0.0
      %v1509 = vmax.f32 %v996, 0.0
      %v1510 = vmax.f32 %v997, 0.0
      %v1511 = vmax.f32 %v998, 0.0
      %v1512 = vmax.f32 %v999, 0.0
      %v1513 = vmax.f32 %v1000, 0.0
      %v1514 = vmax.f32 %v1001, 0.0
      %v1515 = vmax.f32 %v1002, 0.0
      %v1516 = vmax.f32 %v1003, 0.0
      %v1517 = vmax.f32 %v1004, 0.0
      %v1518 = vmax.f32 %v1005, 0.0
      %v1519 = vmax.f32 %v1006, 0.0
      %v1520 = vmax.f32 %v1007, 0.0
      %v1521 = vmax.f32 %v1008, 0.0
      %v1522 = vmax.f32 %v1009, 0.0
      %v1523 = vmax.f32 %v1010, 0.0
      %v1524 = vmax.f32 %v1011, 0.0
      %v1525 = vmax.f32 %v1012, 0.0
      %v1526 = vmax.f32 %v1013, 0.0
      %v1527 = vmax.f32 %v1014, 0.0
      %v1528 = vmax.f32 %v1015, 0.0
      %v1529 = vmax.f32 %v1016, 0.0
      %v1530 = vmax.f32 %v1017, 0.0
      %v1531 = vmax.f32 %v1018, 0.0
      %v1532 = vmax.f32 %v1019, 0.0
      %v1533 = vmax.f32 %v1020, 0.0
      %v1534 = vmax.f32 %v1021, 0.0
      %v1535 = vmax.f32 %v1022, 0.0
      %v1536 = vmax.f32 %v1023, 0.0
      %v1537 = vmax.f32 %v1024, 0.0
      %v1538 = vmax.f32 %v1025, 0.0
      %v1539 = vmax.f32 %v1026, 0.0
      %v1540 = vmax.f32 %v1027, 0.0
      %v1541 = vmax.f32 %v1028, 0.0
      %v1542 = vmax.f32 %v1029, 0.0
      %v1543 = vmax.f32 %v1030, 0.0
      %v1544 = vmax.f32 %v1031, 0.0
      %v1545 = vmax.f32 %v1032, 0.0
      %v1546 = vmax.f32 %v1033, 0.0
      %v1547 = vmax.f32 %v1034, 0.0
      %v1548 = vmax.f32 %v1035, 0.0
      %v1549 = vmax.f32 %v1036, 0.0
      %v1550 = vmax.f32 %v1037, 0.0
      %v1551 = vmax.f32 %v1038, 0.0
      %v1552 = vmax.f32 %v1039, 0.0
      %v1553 = vmax.f32 %v1040, 0.0
      %v1554 = vmax.f32 %v1041, 0.0
      %v1555 = vmax.f32 %v1042, 0.0
      %v1556 = vmax.f32 %v1043, 0.0
      %v1557 = vmax.f32 %v1044, 0.0
      %v1558 = vmax.f32 %v1045, 0.0
      %v1559 = vmax.f32 %v1046, 0.0
      %v1560 = vmax.f32 %v1047, 0.0
      %v1561 = vmax.f32 %v1048, 0.0
      %v1562 = vmax.f32 %v1049, 0.0
      %v1563 = vmax.f32 %v1050, 0.0
      %v1564 = vmax.f32 %v1051, 0.0
      %v1565 = vmax.f32 %v1052, 0.0
      %v1566 = vmax.f32 %v1053, 0.0
      %v1567 = vmax.f32 %v1054, 0.0
      %v1568 = vmax.f32 %v1055, 0.0
      %v1569 = vmax.f32 %v1056, 0.0
      %v1570 = vmax.f32 %v1057, 0.0
      %v1571 = vmax.f32 %v1058, 0.0
      %v1572 = vmax.f32 %v1059, 0.0
      %v1573 = vmax.f32 %v1060, 0.0
      %v1574 = vmax.f32 %v1061, 0.0
      %v1575 = vmax.f32 %v1062, 0.0
      %v1576 = vmax.f32 %v1063, 0.0
      %v1577 = vmax.f32 %v1064, 0.0
      %v1578 = vmax.f32 %v1065, 0.0
      %v1579 = vmax.f32 %v1066, 0.0
      %v1580 = vmax.f32 %v1067, 0.0
      %v1581 = vmax.f32 %v1068, 0.0
      %v1582 = vmax.f32 %v1069, 0.0
      %v1583 = vmax.f32 %v1070, 0.0
      %v1584 = vmax.f32 %v1071, 0.0
      %v1585 = vmax.f32 %v1072, 0.0
      %v1586 = vmax.f32 %v1073, 0.0
      %v1587 = vmax.f32 %v1074, 0.0
      %v1588 = vmax.f32 %v1075, 0.0
      %v1589 = vmax.f32 %v1076, 0.0
      %v1590 = vmax.f32 %v1077, 0.0
      %v1591 = vmax.f32 %v1078, 0.0
      %v1592 = vmax.f32 %v1079, 0.0
      %v1593 = vmax.f32 %v1080, 0.0
      %v1594 = vmax.f32 %v1081, 0.0
      %v1595 = vmax.f32 %v1082, 0.0
      %v1596 = vmax.f32 %v1083, 0.0
      %v1597 = vmax.f32 %v1084, 0.0
      %v1598 = vmax.f32 %v1085, 0.0
      %v1599 = vmax.f32 %v1086, 0.0
      %v1600 = vmax.f32 %v1087, 0.0
      %v1601 = vmax.f32 %v1088, 0.0
      %v1602 = vmax.f32 %v1089, 0.0
      %v1603 = vmax.f32 %v1090, 0.0
      %v1604 = vmax.f32 %v1091, 0.0
      %v1605 = vmax.f32 %v1092, 0.0
      %v1606 = vmax.f32 %v1093, 0.0
      %v1607 = vmax.f32 %v1094, 0.0
      %v1608 = vmax.f32 %v1095, 0.0
      %v1609 = vmax.f32 %v1096, 0.0
      %v1610 = vmax.f32 %v1097, 0.0
      %v1611 = vmax.f32 %v1098, 0.0
      %v1612 = vmax.f32 %v1099, 0.0
      %v1613 = vmax.f32 %v1100, 0.0
      %v1614 = vmax.f32 %v1101, 0.0
      %v1615 = vmax.f32 %v1102, 0.0
      %v1616 = vmax.f32 %v1103, 0.0
      %v1617 = vmax.f32 %v1104, 0.0
      %v1618 = vmax.f32 %v1105, 0.0
      %v1619 = vmax.f32 %v1106, 0.0
      %v1620 = vmax.f32 %v1107, 0.0
      %v1621 = vmax.f32 %v1108, 0.0
      %v1622 = vmax.f32 %v1109, 0.0
      %v1623 = vmax.f32 %v1110, 0.0
      %v1624 = vmax.f32 %v1111, 0.0
      %v1625 = vmax.f32 %v1112, 0.0
      %v1626 = vmax.f32 %v1113, 0.0
      %v1627 = vmax.f32 %v1114, 0.0
      %v1628 = vmax.f32 %v1115, 0.0
      %v1629 = vmax.f32 %v1116, 0.0
      %v1630 = vmax.f32 %v1117, 0.0
      %v1631 = vmax.f32 %v1118, 0.0
      %v1632 = vmax.f32 %v1119, 0.0
      %v1633 = vmax.f32 %v1120, 0.0
      %v1634 = vmax.f32 %v1121, 0.0
      %v1635 = vmax.f32 %v1122, 0.0
      %v1636 = vmax.f32 %v1123, 0.0
      %v1637 = vmax.f32 %v1124, 0.0
      %v1638 = vmax.f32 %v1125, 0.0
      %v1639 = vmax.f32 %v1126, 0.0
      %v1640 = vmax.f32 %v1127, 0.0
      %v1641 = vmax.f32 %v1128, 0.0
      %v1642 = vmax.f32 %v1129, 0.0
      %v1643 = vmax.f32 %v1130, 0.0
      %v1644 = vmax.f32 %v1131, 0.0
      %v1645 = vmax.f32 %v1132, 0.0
      %v1646 = vmax.f32 %v1133, 0.0
      %v1647 = vmax.f32 %v1134, 0.0
      %v1648 = vmax.f32 %v1135, 0.0
      %v1649 = vmax.f32 %v1136, 0.0
      %v1650 = vmax.f32 %v1137, 0.0
      %v1651 = vmax.f32 %v1138, 0.0
      %v1652 = vmax.f32 %v1139, 0.0
      %v1653 = vmax.f32 %v1140, 0.0
      %v1654 = vmax.f32 %v1141, 0.0
      %v1655 = vmax.f32 %v1142, 0.0
      %v1656 = vmax.f32 %v1143, 0.0
      %v1657 = vmax.f32 %v1144, 0.0
      %v1658 = vmax.f32 %v1145, 0.0
      %v1659 = vmax.f32 %v1146, 0.0
      %v1660 = vmax.f32 %v1147, 0.0
      %v1661 = vmax.f32 %v1148, 0.0
      %v1662 = vmax.f32 %v1149, 0.0
      %v1663 = vmax.f32 %v1150, 0.0
      %v1664 = vmax.f32 %v1151, 0.0
      %v1665 = vmax.f32 %v1152, 0.0
      %v1666 = vmax.f32 %v1153, 0.0
      %v1667 = vmax.f32 %v1154, 0.0
      %v1668 = vmax.f32 %v1155, 0.0
      %v1669 = vmax.f32 %v1156, 0.0
      %v1670 = vmax.f32 %v1157, 0.0
      %v1671 = vmax.f32 %v1158, 0.0
      %v1672 = vmax.f32 %v1159, 0.0
      %v1673 = vmax.f32 %v1160, 0.0
      %v1674 = vmax.f32 %v1161, 0.0
      %v1675 = vmax.f32 %v1162, 0.0
      %v1676 = vmax.f32 %v1163, 0.0
      %v1677 = vmax.f32 %v1164, 0.0
      %v1678 = vmax.f32 %v1165, 0.0
      %v1679 = vmax.f32 %v1166, 0.0
      %v1680 = vmax.f32 %v1167, 0.0
      %v1681 = vmax.f32 %v1168, 0.0
      %v1682 = vmax.f32 %v1169, 0.0
      %v1683 = vmax.f32 %v1170, 0.0
      %v1684 = vmax.f32 %v1171, 0.0
      %v1685 = vmax.f32 %v1172, 0.0
      %v1686 = vmax.f32 %v1173, 0.0
      %v1687 = vmax.f32 %v1174, 0.0
      %v1688 = vmax.f32 %v1175, 0.0
      %v1689 = vmax.f32 %v1176, 0.0
      %v1690 = vmax.f32 %v1177, 0.0
      %v1691 = vmax.f32 %v1178, 0.0
      %v1692 = vmax.f32 %v1179, 0.0
      %v1693 = vmax.f32 %v1180, 0.0
      %v1694 = vmax.f32 %v1181, 0.0
      %v1695 = vmax.f32 %v1182, 0.0
      %v1696 = vmax.f32 %v1183, 0.0
      %v1697 = vmax.f32 %v1184, 0.0
      %v1698 = vmax.f32 %v1185, 0.0
      %v1699 = vmax.f32 %v1186, 0.0
      %v1700 = vmax.f32 %v1187, 0.0
      %v1701 = vmax.f32 %v1188, 0.0
      %v1702 = vmax.f32 %v1189, 0.0
      %v1703 = vmax.f32 %v1190, 0.0
      %v1704 = vmax.f32 %v1191, 0.0
      %v1705 = vmax.f32 %v1192, 0.0
      %v1706 = vmax.f32 %v1193, 0.0
      %v1707 = vmax.f32 %v1194, 0.0
      %v1708 = vmax.f32 %v1195, 0.0
      %v1709 = vmax.f32 %v1196, 0.0
      %v1710 = vmax.f32 %v1197, 0.0
      %v1711 = vmax.f32 %v1198, 0.0
      %v1712 = vmax.f32 %v1199, 0.0
      %v1713 = vmax.f32 %v1200, 0.0
      %v1714 = vmax.f32 %v1201, 0.0
      %v1715 = vmax.f32 %v1202, 0.0
      %v1716 = vmax.f32 %v1203, 0.0
      %v1717 = vpack.c.bf16 %v1204, %v1204
      %v1718 = vpack.c.bf16 %v1205, %v1205
      %v1719 = vpack.c.bf16 %v1206, %v1206
      %v1720 = vpack.c.bf16 %v1207, %v1207
      %v1721 = vpack.c.bf16 %v1208, %v1208
      %v1722 = vpack.c.bf16 %v1209, %v1209
      %v1723 = vpack.c.bf16 %v1210, %v1210
      %v1724 = vpack.c.bf16 %v1211, %v1211
      %v1725 = vpack.c.bf16 %v1212, %v1212
      %v1726 = vpack.c.bf16 %v1213, %v1213
      %v1727 = vpack.c.bf16 %v1214, %v1214
      %v1728 = vpack.c.bf16 %v1215, %v1215
      %v1729 = vpack.c.bf16 %v1216, %v1216
      %v1730 = vpack.c.bf16 %v1217, %v1217
      %v1731 = vpack.c.bf16 %v1218, %v1218
      %v1732 = vpack.c.bf16 %v1219, %v1219
      %v1733 = vpack.c.bf16 %v1220, %v1220
      %v1734 = vpack.c.bf16 %v1221, %v1221
      %v1735 = vpack.c.bf16 %v1222, %v1222
      %v1736 = vpack.c.bf16 %v1223, %v1223
      %v1737 = vpack.c.bf16 %v1224, %v1224
      %v1738 = vpack.c.bf16 %v1225, %v1225
      %v1739 = vpack.c.bf16 %v1226, %v1226
      %v1740 = vpack.c.bf16 %v1227, %v1227
      %v1741 = vpack.c.bf16 %v1228, %v1228
      %v1742 = vpack.c.bf16 %v1229, %v1229
      %v1743 = vpack.c.bf16 %v1230, %v1230
      %v1744 = vpack.c.bf16 %v1231, %v1231
      %v1745 = vpack.c.bf16 %v1232, %v1232
      %v1746 = vpack.c.bf16 %v1233, %v1233
      %v1747 = vpack.c.bf16 %v1234, %v1234
      %v1748 = vpack.c.bf16 %v1235, %v1235
      %v1749 = vpack.c.bf16 %v1236, %v1236
      %v1750 = vpack.c.bf16 %v1237, %v1237
      %v1751 = vpack.c.bf16 %v1238, %v1238
      %v1752 = vpack.c.bf16 %v1239, %v1239
      %v1753 = vpack.c.bf16 %v1240, %v1240
      %v1754 = vpack.c.bf16 %v1241, %v1241
      %v1755 = vpack.c.bf16 %v1242, %v1242
      %v1756 = vpack.c.bf16 %v1243, %v1243
      %v1757 = vpack.c.bf16 %v1244, %v1244
      %v1758 = vpack.c.bf16 %v1245, %v1245
      %v1759 = vpack.c.bf16 %v1246, %v1246
      %v1760 = vpack.c.bf16 %v1247, %v1247
      %v1761 = vpack.c.bf16 %v1248, %v1248
      %v1762 = vpack.c.bf16 %v1249, %v1249
      %v1763 = vpack.c.bf16 %v1250, %v1250
      %v1764 = vpack.c.bf16 %v1251, %v1251
      %v1765 = vpack.c.bf16 %v1252, %v1252
      %v1766 = vpack.c.bf16 %v1253, %v1253
      %v1767 = vpack.c.bf16 %v1254, %v1254
      %v1768 = vpack.c.bf16 %v1255, %v1255
      %v1769 = vpack.c.bf16 %v1256, %v1256
      %v1770 = vpack.c.bf16 %v1257, %v1257
      %v1771 = vpack.c.bf16 %v1258, %v1258
      %v1772 = vpack.c.bf16 %v1259, %v1259
      %v1773 = vpack.c.bf16 %v1260, %v1260
      %v1774 = vpack.c.bf16 %v1261, %v1261
      %v1775 = vpack.c.bf16 %v1262, %v1262
      %v1776 = vpack.c.bf16 %v1263, %v1263
      %v1777 = vpack.c.bf16 %v1264, %v1264
      %v1778 = vpack.c.bf16 %v1265, %v1265
      %v1779 = vpack.c.bf16 %v1266, %v1266
      %v1780 = vpack.c.bf16 %v1267, %v1267
      %v1781 = vpack.c.bf16 %v1268, %v1268
      %v1782 = vpack.c.bf16 %v1269, %v1269
      %v1783 = vpack.c.bf16 %v1270, %v1270
      %v1784 = vpack.c.bf16 %v1271, %v1271
      %v1785 = vpack.c.bf16 %v1272, %v1272
      %v1786 = vpack.c.bf16 %v1273, %v1273
      %v1787 = vpack.c.bf16 %v1274, %v1274
      %v1788 = vpack.c.bf16 %v1275, %v1275
      %v1789 = vpack.c.bf16 %v1276, %v1276
      %v1790 = vpack.c.bf16 %v1277, %v1277
      %v1791 = vpack.c.bf16 %v1278, %v1278
      %v1792 = vpack.c.bf16 %v1279, %v1279
      %v1793 = vpack.c.bf16 %v1280, %v1280
      %v1794 = vpack.c.bf16 %v1281, %v1281
      %v1795 = vpack.c.bf16 %v1282, %v1282
      %v1796 = vpack.c.bf16 %v1283, %v1283
      %v1797 = vpack.c.bf16 %v1284, %v1284
      %v1798 = vpack.c.bf16 %v1285, %v1285
      %v1799 = vpack.c.bf16 %v1286, %v1286
      %v1800 = vpack.c.bf16 %v1287, %v1287
      %v1801 = vpack.c.bf16 %v1288, %v1288
      %v1802 = vpack.c.bf16 %v1289, %v1289
      %v1803 = vpack.c.bf16 %v1290, %v1290
      %v1804 = vpack.c.bf16 %v1291, %v1291
      %v1805 = vpack.c.bf16 %v1292, %v1292
      %v1806 = vpack.c.bf16 %v1293, %v1293
      %v1807 = vpack.c.bf16 %v1294, %v1294
      %v1808 = vpack.c.bf16 %v1295, %v1295
      %v1809 = vpack.c.bf16 %v1296, %v1296
      %v1810 = vpack.c.bf16 %v1297, %v1297
      %v1811 = vpack.c.bf16 %v1298, %v1298
      %v1812 = vpack.c.bf16 %v1299, %v1299
      %v1813 = vpack.c.bf16 %v1300, %v1300
      %v1814 = vpack.c.bf16 %v1301, %v1301
      %v1815 = vpack.c.bf16 %v1302, %v1302
      %v1816 = vpack.c.bf16 %v1303, %v1303
      %v1817 = vpack.c.bf16 %v1304, %v1304
      %v1818 = vpack.c.bf16 %v1305, %v1305
      %v1819 = vpack.c.bf16 %v1306, %v1306
      %v1820 = vpack.c.bf16 %v1307, %v1307
      %v1821 = vpack.c.bf16 %v1308, %v1308
      %v1822 = vpack.c.bf16 %v1309, %v1309
      %v1823 = vpack.c.bf16 %v1310, %v1310
      %v1824 = vpack.c.bf16 %v1311, %v1311
      %v1825 = vpack.c.bf16 %v1312, %v1312
      %v1826 = vpack.c.bf16 %v1313, %v1313
      %v1827 = vpack.c.bf16 %v1314, %v1314
      %v1828 = vpack.c.bf16 %v1315, %v1315
      %v1829 = vpack.c.bf16 %v1316, %v1316
      %v1830 = vpack.c.bf16 %v1317, %v1317
      %v1831 = vpack.c.bf16 %v1318, %v1318
      %v1832 = vpack.c.bf16 %v1319, %v1319
      %v1833 = vpack.c.bf16 %v1320, %v1320
      %v1834 = vpack.c.bf16 %v1321, %v1321
      %v1835 = vpack.c.bf16 %v1322, %v1322
      %v1836 = vpack.c.bf16 %v1323, %v1323
      %v1837 = vpack.c.bf16 %v1324, %v1324
      %v1838 = vpack.c.bf16 %v1325, %v1325
      %v1839 = vpack.c.bf16 %v1326, %v1326
      %v1840 = vpack.c.bf16 %v1327, %v1327
      %v1841 = vpack.c.bf16 %v1328, %v1328
      %v1842 = vpack.c.bf16 %v1329, %v1329
      %v1843 = vpack.c.bf16 %v1330, %v1330
      %v1844 = vpack.c.bf16 %v1331, %v1331
      %v1845 = vpack.c.bf16 %v1332, %v1332
      %v1846 = vpack.c.bf16 %v1333, %v1333
      %v1847 = vpack.c.bf16 %v1334, %v1334
      %v1848 = vpack.c.bf16 %v1335, %v1335
      %v1849 = vpack.c.bf16 %v1336, %v1336
      %v1850 = vpack.c.bf16 %v1337, %v1337
      %v1851 = vpack.c.bf16 %v1338, %v1338
      %v1852 = vpack.c.bf16 %v1339, %v1339
      %v1853 = vpack.c.bf16 %v1340, %v1340
      %v1854 = vpack.c.bf16 %v1341, %v1341
      %v1855 = vpack.c.bf16 %v1342, %v1342
      %v1856 = vpack.c.bf16 %v1343, %v1343
      %v1857 = vpack.c.bf16 %v1344, %v1344
      %v1858 = vpack.c.bf16 %v1345, %v1345
      %v1859 = vpack.c.bf16 %v1346, %v1346
      %v1860 = vpack.c.bf16 %v1347, %v1347
      %v1861 = vpack.c.bf16 %v1348, %v1348
      %v1862 = vpack.c.bf16 %v1349, %v1349
      %v1863 = vpack.c.bf16 %v1350, %v1350
      %v1864 = vpack.c.bf16 %v1351, %v1351
      %v1865 = vpack.c.bf16 %v1352, %v1352
      %v1866 = vpack.c.bf16 %v1353, %v1353
      %v1867 = vpack.c.bf16 %v1354, %v1354
      %v1868 = vpack.c.bf16 %v1355, %v1355
      %v1869 = vpack.c.bf16 %v1356, %v1356
      %v1870 = vpack.c.bf16 %v1357, %v1357
      %v1871 = vpack.c.bf16 %v1358, %v1358
      %v1872 = vpack.c.bf16 %v1359, %v1359
      %v1873 = vpack.c.bf16 %v1360, %v1360
      %v1874 = vpack.c.bf16 %v1361, %v1361
      %v1875 = vpack.c.bf16 %v1362, %v1362
      %v1876 = vpack.c.bf16 %v1363, %v1363
      %v1877 = vpack.c.bf16 %v1364, %v1364
      %v1878 = vpack.c.bf16 %v1365, %v1365
      %v1879 = vpack.c.bf16 %v1366, %v1366
      %v1880 = vpack.c.bf16 %v1367, %v1367
      %v1881 = vpack.c.bf16 %v1368, %v1368
      %v1882 = vpack.c.bf16 %v1369, %v1369
      %v1883 = vpack.c.bf16 %v1370, %v1370
      %v1884 = vpack.c.bf16 %v1371, %v1371
      %v1885 = vpack.c.bf16 %v1372, %v1372
      %v1886 = vpack.c.bf16 %v1373, %v1373
      %v1887 = vpack.c.bf16 %v1374, %v1374
      %v1888 = vpack.c.bf16 %v1375, %v1375
      %v1889 = vpack.c.bf16 %v1376, %v1376
      %v1890 = vpack.c.bf16 %v1377, %v1377
      %v1891 = vpack.c.bf16 %v1378, %v1378
      %v1892 = vpack.c.bf16 %v1379, %v1379
      %v1893 = vpack.c.bf16 %v1380, %v1380
      %v1894 = vpack.c.bf16 %v1381, %v1381
      %v1895 = vpack.c.bf16 %v1382, %v1382
      %v1896 = vpack.c.bf16 %v1383, %v1383
      %v1897 = vpack.c.bf16 %v1384, %v1384
      %v1898 = vpack.c.bf16 %v1385, %v1385
      %v1899 = vpack.c.bf16 %v1386, %v1386
      %v1900 = vpack.c.bf16 %v1387, %v1387
      %v1901 = vpack.c.bf16 %v1388, %v1388
      %v1902 = vpack.c.bf16 %v1389, %v1389
      %v1903 = vpack.c.bf16 %v1390, %v1390
      %v1904 = vpack.c.bf16 %v1391, %v1391
      %v1905 = vpack.c.bf16 %v1392, %v1392
      %v1906 = vpack.c.bf16 %v1393, %v1393
      %v1907 = vpack.c.bf16 %v1394, %v1394
      %v1908 = vpack.c.bf16 %v1395, %v1395
      %v1909 = vpack.c.bf16 %v1396, %v1396
      %v1910 = vpack.c.bf16 %v1397, %v1397
      %v1911 = vpack.c.bf16 %v1398, %v1398
      %v1912 = vpack.c.bf16 %v1399, %v1399
      %v1913 = vpack.c.bf16 %v1400, %v1400
      %v1914 = vpack.c.bf16 %v1401, %v1401
      %v1915 = vpack.c.bf16 %v1402, %v1402
      %v1916 = vpack.c.bf16 %v1403, %v1403
      %v1917 = vpack.c.bf16 %v1404, %v1404
      %v1918 = vpack.c.bf16 %v1405, %v1405
      %v1919 = vpack.c.bf16 %v1406, %v1406
      %v1920 = vpack.c.bf16 %v1407, %v1407
      %v1921 = vpack.c.bf16 %v1408, %v1408
      %v1922 = vpack.c.bf16 %v1409, %v1409
      %v1923 = vpack.c.bf16 %v1410, %v1410
      %v1924 = vpack.c.bf16 %v1411, %v1411
      %v1925 = vpack.c.bf16 %v1412, %v1412
      %v1926 = vpack.c.bf16 %v1413, %v1413
      %v1927 = vpack.c.bf16 %v1414, %v1414
      %v1928 = vpack.c.bf16 %v1415, %v1415
      %v1929 = vpack.c.bf16 %v1416, %v1416
      %v1930 = vpack.c.bf16 %v1417, %v1417
      %v1931 = vpack.c.bf16 %v1418, %v1418
      %v1932 = vpack.c.bf16 %v1419, %v1419
      %v1933 = vpack.c.bf16 %v1420, %v1420
      %v1934 = vpack.c.bf16 %v1421, %v1421
      %v1935 = vpack.c.bf16 %v1422, %v1422
      %v1936 = vpack.c.bf16 %v1423, %v1423
      %v1937 = vpack.c.bf16 %v1424, %v1424
      %v1938 = vpack.c.bf16 %v1425, %v1425
      %v1939 = vpack.c.bf16 %v1426, %v1426
      %v1940 = vpack.c.bf16 %v1427, %v1427
      %v1941 = vpack.c.bf16 %v1428, %v1428
      %v1942 = vpack.c.bf16 %v1429, %v1429
      %v1943 = vpack.c.bf16 %v1430, %v1430
      %v1944 = vpack.c.bf16 %v1431, %v1431
      %v1945 = vpack.c.bf16 %v1432, %v1432
      %v1946 = vpack.c.bf16 %v1433, %v1433
      %v1947 = vpack.c.bf16 %v1434, %v1434
      %v1948 = vpack.c.bf16 %v1435, %v1435
      %v1949 = vpack.c.bf16 %v1436, %v1436
      %v1950 = vpack.c.bf16 %v1437, %v1437
      %v1951 = vpack.c.bf16 %v1438, %v1438
      %v1952 = vpack.c.bf16 %v1439, %v1439
      %v1953 = vpack.c.bf16 %v1440, %v1440
      %v1954 = vpack.c.bf16 %v1441, %v1441
      %v1955 = vpack.c.bf16 %v1442, %v1442
      %v1956 = vpack.c.bf16 %v1443, %v1443
      %v1957 = vpack.c.bf16 %v1444, %v1444
      %v1958 = vpack.c.bf16 %v1445, %v1445
      %v1959 = vpack.c.bf16 %v1446, %v1446
      %v1960 = vpack.c.bf16 %v1447, %v1447
      %v1961 = vpack.c.bf16 %v1448, %v1448
      %v1962 = vpack.c.bf16 %v1449, %v1449
      %v1963 = vpack.c.bf16 %v1450, %v1450
      %v1964 = vpack.c.bf16 %v1451, %v1451
      %v1965 = vpack.c.bf16 %v1452, %v1452
      %v1966 = vpack.c.bf16 %v1453, %v1453
      %v1967 = vpack.c.bf16 %v1454, %v1454
      %v1968 = vpack.c.bf16 %v1455, %v1455
      %v1969 = vpack.c.bf16 %v1456, %v1456
      %v1970 = vpack.c.bf16 %v1457, %v1457
      %v1971 = vpack.c.bf16 %v1458, %v1458
      %v1972 = vpack.c.bf16 %v1459, %v1459
      %v1973 = vpack.c.bf16 %v1460, %v1460
      %v1974 = vpack.c.bf16 %v1461, %v1461
      %v1975 = vpack.c.bf16 %v1462, %v1462
      %v1976 = vpack.c.bf16 %v1463, %v1463
      %v1977 = vpack.c.bf16 %v1464, %v1464
      %v1978 = vpack.c.bf16 %v1465, %v1465
      %v1979 = vpack.c.bf16 %v1466, %v1466
      %v1980 = vpack.c.bf16 %v1467, %v1467
      %v1981 = vpack.c.bf16 %v1468, %v1468
      %v1982 = vpack.c.bf16 %v1469, %v1469
      %v1983 = vpack.c.bf16 %v1470, %v1470
      %v1984 = vpack.c.bf16 %v1471, %v1471
      %v1985 = vpack.c.bf16 %v1472, %v1472
      %v1986 = vpack.c.bf16 %v1473, %v1473
      %v1987 = vpack.c.bf16 %v1474, %v1474
      %v1988 = vpack.c.bf16 %v1475, %v1475
      %v1989 = vpack.c.bf16 %v1476, %v1476
      %v1990 = vpack.c.bf16 %v1477, %v1477
      %v1991 = vpack.c.bf16 %v1478, %v1478
      %v1992 = vpack.c.bf16 %v1479, %v1479
      %v1993 = vpack.c.bf16 %v1480, %v1480
      %v1994 = vpack.c.bf16 %v1481, %v1481
      %v1995 = vpack.c.bf16 %v1482, %v1482
      %v1996 = vpack.c.bf16 %v1483, %v1483
      %v1997 = vpack.c.bf16 %v1484, %v1484
      %v1998 = vpack.c.bf16 %v1485, %v1485
      %v1999 = vpack.c.bf16 %v1486, %v1486
      %v2000 = vpack.c.bf16 %v1487, %v1487
      %v2001 = vpack.c.bf16 %v1488, %v1488
      %v2002 = vpack.c.bf16 %v1489, %v1489
      %v2003 = vpack.c.bf16 %v1490, %v1490
      %v2004 = vpack.c.bf16 %v1491, %v1491
      %v2005 = vpack.c.bf16 %v1492, %v1492
      %v2006 = vpack.c.bf16 %v1493, %v1493
      %v2007 = vpack.c.bf16 %v1494, %v1494
      %v2008 = vpack.c.bf16 %v1495, %v1495
      %v2009 = vpack.c.bf16 %v1496, %v1496
      %v2010 = vpack.c.bf16 %v1497, %v1497
      %v2011 = vpack.c.bf16 %v1498, %v1498
      %v2012 = vpack.c.bf16 %v1499, %v1499
      %v2013 = vpack.c.bf16 %v1500, %v1500
      %v2014 = vpack.c.bf16 %v1501, %v1501
      %v2015 = vpack.c.bf16 %v1502, %v1502
      %v2016 = vpack.c.bf16 %v1503, %v1503
      %v2017 = vpack.c.bf16 %v1504, %v1504
      %v2018 = vpack.c.bf16 %v1505, %v1505
      %v2019 = vpack.c.bf16 %v1506, %v1506
      %v2020 = vpack.c.bf16 %v1507, %v1507
      %v2021 = vpack.c.bf16 %v1508, %v1508
      %v2022 = vpack.c.bf16 %v1509, %v1509
      %v2023 = vpack.c.bf16 %v1510, %v1510
      %v2024 = vpack.c.bf16 %v1511, %v1511
      %v2025 = vpack.c.bf16 %v1512, %v1512
      %v2026 = vpack.c.bf16 %v1513, %v1513
      %v2027 = vpack.c.bf16 %v1514, %v1514
      %v2028 = vpack.c.bf16 %v1515, %v1515
      %v2029 = vpack.c.bf16 %v1516, %v1516
      %v2030 = vpack.c.bf16 %v1517, %v1517
      %v2031 = vpack.c.bf16 %v1518, %v1518
      %v2032 = vpack.c.bf16 %v1519, %v1519
      %v2033 = vpack.c.bf16 %v1520, %v1520
      %v2034 = vpack.c.bf16 %v1521, %v1521
      %v2035 = vpack.c.bf16 %v1522, %v1522
      %v2036 = vpack.c.bf16 %v1523, %v1523
      %v2037 = vpack.c.bf16 %v1524, %v1524
      %v2038 = vpack.c.bf16 %v1525, %v1525
      %v2039 = vpack.c.bf16 %v1526, %v1526
      %v2040 = vpack.c.bf16 %v1527, %v1527
      %v2041 = vpack.c.bf16 %v1528, %v1528
      %v2042 = vpack.c.bf16 %v1529, %v1529
      %v2043 = vpack.c.bf16 %v1530, %v1530
      %v2044 = vpack.c.bf16 %v1531, %v1531
      %v2045 = vpack.c.bf16 %v1532, %v1532
      %v2046 = vpack.c.bf16 %v1533, %v1533
      %v2047 = vpack.c.bf16 %v1534, %v1534
      %v2048 = vpack.c.bf16 %v1535, %v1535
      %v2049 = vpack.c.bf16 %v1536, %v1536
      %v2050 = vpack.c.bf16 %v1537, %v1537
      %v2051 = vpack.c.bf16 %v1538, %v1538
      %v2052 = vpack.c.bf16 %v1539, %v1539
      %v2053 = vpack.c.bf16 %v1540, %v1540
      %v2054 = vpack.c.bf16 %v1541, %v1541
      %v2055 = vpack.c.bf16 %v1542, %v1542
      %v2056 = vpack.c.bf16 %v1543, %v1543
      %v2057 = vpack.c.bf16 %v1544, %v1544
      %v2058 = vpack.c.bf16 %v1545, %v1545
      %v2059 = vpack.c.bf16 %v1546, %v1546
      %v2060 = vpack.c.bf16 %v1547, %v1547
      %v2061 = vpack.c.bf16 %v1548, %v1548
      %v2062 = vpack.c.bf16 %v1549, %v1549
      %v2063 = vpack.c.bf16 %v1550, %v1550
      %v2064 = vpack.c.bf16 %v1551, %v1551
      %v2065 = vpack.c.bf16 %v1552, %v1552
      %v2066 = vpack.c.bf16 %v1553, %v1553
      %v2067 = vpack.c.bf16 %v1554, %v1554
      %v2068 = vpack.c.bf16 %v1555, %v1555
      %v2069 = vpack.c.bf16 %v1556, %v1556
      %v2070 = vpack.c.bf16 %v1557, %v1557
      %v2071 = vpack.c.bf16 %v1558, %v1558
      %v2072 = vpack.c.bf16 %v1559, %v1559
      %v2073 = vpack.c.bf16 %v1560, %v1560
      %v2074 = vpack.c.bf16 %v1561, %v1561
      %v2075 = vpack.c.bf16 %v1562, %v1562
      %v2076 = vpack.c.bf16 %v1563, %v1563
      %v2077 = vpack.c.bf16 %v1564, %v1564
      %v2078 = vpack.c.bf16 %v1565, %v1565
      %v2079 = vpack.c.bf16 %v1566, %v1566
      %v2080 = vpack.c.bf16 %v1567, %v1567
      %v2081 = vpack.c.bf16 %v1568, %v1568
      %v2082 = vpack.c.bf16 %v1569, %v1569
      %v2083 = vpack.c.bf16 %v1570, %v1570
      %v2084 = vpack.c.bf16 %v1571, %v1571
      %v2085 = vpack.c.bf16 %v1572, %v1572
      %v2086 = vpack.c.bf16 %v1573, %v1573
      %v2087 = vpack.c.bf16 %v1574, %v1574
      %v2088 = vpack.c.bf16 %v1575, %v1575
      %v2089 = vpack.c.bf16 %v1576, %v1576
      %v2090 = vpack.c.bf16 %v1577, %v1577
      %v2091 = vpack.c.bf16 %v1578, %v1578
      %v2092 = vpack.c.bf16 %v1579, %v1579
      %v2093 = vpack.c.bf16 %v1580, %v1580
      %v2094 = vpack.c.bf16 %v1581, %v1581
      %v2095 = vpack.c.bf16 %v1582, %v1582
      %v2096 = vpack.c.bf16 %v1583, %v1583
      %v2097 = vpack.c.bf16 %v1584, %v1584
      %v2098 = vpack.c.bf16 %v1585, %v1585
      %v2099 = vpack.c.bf16 %v1586, %v1586
      %v2100 = vpack.c.bf16 %v1587, %v1587
      %v2101 = vpack.c.bf16 %v1588, %v1588
      %v2102 = vpack.c.bf16 %v1589, %v1589
      %v2103 = vpack.c.bf16 %v1590, %v1590
      %v2104 = vpack.c.bf16 %v1591, %v1591
      %v2105 = vpack.c.bf16 %v1592, %v1592
      %v2106 = vpack.c.bf16 %v1593, %v1593
      %v2107 = vpack.c.bf16 %v1594, %v1594
      %v2108 = vpack.c.bf16 %v1595, %v1595
      %v2109 = vpack.c.bf16 %v1596, %v1596
      %v2110 = vpack.c.bf16 %v1597, %v1597
      %v2111 = vpack.c.bf16 %v1598, %v1598
      %v2112 = vpack.c.bf16 %v1599, %v1599
      %v2113 = vpack.c.bf16 %v1600, %v1600
      %v2114 = vpack.c.bf16 %v1601, %v1601
      %v2115 = vpack.c.bf16 %v1602, %v1602
      %v2116 = vpack.c.bf16 %v1603, %v1603
      %v2117 = vpack.c.bf16 %v1604, %v1604
      %v2118 = vpack.c.bf16 %v1605, %v1605
      %v2119 = vpack.c.bf16 %v1606, %v1606
      %v2120 = vpack.c.bf16 %v1607, %v1607
      %v2121 = vpack.c.bf16 %v1608, %v1608
      %v2122 = vpack.c.bf16 %v1609, %v1609
      %v2123 = vpack.c.bf16 %v1610, %v1610
      %v2124 = vpack.c.bf16 %v1611, %v1611
      %v2125 = vpack.c.bf16 %v1612, %v1612
      %v2126 = vpack.c.bf16 %v1613, %v1613
      %v2127 = vpack.c.bf16 %v1614, %v1614
      %v2128 = vpack.c.bf16 %v1615, %v1615
      %v2129 = vpack.c.bf16 %v1616, %v1616
      %v2130 = vpack.c.bf16 %v1617, %v1617
      %v2131 = vpack.c.bf16 %v1618, %v1618
      %v2132 = vpack.c.bf16 %v1619, %v1619
      %v2133 = vpack.c.bf16 %v1620, %v1620
      %v2134 = vpack.c.bf16 %v1621, %v1621
      %v2135 = vpack.c.bf16 %v1622, %v1622
      %v2136 = vpack.c.bf16 %v1623, %v1623
      %v2137 = vpack.c.bf16 %v1624, %v1624
      %v2138 = vpack.c.bf16 %v1625, %v1625
      %v2139 = vpack.c.bf16 %v1626, %v1626
      %v2140 = vpack.c.bf16 %v1627, %v1627
      %v2141 = vpack.c.bf16 %v1628, %v1628
      %v2142 = vpack.c.bf16 %v1629, %v1629
      %v2143 = vpack.c.bf16 %v1630, %v1630
      %v2144 = vpack.c.bf16 %v1631, %v1631
      %v2145 = vpack.c.bf16 %v1632, %v1632
      %v2146 = vpack.c.bf16 %v1633, %v1633
      %v2147 = vpack.c.bf16 %v1634, %v1634
      %v2148 = vpack.c.bf16 %v1635, %v1635
      %v2149 = vpack.c.bf16 %v1636, %v1636
      %v2150 = vpack.c.bf16 %v1637, %v1637
      %v2151 = vpack.c.bf16 %v1638, %v1638
      %v2152 = vpack.c.bf16 %v1639, %v1639
      %v2153 = vpack.c.bf16 %v1640, %v1640
      %v2154 = vpack.c.bf16 %v1641, %v1641
      %v2155 = vpack.c.bf16 %v1642, %v1642
      %v2156 = vpack.c.bf16 %v1643, %v1643
      %v2157 = vpack.c.bf16 %v1644, %v1644
      %v2158 = vpack.c.bf16 %v1645, %v1645
      %v2159 = vpack.c.bf16 %v1646, %v1646
      %v2160 = vpack.c.bf16 %v1647, %v1647
      %v2161 = vpack.c.bf16 %v1648, %v1648
      %v2162 = vpack.c.bf16 %v1649, %v1649
      %v2163 = vpack.c.bf16 %v1650, %v1650
      %v2164 = vpack.c.bf16 %v1651, %v1651
      %v2165 = vpack.c.bf16 %v1652, %v1652
      %v2166 = vpack.c.bf16 %v1653, %v1653
      %v2167 = vpack.c.bf16 %v1654, %v1654
      %v2168 = vpack.c.bf16 %v1655, %v1655
      %v2169 = vpack.c.bf16 %v1656, %v1656
      %v2170 = vpack.c.bf16 %v1657, %v1657
      %v2171 = vpack.c.bf16 %v1658, %v1658
      %v2172 = vpack.c.bf16 %v1659, %v1659
      %v2173 = vpack.c.bf16 %v1660, %v1660
      %v2174 = vpack.c.bf16 %v1661, %v1661
      %v2175 = vpack.c.bf16 %v1662, %v1662
      %v2176 = vpack.c.bf16 %v1663, %v1663
      %v2177 = vpack.c.bf16 %v1664, %v1664
      %v2178 = vpack.c.bf16 %v1665, %v1665
      %v2179 = vpack.c.bf16 %v1666, %v1666
      %v2180 = vpack.c.bf16 %v1667, %v1667
      %v2181 = vpack.c.bf16 %v1668, %v1668
      %v2182 = vpack.c.bf16 %v1669, %v1669
      %v2183 = vpack.c.bf16 %v1670, %v1670
      %v2184 = vpack.c.bf16 %v1671, %v1671
      %v2185 = vpack.c.bf16 %v1672, %v1672
      %v2186 = vpack.c.bf16 %v1673, %v1673
      %v2187 = vpack.c.bf16 %v1674, %v1674
      %v2188 = vpack.c.bf16 %v1675, %v1675
      %v2189 = vpack.c.bf16 %v1676, %v1676
      %v2190 = vpack.c.bf16 %v1677, %v1677
      %v2191 = vpack.c.bf16 %v1678, %v1678
      %v2192 = vpack.c.bf16 %v1679, %v1679
      %v2193 = vpack.c.bf16 %v1680, %v1680
      %v2194 = vpack.c.bf16 %v1681, %v1681
      %v2195 = vpack.c.bf16 %v1682, %v1682
      %v2196 = vpack.c.bf16 %v1683, %v1683
      %v2197 = vpack.c.bf16 %v1684, %v1684
      %v2198 = vpack.c.bf16 %v1685, %v1685
      %v2199 = vpack.c.bf16 %v1686, %v1686
      %v2200 = vpack.c.bf16 %v1687, %v1687
      %v2201 = vpack.c.bf16 %v1688, %v1688
      %v2202 = vpack.c.bf16 %v1689, %v1689
      %v2203 = vpack.c.bf16 %v1690, %v1690
      %v2204 = vpack.c.bf16 %v1691, %v1691
      %v2205 = vpack.c.bf16 %v1692, %v1692
      %v2206 = vpack.c.bf16 %v1693, %v1693
      %v2207 = vpack.c.bf16 %v1694, %v1694
      %v2208 = vpack.c.bf16 %v1695, %v1695
      %v2209 = vpack.c.bf16 %v1696, %v1696
      %v2210 = vpack.c.bf16 %v1697, %v1697
      %v2211 = vpack.c.bf16 %v1698, %v1698
      %v2212 = vpack.c.bf16 %v1699, %v1699
      %v2213 = vpack.c.bf16 %v1700, %v1700
      %v2214 = vpack.c.bf16 %v1701, %v1701
      %v2215 = vpack.c.bf16 %v1702, %v1702
      %v2216 = vpack.c.bf16 %v1703, %v1703
      %v2217 = vpack.c.bf16 %v1704, %v1704
      %v2218 = vpack.c.bf16 %v1705, %v1705
      %v2219 = vpack.c.bf16 %v1706, %v1706
      %v2220 = vpack.c.bf16 %v1707, %v1707
      %v2221 = vpack.c.bf16 %v1708, %v1708
      %v2222 = vpack.c.bf16 %v1709, %v1709
      %v2223 = vpack.c.bf16 %v1710, %v1710
      %v2224 = vpack.c.bf16 %v1711, %v1711
      %v2225 = vpack.c.bf16 %v1712, %v1712
      %v2226 = vpack.c.bf16 %v1713, %v1713
      %v2227 = vpack.c.bf16 %v1714, %v1714
      %v2228 = vpack.c.bf16 %v1715, %v1715
      %v2229 = vpack.c.bf16 %v1716, %v1716
      %v2230 = vld [vmem:[%s168] sm:$0xff]
      %v2231 = vld [vmem:[%s168 + $0x8] sm:$0xff]
      %v2232 = vld [vmem:[%s168 + $0x10] sm:$0xff]
      %v2233 = vld [vmem:[%s168 + $0x18] sm:$0xff]
      %v2234 = vld [vmem:[%s168 + $0x20] sm:$0xff]
      %v2235 = vld [vmem:[%s168 + $0x28] sm:$0xff]
      %v2236 = vld [vmem:[%s168 + $0x30] sm:$0xff]
      %v2237 = vld [vmem:[%s168 + $0x38] sm:$0xff]
      %v2238 = vld [vmem:[%s168 + $0x40] sm:$0xff]
      %v2239 = vld [vmem:[%s168 + $0x48] sm:$0xff]
      %v2240 = vld [vmem:[%s168 + $0x50] sm:$0xff]
      %v2241 = vld [vmem:[%s168 + $0x58] sm:$0xff]
      %v2242 = vld [vmem:[%s168 + $0x60] sm:$0xff]
      %v2243 = vld [vmem:[%s168 + $0x68] sm:$0xff]
      %v2244 = vld [vmem:[%s168 + $0x70] sm:$0xff]
      %v2245 = vld [vmem:[%s168 + $0x78] sm:$0xff]
      %v2246 = vld [vmem:[%s168 + $0x80] sm:$0xff]
      %v2247 = vld [vmem:[%s168 + $0x88] sm:$0xff]
      %v2248 = vld [vmem:[%s168 + $0x90] sm:$0xff]
      %v2249 = vld [vmem:[%s168 + $0x98] sm:$0xff]
      %v2250 = vld [vmem:[%s168 + $0xa0] sm:$0xff]
      %v2251 = vld [vmem:[%s168 + $0xa8] sm:$0xff]
      %v2252 = vld [vmem:[%s168 + $0xb0] sm:$0xff]
      %v2253 = vld [vmem:[%s168 + $0xb8] sm:$0xff]
      %v2254 = vld [vmem:[%s168 + $0xc0] sm:$0xff]
      %v2255 = vld [vmem:[%s168 + $0xc8] sm:$0xff]
      %v2256 = vld [vmem:[%s168 + $0xd0] sm:$0xff]
      %v2257 = vld [vmem:[%s168 + $0xd8] sm:$0xff]
      %v2258 = vld [vmem:[%s168 + $0xe0] sm:$0xff]
      %v2259 = vld [vmem:[%s168 + $0xe8] sm:$0xff]
      %v2260 = vld [vmem:[%s168 + $0xf0] sm:$0xff]
      %v2261 = vld [vmem:[%s168 + $0xf8] sm:$0xff]
      %v2262 = vld [vmem:[%s168 + $0x100] sm:$0xff]
      %v2263 = vld [vmem:[%s168 + $0x108] sm:$0xff]
      %v2264 = vld [vmem:[%s168 + $0x110] sm:$0xff]
      %v2265 = vld [vmem:[%s168 + $0x118] sm:$0xff]
      %v2266 = vld [vmem:[%s168 + $0x120] sm:$0xff]
      %v2267 = vld [vmem:[%s168 + $0x128] sm:$0xff]
      %v2268 = vld [vmem:[%s168 + $0x130] sm:$0xff]
      %v2269 = vld [vmem:[%s168 + $0x138] sm:$0xff]
      %v2270 = vld [vmem:[%s168 + $0x140] sm:$0xff]
      %v2271 = vld [vmem:[%s168 + $0x148] sm:$0xff]
      %v2272 = vld [vmem:[%s168 + $0x150] sm:$0xff]
      %v2273 = vld [vmem:[%s168 + $0x158] sm:$0xff]
      %v2274 = vld [vmem:[%s168 + $0x160] sm:$0xff]
      %v2275 = vld [vmem:[%s168 + $0x168] sm:$0xff]
      %v2276 = vld [vmem:[%s168 + $0x170] sm:$0xff]
      %v2277 = vld [vmem:[%s168 + $0x178] sm:$0xff]
      %v2278 = vld [vmem:[%s168 + $0x180] sm:$0xff]
      %v2279 = vld [vmem:[%s168 + $0x188] sm:$0xff]
      %v2280 = vld [vmem:[%s168 + $0x190] sm:$0xff]
      %v2281 = vld [vmem:[%s168 + $0x198] sm:$0xff]
      %v2282 = vld [vmem:[%s168 + $0x1a0] sm:$0xff]
      %v2283 = vld [vmem:[%s168 + $0x1a8] sm:$0xff]
      %v2284 = vld [vmem:[%s168 + $0x1b0] sm:$0xff]
      %v2285 = vld [vmem:[%s168 + $0x1b8] sm:$0xff]
      %v2286 = vld [vmem:[%s168 + $0x1c0] sm:$0xff]
      %v2290 = vunpack.c.l.b16 %v2230
      %v2291 = vunpack.c.h.b16 %v2230
      %v2292 = vunpack.c.l.b16 %v2231
      %v2293 = vunpack.c.h.b16 %v2231
      %v2294 = vunpack.c.l.b16 %v2232
      %v2295 = vunpack.c.h.b16 %v2232
      %v2296 = vpack.c.b16 %v2292, %v2290
      %v2297 = vpack.c.b16 %v2293, %v2291
      %v2298 = vpack.c.b16 %v2294, %v2294
      %v2299 = vpack.c.b16 %v2295, %v2295
      %v2329 = vunpack.c.l.b16 %v1717
      %v2330 = vunpack.c.l.b16 %v1718
      %v2331 = vunpack.c.l.b16 %v1719
      %v2332 = vunpack.c.l.b16 %v1720
      %v2333 = vunpack.c.l.b16 %v1721
      %v2334 = vunpack.c.l.b16 %v1722
      %v2335 = vunpack.c.l.b16 %v1723
      %v2336 = vunpack.c.l.b16 %v1724
      %v2337 = vunpack.c.l.b16 %v1725
      %v2338 = vunpack.c.l.b16 %v1726
      %v2339 = vunpack.c.l.b16 %v1727
      %v2340 = vunpack.c.l.b16 %v1728
      %v2341 = vunpack.c.l.b16 %v1729
      %v2342 = vunpack.c.l.b16 %v1730
      %v2343 = vunpack.c.l.b16 %v1731
      %v2344 = vunpack.c.l.b16 %v1732
      %v2345 = vunpack.c.l.b16 %v1733
      %v2346 = vunpack.c.l.b16 %v1734
      %v2347 = vunpack.c.l.b16 %v1735
      %v2348 = vunpack.c.l.b16 %v1736
      %v2349 = vunpack.c.l.b16 %v1737
      %v2350 = vunpack.c.l.b16 %v1738
      %v2351 = vunpack.c.l.b16 %v1739
      %v2352 = vunpack.c.l.b16 %v1740
      %v2353 = vunpack.c.l.b16 %v1741
      %v2354 = vunpack.c.l.b16 %v1742
      %v2355 = vunpack.c.l.b16 %v1743
      %v2356 = vpack.c.b16 %v2330, %v2329
      %v2357 = vpack.c.b16 %v2332, %v2331
      %v2358 = vpack.c.b16 %v2334, %v2333
      %v2359 = vpack.c.b16 %v2336, %v2335
      %v2360 = vpack.c.b16 %v2338, %v2337
      %v2361 = vpack.c.b16 %v2340, %v2339
      %v2362 = vpack.c.b16 %v2342, %v2341
      %v2363 = vpack.c.b16 %v2344, %v2343
      %v2364 = vpack.c.b16 %v2346, %v2345
      %v2365 = vpack.c.b16 %v2348, %v2347
      %v2366 = vpack.c.b16 %v2350, %v2349
      %v2367 = vpack.c.b16 %v2352, %v2351
      %v2368 = vpack.c.b16 %v2354, %v2353
      %v2369 = vpack.c.b16 %v2355, %v2355
      %vm2383 = vcmask 719872
      %v2385 = vsel %vm2383, %v2297, 0
      %v2388 = vsel %vm2383, %v2299, 0
      %vm2390 = vcmask 1043456
      %v2392 = vsel %vm2390, %v2369, 0
      %2394 = vmatpush.bf16.msra.mxu0 %v2363
      %2395 = vmatpush.bf16.msra.mxu0 %v2362
      %2396 = vmatpush.bf16.msra.mxu0 %v2361
      %2397 = vmatpush.bf16.msra.mxu0 %v2360
      %2398 = vmatpush.bf16.msra.mxu0 %v2359
      %2399 = vmatpush.bf16.msra.mxu0 %v2358
      %2400 = vmatpush.bf16.msra.mxu0 %v2357
      %2401 = vmatpush.bf16.msra.mxu0 %v2356
      %2402 = vmatmul.bf16.gmra.mxu0 %v2296
      %v2403 = vpop.f32.mrf.mxu0
      %v2404 = vadd.f32 0.0, %v2403
      %v2405 = vpop.f32.mrf.mxu0
      %v2406 = vadd.f32 0.0, %v2405
      %2407 = vmatmul.bf16.gmra.mxu0 %v2298
      %v2408 = vpop.f32.mrf.mxu0
      %v2409 = vadd.f32 0.0, %v2408
      %v2410 = vpop.f32.mrf.mxu0
      %2411 = vdwg.mxu0
      %2412 = vmatpush.bf16.msra.mxu0 0
      %2413 = vmatpush.bf16.msra.mxu0 0
      %2414 = vmatpush.bf16.msra.mxu0 %v2392
      %2415 = vmatpush.bf16.msra.mxu0 %v2368
      %2416 = vmatpush.bf16.msra.mxu0 %v2367
      %2417 = vmatpush.bf16.msra.mxu0 %v2366
      %2418 = vmatpush.bf16.msra.mxu0 %v2365
      %2419 = vmatpush.bf16.msra.mxu0 %v2364
      %2420 = vmatmul.bf16.gmra.mxu0 %v2385
      %v2421 = vpop.f32.mrf.mxu0
      %v2422 = vadd.f32 %v2404, %v2421
      %v2423 = vpop.f32.mrf.mxu0
      %v2424 = vadd.f32 %v2406, %v2423
      %2425 = vmatmul.bf16.gmra.mxu0 %v2388
      %v2426 = vpop.f32.mrf.mxu0
      %v2427 = vadd.f32 %v2409, %v2426
      %v2428 = vpop.f32.mrf.mxu0
      %2429 = vdwg.mxu0
      %v2433 = vunpack.c.l.b16 %v2233
      %v2434 = vunpack.c.h.b16 %v2233
      %v2435 = vunpack.c.l.b16 %v2234
      %v2436 = vunpack.c.h.b16 %v2234
      %v2437 = vunpack.c.l.b16 %v2235
      %v2438 = vunpack.c.h.b16 %v2235
      %v2439 = vpack.c.b16 %v2435, %v2433
      %v2440 = vpack.c.b16 %v2436, %v2434
      %v2441 = vpack.c.b16 %v2437, %v2437
      %v2442 = vpack.c.b16 %v2438, %v2438
      %v2472 = vunpack.c.l.b16 %v1744
      %v2473 = vunpack.c.l.b16 %v1745
      %v2474 = vunpack.c.l.b16 %v1746
      %v2475 = vunpack.c.l.b16 %v1747
      %v2476 = vunpack.c.l.b16 %v1748
      %v2477 = vunpack.c.l.b16 %v1749
      %v2478 = vunpack.c.l.b16 %v1750
      %v2479 = vunpack.c.l.b16 %v1751
      %v2480 = vunpack.c.l.b16 %v1752
      %v2481 = vunpack.c.l.b16 %v1753
      %v2482 = vunpack.c.l.b16 %v1754
      %v2483 = vunpack.c.l.b16 %v1755
      %v2484 = vunpack.c.l.b16 %v1756
      %v2485 = vunpack.c.l.b16 %v1757
      %v2486 = vunpack.c.l.b16 %v1758
      %v2487 = vunpack.c.l.b16 %v1759
      %v2488 = vunpack.c.l.b16 %v1760
      %v2489 = vunpack.c.l.b16 %v1761
      %v2490 = vunpack.c.l.b16 %v1762
      %v2491 = vunpack.c.l.b16 %v1763
      %v2492 = vunpack.c.l.b16 %v1764
      %v2493 = vunpack.c.l.b16 %v1765
      %v2494 = vunpack.c.l.b16 %v1766
      %v2495 = vunpack.c.l.b16 %v1767
      %v2496 = vunpack.c.l.b16 %v1768
      %v2497 = vunpack.c.l.b16 %v1769
      %v2498 = vunpack.c.l.b16 %v1770
      %v2499 = vpack.c.b16 %v2473, %v2472
      %v2500 = vpack.c.b16 %v2475, %v2474
      %v2501 = vpack.c.b16 %v2477, %v2476
      %v2502 = vpack.c.b16 %v2479, %v2478
      %v2503 = vpack.c.b16 %v2481, %v2480
      %v2504 = vpack.c.b16 %v2483, %v2482
      %v2505 = vpack.c.b16 %v2485, %v2484
      %v2506 = vpack.c.b16 %v2487, %v2486
      %v2507 = vpack.c.b16 %v2489, %v2488
      %v2508 = vpack.c.b16 %v2491, %v2490
      %v2509 = vpack.c.b16 %v2493, %v2492
      %v2510 = vpack.c.b16 %v2495, %v2494
      %v2511 = vpack.c.b16 %v2497, %v2496
      %v2512 = vpack.c.b16 %v2498, %v2498
      %v2527 = vsel %vm2383, %v2440, 0
      %v2530 = vsel %vm2383, %v2442, 0
      %v2533 = vsel %vm2390, %v2512, 0
      %2535 = vmatpush.bf16.msra.mxu0 %v2506
      %2536 = vmatpush.bf16.msra.mxu0 %v2505
      %2537 = vmatpush.bf16.msra.mxu0 %v2504
      %2538 = vmatpush.bf16.msra.mxu0 %v2503
      %2539 = vmatpush.bf16.msra.mxu0 %v2502
      %2540 = vmatpush.bf16.msra.mxu0 %v2501
      %2541 = vmatpush.bf16.msra.mxu0 %v2500
      %2542 = vmatpush.bf16.msra.mxu0 %v2499
      %2543 = vmatmul.bf16.gmra.mxu0 %v2439
      %v2544 = vpop.f32.mrf.mxu0
      %v2545 = vadd.f32 0.0, %v2544
      %v2546 = vpop.f32.mrf.mxu0
      %v2547 = vadd.f32 0.0, %v2546
      %2548 = vmatmul.bf16.gmra.mxu0 %v2441
      %v2549 = vpop.f32.mrf.mxu0
      %v2550 = vadd.f32 0.0, %v2549
      %v2551 = vpop.f32.mrf.mxu0
      %2552 = vdwg.mxu0
      %2553 = vmatpush.bf16.msra.mxu0 0
      %2554 = vmatpush.bf16.msra.mxu0 0
      %2555 = vmatpush.bf16.msra.mxu0 %v2533
      %2556 = vmatpush.bf16.msra.mxu0 %v2511
      %2557 = vmatpush.bf16.msra.mxu0 %v2510
      %2558 = vmatpush.bf16.msra.mxu0 %v2509
      %2559 = vmatpush.bf16.msra.mxu0 %v2508
      %2560 = vmatpush.bf16.msra.mxu0 %v2507
      %2561 = vmatmul.bf16.gmra.mxu0 %v2527
      %v2562 = vpop.f32.mrf.mxu0
      %v2563 = vadd.f32 %v2545, %v2562
      %v2564 = vpop.f32.mrf.mxu0
      %v2565 = vadd.f32 %v2547, %v2564
      %2566 = vmatmul.bf16.gmra.mxu0 %v2530
      %v2567 = vpop.f32.mrf.mxu0
      %v2568 = vadd.f32 %v2550, %v2567
      %v2569 = vpop.f32.mrf.mxu0
      %2570 = vdwg.mxu0
      %v2574 = vunpack.c.l.b16 %v2236
      %v2575 = vunpack.c.h.b16 %v2236
      %v2576 = vunpack.c.l.b16 %v2237
      %v2577 = vunpack.c.h.b16 %v2237
      %v2578 = vunpack.c.l.b16 %v2238
      %v2579 = vunpack.c.h.b16 %v2238
      %v2580 = vpack.c.b16 %v2576, %v2574
      %v2581 = vpack.c.b16 %v2577, %v2575
      %v2582 = vpack.c.b16 %v2578, %v2578
      %v2583 = vpack.c.b16 %v2579, %v2579
      %v2613 = vunpack.c.l.b16 %v1771
      %v2614 = vunpack.c.l.b16 %v1772
      %v2615 = vunpack.c.l.b16 %v1773
      %v2616 = vunpack.c.l.b16 %v1774
      %v2617 = vunpack.c.l.b16 %v1775
      %v2618 = vunpack.c.l.b16 %v1776
      %v2619 = vunpack.c.l.b16 %v1777
      %v2620 = vunpack.c.l.b16 %v1778
      %v2621 = vunpack.c.l.b16 %v1779
      %v2622 = vunpack.c.l.b16 %v1780
      %v2623 = vunpack.c.l.b16 %v1781
      %v2624 = vunpack.c.l.b16 %v1782
      %v2625 = vunpack.c.l.b16 %v1783
      %v2626 = vunpack.c.l.b16 %v1784
      %v2627 = vunpack.c.l.b16 %v1785
      %v2628 = vunpack.c.l.b16 %v1786
      %v2629 = vunpack.c.l.b16 %v1787
      %v2630 = vunpack.c.l.b16 %v1788
      %v2631 = vunpack.c.l.b16 %v1789
      %v2632 = vunpack.c.l.b16 %v1790
      %v2633 = vunpack.c.l.b16 %v1791
      %v2634 = vunpack.c.l.b16 %v1792
      %v2635 = vunpack.c.l.b16 %v1793
      %v2636 = vunpack.c.l.b16 %v1794
      %v2637 = vunpack.c.l.b16 %v1795
      %v2638 = vunpack.c.l.b16 %v1796
      %v2639 = vunpack.c.l.b16 %v1797
      %v2640 = vpack.c.b16 %v2614, %v2613
      %v2641 = vpack.c.b16 %v2616, %v2615
      %v2642 = vpack.c.b16 %v2618, %v2617
      %v2643 = vpack.c.b16 %v2620, %v2619
      %v2644 = vpack.c.b16 %v2622, %v2621
      %v2645 = vpack.c.b16 %v2624, %v2623
      %v2646 = vpack.c.b16 %v2626, %v2625
      %v2647 = vpack.c.b16 %v2628, %v2627
      %v2648 = vpack.c.b16 %v2630, %v2629
      %v2649 = vpack.c.b16 %v2632, %v2631
      %v2650 = vpack.c.b16 %v2634, %v2633
      %v2651 = vpack.c.b16 %v2636, %v2635
      %v2652 = vpack.c.b16 %v2638, %v2637
      %v2653 = vpack.c.b16 %v2639, %v2639
      %v2668 = vsel %vm2383, %v2581, 0
      %v2671 = vsel %vm2383, %v2583, 0
      %v2674 = vsel %vm2390, %v2653, 0
      %2676 = vmatpush.bf16.msra.mxu0 %v2647
      %2677 = vmatpush.bf16.msra.mxu0 %v2646
      %2678 = vmatpush.bf16.msra.mxu0 %v2645
      %2679 = vmatpush.bf16.msra.mxu0 %v2644
      %2680 = vmatpush.bf16.msra.mxu0 %v2643
      %2681 = vmatpush.bf16.msra.mxu0 %v2642
      %2682 = vmatpush.bf16.msra.mxu0 %v2641
      %2683 = vmatpush.bf16.msra.mxu0 %v2640
      %2684 = vmatmul.bf16.gmra.mxu0 %v2580
      %v2685 = vpop.f32.mrf.mxu0
      %v2686 = vadd.f32 0.0, %v2685
      %v2687 = vpop.f32.mrf.mxu0
      %v2688 = vadd.f32 0.0, %v2687
      %2689 = vmatmul.bf16.gmra.mxu0 %v2582
      %v2690 = vpop.f32.mrf.mxu0
      %v2691 = vadd.f32 0.0, %v2690
      %v2692 = vpop.f32.mrf.mxu0
      %2693 = vdwg.mxu0
      %2694 = vmatpush.bf16.msra.mxu0 0
      %2695 = vmatpush.bf16.msra.mxu0 0
      %2696 = vmatpush.bf16.msra.mxu0 %v2674
      %2697 = vmatpush.bf16.msra.mxu0 %v2652
      %2698 = vmatpush.bf16.msra.mxu0 %v2651
      %2699 = vmatpush.bf16.msra.mxu0 %v2650
      %2700 = vmatpush.bf16.msra.mxu0 %v2649
      %2701 = vmatpush.bf16.msra.mxu0 %v2648
      %2702 = vmatmul.bf16.gmra.mxu0 %v2668
      %v2703 = vpop.f32.mrf.mxu0
      %v2704 = vadd.f32 %v2686, %v2703
      %v2705 = vpop.f32.mrf.mxu0
      %v2706 = vadd.f32 %v2688, %v2705
      %2707 = vmatmul.bf16.gmra.mxu0 %v2671
      %v2708 = vpop.f32.mrf.mxu0
      %v2709 = vadd.f32 %v2691, %v2708
      %v2710 = vpop.f32.mrf.mxu0
      %2711 = vdwg.mxu0
      %v2715 = vunpack.c.l.b16 %v2239
      %v2716 = vunpack.c.h.b16 %v2239
      %v2717 = vunpack.c.l.b16 %v2240
      %v2718 = vunpack.c.h.b16 %v2240
      %v2719 = vunpack.c.l.b16 %v2241
      %v2720 = vunpack.c.h.b16 %v2241
      %v2721 = vpack.c.b16 %v2717, %v2715
      %v2722 = vpack.c.b16 %v2718, %v2716
      %v2723 = vpack.c.b16 %v2719, %v2719
      %v2724 = vpack.c.b16 %v2720, %v2720
      %v2754 = vunpack.c.l.b16 %v1798
      %v2755 = vunpack.c.l.b16 %v1799
      %v2756 = vunpack.c.l.b16 %v1800
      %v2757 = vunpack.c.l.b16 %v1801
      %v2758 = vunpack.c.l.b16 %v1802
      %v2759 = vunpack.c.l.b16 %v1803
      %v2760 = vunpack.c.l.b16 %v1804
      %v2761 = vunpack.c.l.b16 %v1805
      %v2762 = vunpack.c.l.b16 %v1806
      %v2763 = vunpack.c.l.b16 %v1807
      %v2764 = vunpack.c.l.b16 %v1808
      %v2765 = vunpack.c.l.b16 %v1809
      %v2766 = vunpack.c.l.b16 %v1810
      %v2767 = vunpack.c.l.b16 %v1811
      %v2768 = vunpack.c.l.b16 %v1812
      %v2769 = vunpack.c.l.b16 %v1813
      %v2770 = vunpack.c.l.b16 %v1814
      %v2771 = vunpack.c.l.b16 %v1815
      %v2772 = vunpack.c.l.b16 %v1816
      %v2773 = vunpack.c.l.b16 %v1817
      %v2774 = vunpack.c.l.b16 %v1818
      %v2775 = vunpack.c.l.b16 %v1819
      %v2776 = vunpack.c.l.b16 %v1820
      %v2777 = vunpack.c.l.b16 %v1821
      %v2778 = vunpack.c.l.b16 %v1822
      %v2779 = vunpack.c.l.b16 %v1823
      %v2780 = vunpack.c.l.b16 %v1824
      %v2781 = vpack.c.b16 %v2755, %v2754
      %v2782 = vpack.c.b16 %v2757, %v2756
      %v2783 = vpack.c.b16 %v2759, %v2758
      %v2784 = vpack.c.b16 %v2761, %v2760
      %v2785 = vpack.c.b16 %v2763, %v2762
      %v2786 = vpack.c.b16 %v2765, %v2764
      %v2787 = vpack.c.b16 %v2767, %v2766
      %v2788 = vpack.c.b16 %v2769, %v2768
      %v2789 = vpack.c.b16 %v2771, %v2770
      %v2790 = vpack.c.b16 %v2773, %v2772
      %v2791 = vpack.c.b16 %v2775, %v2774
      %v2792 = vpack.c.b16 %v2777, %v2776
      %v2793 = vpack.c.b16 %v2779, %v2778
      %v2794 = vpack.c.b16 %v2780, %v2780
      %v2809 = vsel %vm2383, %v2722, 0
      %v2812 = vsel %vm2383, %v2724, 0
      %v2815 = vsel %vm2390, %v2794, 0
      %2817 = vmatpush.bf16.msra.mxu0 %v2788
      %2818 = vmatpush.bf16.msra.mxu0 %v2787
      %2819 = vmatpush.bf16.msra.mxu0 %v2786
      %2820 = vmatpush.bf16.msra.mxu0 %v2785
      %2821 = vmatpush.bf16.msra.mxu0 %v2784
      %2822 = vmatpush.bf16.msra.mxu0 %v2783
      %2823 = vmatpush.bf16.msra.mxu0 %v2782
      %2824 = vmatpush.bf16.msra.mxu0 %v2781
      %2825 = vmatmul.bf16.gmra.mxu0 %v2721
      %v2826 = vpop.f32.mrf.mxu0
      %v2827 = vadd.f32 0.0, %v2826
      %v2828 = vpop.f32.mrf.mxu0
      %v2829 = vadd.f32 0.0, %v2828
      %2830 = vmatmul.bf16.gmra.mxu0 %v2723
      %v2831 = vpop.f32.mrf.mxu0
      %v2832 = vadd.f32 0.0, %v2831
      %v2833 = vpop.f32.mrf.mxu0
      %2834 = vdwg.mxu0
      %2835 = vmatpush.bf16.msra.mxu0 0
      %2836 = vmatpush.bf16.msra.mxu0 0
      %2837 = vmatpush.bf16.msra.mxu0 %v2815
      %2838 = vmatpush.bf16.msra.mxu0 %v2793
      %2839 = vmatpush.bf16.msra.mxu0 %v2792
      %2840 = vmatpush.bf16.msra.mxu0 %v2791
      %2841 = vmatpush.bf16.msra.mxu0 %v2790
      %2842 = vmatpush.bf16.msra.mxu0 %v2789
      %2843 = vmatmul.bf16.gmra.mxu0 %v2809
      %v2844 = vpop.f32.mrf.mxu0
      %v2845 = vadd.f32 %v2827, %v2844
      %v2846 = vpop.f32.mrf.mxu0
      %v2847 = vadd.f32 %v2829, %v2846
      %2848 = vmatmul.bf16.gmra.mxu0 %v2812
      %v2849 = vpop.f32.mrf.mxu0
      %v2850 = vadd.f32 %v2832, %v2849
      %v2851 = vpop.f32.mrf.mxu0
      %2852 = vdwg.mxu0
      %v2856 = vunpack.c.l.b16 %v2242
      %v2857 = vunpack.c.h.b16 %v2242
      %v2858 = vunpack.c.l.b16 %v2243
      %v2859 = vunpack.c.h.b16 %v2243
      %v2860 = vunpack.c.l.b16 %v2244
      %v2861 = vunpack.c.h.b16 %v2244
      %v2862 = vpack.c.b16 %v2858, %v2856
      %v2863 = vpack.c.b16 %v2859, %v2857
      %v2864 = vpack.c.b16 %v2860, %v2860
      %v2865 = vpack.c.b16 %v2861, %v2861
      %v2895 = vunpack.c.l.b16 %v1825
      %v2896 = vunpack.c.l.b16 %v1826
      %v2897 = vunpack.c.l.b16 %v1827
      %v2898 = vunpack.c.l.b16 %v1828
      %v2899 = vunpack.c.l.b16 %v1829
      %v2900 = vunpack.c.l.b16 %v1830
      %v2901 = vunpack.c.l.b16 %v1831
      %v2902 = vunpack.c.l.b16 %v1832
      %v2903 = vunpack.c.l.b16 %v1833
      %v2904 = vunpack.c.l.b16 %v1834
      %v2905 = vunpack.c.l.b16 %v1835
      %v2906 = vunpack.c.l.b16 %v1836
      %v2907 = vunpack.c.l.b16 %v1837
      %v2908 = vunpack.c.l.b16 %v1838
      %v2909 = vunpack.c.l.b16 %v1839
      %v2910 = vunpack.c.l.b16 %v1840
      %v2911 = vunpack.c.l.b16 %v1841
      %v2912 = vunpack.c.l.b16 %v1842
      %v2913 = vunpack.c.l.b16 %v1843
      %v2914 = vunpack.c.l.b16 %v1844
      %v2915 = vunpack.c.l.b16 %v1845
      %v2916 = vunpack.c.l.b16 %v1846
      %v2917 = vunpack.c.l.b16 %v1847
      %v2918 = vunpack.c.l.b16 %v1848
      %v2919 = vunpack.c.l.b16 %v1849
      %v2920 = vunpack.c.l.b16 %v1850
      %v2921 = vunpack.c.l.b16 %v1851
      %v2922 = vpack.c.b16 %v2896, %v2895
      %v2923 = vpack.c.b16 %v2898, %v2897
      %v2924 = vpack.c.b16 %v2900, %v2899
      %v2925 = vpack.c.b16 %v2902, %v2901
      %v2926 = vpack.c.b16 %v2904, %v2903
      %v2927 = vpack.c.b16 %v2906, %v2905
      %v2928 = vpack.c.b16 %v2908, %v2907
      %v2929 = vpack.c.b16 %v2910, %v2909
      %v2930 = vpack.c.b16 %v2912, %v2911
      %v2931 = vpack.c.b16 %v2914, %v2913
      %v2932 = vpack.c.b16 %v2916, %v2915
      %v2933 = vpack.c.b16 %v2918, %v2917
      %v2934 = vpack.c.b16 %v2920, %v2919
      %v2935 = vpack.c.b16 %v2921, %v2921
      %v2950 = vsel %vm2383, %v2863, 0
      %v2953 = vsel %vm2383, %v2865, 0
      %v2956 = vsel %vm2390, %v2935, 0
      %2958 = vmatpush.bf16.msra.mxu0 %v2929
      %2959 = vmatpush.bf16.msra.mxu0 %v2928
      %2960 = vmatpush.bf16.msra.mxu0 %v2927
      %2961 = vmatpush.bf16.msra.mxu0 %v2926
      %2962 = vmatpush.bf16.msra.mxu0 %v2925
      %2963 = vmatpush.bf16.msra.mxu0 %v2924
      %2964 = vmatpush.bf16.msra.mxu0 %v2923
      %2965 = vmatpush.bf16.msra.mxu0 %v2922
      %2966 = vmatmul.bf16.gmra.mxu0 %v2862
      %v2967 = vpop.f32.mrf.mxu0
      %v2968 = vadd.f32 0.0, %v2967
      %v2969 = vpop.f32.mrf.mxu0
      %v2970 = vadd.f32 0.0, %v2969
      %2971 = vmatmul.bf16.gmra.mxu0 %v2864
      %v2972 = vpop.f32.mrf.mxu0
      %v2973 = vadd.f32 0.0, %v2972
      %v2974 = vpop.f32.mrf.mxu0
      %2975 = vdwg.mxu0
      %2976 = vmatpush.bf16.msra.mxu0 0
      %2977 = vmatpush.bf16.msra.mxu0 0
      %2978 = vmatpush.bf16.msra.mxu0 %v2956
      %2979 = vmatpush.bf16.msra.mxu0 %v2934
      %2980 = vmatpush.bf16.msra.mxu0 %v2933
      %2981 = vmatpush.bf16.msra.mxu0 %v2932
      %2982 = vmatpush.bf16.msra.mxu0 %v2931
      %2983 = vmatpush.bf16.msra.mxu0 %v2930
      %2984 = vmatmul.bf16.gmra.mxu0 %v2950
      %v2985 = vpop.f32.mrf.mxu0
      %v2986 = vadd.f32 %v2968, %v2985
      %v2987 = vpop.f32.mrf.mxu0
      %v2988 = vadd.f32 %v2970, %v2987
      %2989 = vmatmul.bf16.gmra.mxu0 %v2953
      %v2990 = vpop.f32.mrf.mxu0
      %v2991 = vadd.f32 %v2973, %v2990
      %v2992 = vpop.f32.mrf.mxu0
      %2993 = vdwg.mxu0
      %v2997 = vunpack.c.l.b16 %v2245
      %v2998 = vunpack.c.h.b16 %v2245
      %v2999 = vunpack.c.l.b16 %v2246
      %v3000 = vunpack.c.h.b16 %v2246
      %v3001 = vunpack.c.l.b16 %v2247
      %v3002 = vunpack.c.h.b16 %v2247
      %v3003 = vpack.c.b16 %v2999, %v2997
      %v3004 = vpack.c.b16 %v3000, %v2998
      %v3005 = vpack.c.b16 %v3001, %v3001
      %v3006 = vpack.c.b16 %v3002, %v3002
      %v3036 = vunpack.c.l.b16 %v1852
      %v3037 = vunpack.c.l.b16 %v1853
      %v3038 = vunpack.c.l.b16 %v1854
      %v3039 = vunpack.c.l.b16 %v1855
      %v3040 = vunpack.c.l.b16 %v1856
      %v3041 = vunpack.c.l.b16 %v1857
      %v3042 = vunpack.c.l.b16 %v1858
      %v3043 = vunpack.c.l.b16 %v1859
      %v3044 = vunpack.c.l.b16 %v1860
      %v3045 = vunpack.c.l.b16 %v1861
      %v3046 = vunpack.c.l.b16 %v1862
      %v3047 = vunpack.c.l.b16 %v1863
      %v3048 = vunpack.c.l.b16 %v1864
      %v3049 = vunpack.c.l.b16 %v1865
      %v3050 = vunpack.c.l.b16 %v1866
      %v3051 = vunpack.c.l.b16 %v1867
      %v3052 = vunpack.c.l.b16 %v1868
      %v3053 = vunpack.c.l.b16 %v1869
      %v3054 = vunpack.c.l.b16 %v1870
      %v3055 = vunpack.c.l.b16 %v1871
      %v3056 = vunpack.c.l.b16 %v1872
      %v3057 = vunpack.c.l.b16 %v1873
      %v3058 = vunpack.c.l.b16 %v1874
      %v3059 = vunpack.c.l.b16 %v1875
      %v3060 = vunpack.c.l.b16 %v1876
      %v3061 = vunpack.c.l.b16 %v1877
      %v3062 = vunpack.c.l.b16 %v1878
      %v3063 = vpack.c.b16 %v3037, %v3036
      %v3064 = vpack.c.b16 %v3039, %v3038
      %v3065 = vpack.c.b16 %v3041, %v3040
      %v3066 = vpack.c.b16 %v3043, %v3042
      %v3067 = vpack.c.b16 %v3045, %v3044
      %v3068 = vpack.c.b16 %v3047, %v3046
      %v3069 = vpack.c.b16 %v3049, %v3048
      %v3070 = vpack.c.b16 %v3051, %v3050
      %v3071 = vpack.c.b16 %v3053, %v3052
      %v3072 = vpack.c.b16 %v3055, %v3054
      %v3073 = vpack.c.b16 %v3057, %v3056
      %v3074 = vpack.c.b16 %v3059, %v3058
      %v3075 = vpack.c.b16 %v3061, %v3060
      %v3076 = vpack.c.b16 %v3062, %v3062
      %v3091 = vsel %vm2383, %v3004, 0
      %v3094 = vsel %vm2383, %v3006, 0
      %v3097 = vsel %vm2390, %v3076, 0
      %3099 = vmatpush.bf16.msra.mxu0 %v3070
      %3100 = vmatpush.bf16.msra.mxu0 %v3069
      %3101 = vmatpush.bf16.msra.mxu0 %v3068
      %3102 = vmatpush.bf16.msra.mxu0 %v3067
      %3103 = vmatpush.bf16.msra.mxu0 %v3066
      %3104 = vmatpush.bf16.msra.mxu0 %v3065
      %3105 = vmatpush.bf16.msra.mxu0 %v3064
      %3106 = vmatpush.bf16.msra.mxu0 %v3063
      %3107 = vmatmul.bf16.gmra.mxu0 %v3003
      %v3108 = vpop.f32.mrf.mxu0
      %v3109 = vadd.f32 0.0, %v3108
      %v3110 = vpop.f32.mrf.mxu0
      %v3111 = vadd.f32 0.0, %v3110
      %3112 = vmatmul.bf16.gmra.mxu0 %v3005
      %v3113 = vpop.f32.mrf.mxu0
      %v3114 = vadd.f32 0.0, %v3113
      %v3115 = vpop.f32.mrf.mxu0
      %3116 = vdwg.mxu0
      %3117 = vmatpush.bf16.msra.mxu0 0
      %3118 = vmatpush.bf16.msra.mxu0 0
      %3119 = vmatpush.bf16.msra.mxu0 %v3097
      %3120 = vmatpush.bf16.msra.mxu0 %v3075
      %3121 = vmatpush.bf16.msra.mxu0 %v3074
      %3122 = vmatpush.bf16.msra.mxu0 %v3073
      %3123 = vmatpush.bf16.msra.mxu0 %v3072
      %3124 = vmatpush.bf16.msra.mxu0 %v3071
      %3125 = vmatmul.bf16.gmra.mxu0 %v3091
      %v3126 = vpop.f32.mrf.mxu0
      %v3127 = vadd.f32 %v3109, %v3126
      %v3128 = vpop.f32.mrf.mxu0
      %v3129 = vadd.f32 %v3111, %v3128
      %3130 = vmatmul.bf16.gmra.mxu0 %v3094
      %v3131 = vpop.f32.mrf.mxu0
      %v3132 = vadd.f32 %v3114, %v3131
      %v3133 = vpop.f32.mrf.mxu0
      %3134 = vdwg.mxu0
      %v3138 = vunpack.c.l.b16 %v2248
      %v3139 = vunpack.c.h.b16 %v2248
      %v3140 = vunpack.c.l.b16 %v2249
      %v3141 = vunpack.c.h.b16 %v2249
      %v3142 = vunpack.c.l.b16 %v2250
      %v3143 = vunpack.c.h.b16 %v2250
      %v3144 = vpack.c.b16 %v3140, %v3138
      %v3145 = vpack.c.b16 %v3141, %v3139
      %v3146 = vpack.c.b16 %v3142, %v3142
      %v3147 = vpack.c.b16 %v3143, %v3143
      %v3177 = vunpack.c.l.b16 %v1879
      %v3178 = vunpack.c.l.b16 %v1880
      %v3179 = vunpack.c.l.b16 %v1881
      %v3180 = vunpack.c.l.b16 %v1882
      %v3181 = vunpack.c.l.b16 %v1883
      %v3182 = vunpack.c.l.b16 %v1884
      %v3183 = vunpack.c.l.b16 %v1885
      %v3184 = vunpack.c.l.b16 %v1886
      %v3185 = vunpack.c.l.b16 %v1887
      %v3186 = vunpack.c.l.b16 %v1888
      %v3187 = vunpack.c.l.b16 %v1889
      %v3188 = vunpack.c.l.b16 %v1890
      %v3189 = vunpack.c.l.b16 %v1891
      %v3190 = vunpack.c.l.b16 %v1892
      %v3191 = vunpack.c.l.b16 %v1893
      %v3192 = vunpack.c.l.b16 %v1894
      %v3193 = vunpack.c.l.b16 %v1895
      %v3194 = vunpack.c.l.b16 %v1896
      %v3195 = vunpack.c.l.b16 %v1897
      %v3196 = vunpack.c.l.b16 %v1898
      %v3197 = vunpack.c.l.b16 %v1899
      %v3198 = vunpack.c.l.b16 %v1900
      %v3199 = vunpack.c.l.b16 %v1901
      %v3200 = vunpack.c.l.b16 %v1902
      %v3201 = vunpack.c.l.b16 %v1903
      %v3202 = vunpack.c.l.b16 %v1904
      %v3203 = vunpack.c.l.b16 %v1905
      %v3204 = vpack.c.b16 %v3178, %v3177
      %v3205 = vpack.c.b16 %v3180, %v3179
      %v3206 = vpack.c.b16 %v3182, %v3181
      %v3207 = vpack.c.b16 %v3184, %v3183
      %v3208 = vpack.c.b16 %v3186, %v3185
      %v3209 = vpack.c.b16 %v3188, %v3187
      %v3210 = vpack.c.b16 %v3190, %v3189
      %v3211 = vpack.c.b16 %v3192, %v3191
      %v3212 = vpack.c.b16 %v3194, %v3193
      %v3213 = vpack.c.b16 %v3196, %v3195
      %v3214 = vpack.c.b16 %v3198, %v3197
      %v3215 = vpack.c.b16 %v3200, %v3199
      %v3216 = vpack.c.b16 %v3202, %v3201
      %v3217 = vpack.c.b16 %v3203, %v3203
      %v3232 = vsel %vm2383, %v3145, 0
      %v3235 = vsel %vm2383, %v3147, 0
      %v3238 = vsel %vm2390, %v3217, 0
      %3240 = vmatpush.bf16.msra.mxu0 %v3211
      %3241 = vmatpush.bf16.msra.mxu0 %v3210
      %3242 = vmatpush.bf16.msra.mxu0 %v3209
      %3243 = vmatpush.bf16.msra.mxu0 %v3208
      %3244 = vmatpush.bf16.msra.mxu0 %v3207
      %3245 = vmatpush.bf16.msra.mxu0 %v3206
      %3246 = vmatpush.bf16.msra.mxu0 %v3205
      %3247 = vmatpush.bf16.msra.mxu0 %v3204
      %3248 = vmatmul.bf16.gmra.mxu0 %v3144
      %v3249 = vpop.f32.mrf.mxu0
      %v3250 = vadd.f32 0.0, %v3249
      %v3251 = vpop.f32.mrf.mxu0
      %v3252 = vadd.f32 0.0, %v3251
      %3253 = vmatmul.bf16.gmra.mxu0 %v3146
      %v3254 = vpop.f32.mrf.mxu0
      %v3255 = vadd.f32 0.0, %v3254
      %v3256 = vpop.f32.mrf.mxu0
      %3257 = vdwg.mxu0
      %3258 = vmatpush.bf16.msra.mxu0 0
      %3259 = vmatpush.bf16.msra.mxu0 0
      %3260 = vmatpush.bf16.msra.mxu0 %v3238
      %3261 = vmatpush.bf16.msra.mxu0 %v3216
      %3262 = vmatpush.bf16.msra.mxu0 %v3215
      %3263 = vmatpush.bf16.msra.mxu0 %v3214
      %3264 = vmatpush.bf16.msra.mxu0 %v3213
      %3265 = vmatpush.bf16.msra.mxu0 %v3212
      %3266 = vmatmul.bf16.gmra.mxu0 %v3232
      %v3267 = vpop.f32.mrf.mxu0
      %v3268 = vadd.f32 %v3250, %v3267
      %v3269 = vpop.f32.mrf.mxu0
      %v3270 = vadd.f32 %v3252, %v3269
      %3271 = vmatmul.bf16.gmra.mxu0 %v3235
      %v3272 = vpop.f32.mrf.mxu0
      %v3273 = vadd.f32 %v3255, %v3272
      %v3274 = vpop.f32.mrf.mxu0
      %3275 = vdwg.mxu0
      %v3279 = vunpack.c.l.b16 %v2251
      %v3280 = vunpack.c.h.b16 %v2251
      %v3281 = vunpack.c.l.b16 %v2252
      %v3282 = vunpack.c.h.b16 %v2252
      %v3283 = vunpack.c.l.b16 %v2253
      %v3284 = vunpack.c.h.b16 %v2253
      %v3285 = vpack.c.b16 %v3281, %v3279
      %v3286 = vpack.c.b16 %v3282, %v3280
      %v3287 = vpack.c.b16 %v3283, %v3283
      %v3288 = vpack.c.b16 %v3284, %v3284
      %v3318 = vunpack.c.l.b16 %v1906
      %v3319 = vunpack.c.l.b16 %v1907
      %v3320 = vunpack.c.l.b16 %v1908
      %v3321 = vunpack.c.l.b16 %v1909
      %v3322 = vunpack.c.l.b16 %v1910
      %v3323 = vunpack.c.l.b16 %v1911
      %v3324 = vunpack.c.l.b16 %v1912
      %v3325 = vunpack.c.l.b16 %v1913
      %v3326 = vunpack.c.l.b16 %v1914
      %v3327 = vunpack.c.l.b16 %v1915
      %v3328 = vunpack.c.l.b16 %v1916
      %v3329 = vunpack.c.l.b16 %v1917
      %v3330 = vunpack.c.l.b16 %v1918
      %v3331 = vunpack.c.l.b16 %v1919
      %v3332 = vunpack.c.l.b16 %v1920
      %v3333 = vunpack.c.l.b16 %v1921
      %v3334 = vunpack.c.l.b16 %v1922
      %v3335 = vunpack.c.l.b16 %v1923
      %v3336 = vunpack.c.l.b16 %v1924
      %v3337 = vunpack.c.l.b16 %v1925
      %v3338 = vunpack.c.l.b16 %v1926
      %v3339 = vunpack.c.l.b16 %v1927
      %v3340 = vunpack.c.l.b16 %v1928
      %v3341 = vunpack.c.l.b16 %v1929
      %v3342 = vunpack.c.l.b16 %v1930
      %v3343 = vunpack.c.l.b16 %v1931
      %v3344 = vunpack.c.l.b16 %v1932
      %v3345 = vpack.c.b16 %v3319, %v3318
      %v3346 = vpack.c.b16 %v3321, %v3320
      %v3347 = vpack.c.b16 %v3323, %v3322
      %v3348 = vpack.c.b16 %v3325, %v3324
      %v3349 = vpack.c.b16 %v3327, %v3326
      %v3350 = vpack.c.b16 %v3329, %v3328
      %v3351 = vpack.c.b16 %v3331, %v3330
      %v3352 = vpack.c.b16 %v3333, %v3332
      %v3353 = vpack.c.b16 %v3335, %v3334
      %v3354 = vpack.c.b16 %v3337, %v3336
      %v3355 = vpack.c.b16 %v3339, %v3338
      %v3356 = vpack.c.b16 %v3341, %v3340
      %v3357 = vpack.c.b16 %v3343, %v3342
      %v3358 = vpack.c.b16 %v3344, %v3344
      %v3373 = vsel %vm2383, %v3286, 0
      %v3376 = vsel %vm2383, %v3288, 0
      %v3379 = vsel %vm2390, %v3358, 0
      %3381 = vmatpush.bf16.msra.mxu0 %v3352
      %3382 = vmatpush.bf16.msra.mxu0 %v3351
      %3383 = vmatpush.bf16.msra.mxu0 %v3350
      %3384 = vmatpush.bf16.msra.mxu0 %v3349
      %3385 = vmatpush.bf16.msra.mxu0 %v3348
      %3386 = vmatpush.bf16.msra.mxu0 %v3347
      %3387 = vmatpush.bf16.msra.mxu0 %v3346
      %3388 = vmatpush.bf16.msra.mxu0 %v3345
      %3389 = vmatmul.bf16.gmra.mxu0 %v3285
      %v3390 = vpop.f32.mrf.mxu0
      %v3391 = vadd.f32 0.0, %v3390
      %v3392 = vpop.f32.mrf.mxu0
      %v3393 = vadd.f32 0.0, %v3392
      %3394 = vmatmul.bf16.gmra.mxu0 %v3287
      %v3395 = vpop.f32.mrf.mxu0
      %v3396 = vadd.f32 0.0, %v3395
      %v3397 = vpop.f32.mrf.mxu0
      %3398 = vdwg.mxu0
      %3399 = vmatpush.bf16.msra.mxu0 0
      %3400 = vmatpush.bf16.msra.mxu0 0
      %3401 = vmatpush.bf16.msra.mxu0 %v3379
      %3402 = vmatpush.bf16.msra.mxu0 %v3357
      %3403 = vmatpush.bf16.msra.mxu0 %v3356
      %3404 = vmatpush.bf16.msra.mxu0 %v3355
      %3405 = vmatpush.bf16.msra.mxu0 %v3354
      %3406 = vmatpush.bf16.msra.mxu0 %v3353
      %3407 = vmatmul.bf16.gmra.mxu0 %v3373
      %v3408 = vpop.f32.mrf.mxu0
      %v3409 = vadd.f32 %v3391, %v3408
      %v3410 = vpop.f32.mrf.mxu0
      %v3411 = vadd.f32 %v3393, %v3410
      %3412 = vmatmul.bf16.gmra.mxu0 %v3376
      %v3413 = vpop.f32.mrf.mxu0
      %v3414 = vadd.f32 %v3396, %v3413
      %v3415 = vpop.f32.mrf.mxu0
      %3416 = vdwg.mxu0
      %v3420 = vunpack.c.l.b16 %v2254
      %v3421 = vunpack.c.h.b16 %v2254
      %v3422 = vunpack.c.l.b16 %v2255
      %v3423 = vunpack.c.h.b16 %v2255
      %v3424 = vunpack.c.l.b16 %v2256
      %v3425 = vunpack.c.h.b16 %v2256
      %v3426 = vpack.c.b16 %v3422, %v3420
      %v3427 = vpack.c.b16 %v3423, %v3421
      %v3428 = vpack.c.b16 %v3424, %v3424
      %v3429 = vpack.c.b16 %v3425, %v3425
      %v3459 = vunpack.c.l.b16 %v1933
      %v3460 = vunpack.c.l.b16 %v1934
      %v3461 = vunpack.c.l.b16 %v1935
      %v3462 = vunpack.c.l.b16 %v1936
      %v3463 = vunpack.c.l.b16 %v1937
      %v3464 = vunpack.c.l.b16 %v1938
      %v3465 = vunpack.c.l.b16 %v1939
      %v3466 = vunpack.c.l.b16 %v1940
      %v3467 = vunpack.c.l.b16 %v1941
      %v3468 = vunpack.c.l.b16 %v1942
      %v3469 = vunpack.c.l.b16 %v1943
      %v3470 = vunpack.c.l.b16 %v1944
      %v3471 = vunpack.c.l.b16 %v1945
      %v3472 = vunpack.c.l.b16 %v1946
      %v3473 = vunpack.c.l.b16 %v1947
      %v3474 = vunpack.c.l.b16 %v1948
      %v3475 = vunpack.c.l.b16 %v1949
      %v3476 = vunpack.c.l.b16 %v1950
      %v3477 = vunpack.c.l.b16 %v1951
      %v3478 = vunpack.c.l.b16 %v1952
      %v3479 = vunpack.c.l.b16 %v1953
      %v3480 = vunpack.c.l.b16 %v1954
      %v3481 = vunpack.c.l.b16 %v1955
      %v3482 = vunpack.c.l.b16 %v1956
      %v3483 = vunpack.c.l.b16 %v1957
      %v3484 = vunpack.c.l.b16 %v1958
      %v3485 = vunpack.c.l.b16 %v1959
      %v3486 = vpack.c.b16 %v3460, %v3459
      %v3487 = vpack.c.b16 %v3462, %v3461
      %v3488 = vpack.c.b16 %v3464, %v3463
      %v3489 = vpack.c.b16 %v3466, %v3465
      %v3490 = vpack.c.b16 %v3468, %v3467
      %v3491 = vpack.c.b16 %v3470, %v3469
      %v3492 = vpack.c.b16 %v3472, %v3471
      %v3493 = vpack.c.b16 %v3474, %v3473
      %v3494 = vpack.c.b16 %v3476, %v3475
      %v3495 = vpack.c.b16 %v3478, %v3477
      %v3496 = vpack.c.b16 %v3480, %v3479
      %v3497 = vpack.c.b16 %v3482, %v3481
      %v3498 = vpack.c.b16 %v3484, %v3483
      %v3499 = vpack.c.b16 %v3485, %v3485
      %v3514 = vsel %vm2383, %v3427, 0
      %v3517 = vsel %vm2383, %v3429, 0
      %v3520 = vsel %vm2390, %v3499, 0
      %3522 = vmatpush.bf16.msra.mxu0 %v3493
      %3523 = vmatpush.bf16.msra.mxu0 %v3492
      %3524 = vmatpush.bf16.msra.mxu0 %v3491
      %3525 = vmatpush.bf16.msra.mxu0 %v3490
      %3526 = vmatpush.bf16.msra.mxu0 %v3489
      %3527 = vmatpush.bf16.msra.mxu0 %v3488
      %3528 = vmatpush.bf16.msra.mxu0 %v3487
      %3529 = vmatpush.bf16.msra.mxu0 %v3486
      %3530 = vmatmul.bf16.gmra.mxu0 %v3426
      %v3531 = vpop.f32.mrf.mxu0
      %v3532 = vadd.f32 0.0, %v3531
      %v3533 = vpop.f32.mrf.mxu0
      %v3534 = vadd.f32 0.0, %v3533
      %3535 = vmatmul.bf16.gmra.mxu0 %v3428
      %v3536 = vpop.f32.mrf.mxu0
      %v3537 = vadd.f32 0.0, %v3536
      %v3538 = vpop.f32.mrf.mxu0
      %3539 = vdwg.mxu0
      %3540 = vmatpush.bf16.msra.mxu0 0
      %3541 = vmatpush.bf16.msra.mxu0 0
      %3542 = vmatpush.bf16.msra.mxu0 %v3520
      %3543 = vmatpush.bf16.msra.mxu0 %v3498
      %3544 = vmatpush.bf16.msra.mxu0 %v3497
      %3545 = vmatpush.bf16.msra.mxu0 %v3496
      %3546 = vmatpush.bf16.msra.mxu0 %v3495
      %3547 = vmatpush.bf16.msra.mxu0 %v3494
      %3548 = vmatmul.bf16.gmra.mxu0 %v3514
      %v3549 = vpop.f32.mrf.mxu0
      %v3550 = vadd.f32 %v3532, %v3549
      %v3551 = vpop.f32.mrf.mxu0
      %v3552 = vadd.f32 %v3534, %v3551
      %3553 = vmatmul.bf16.gmra.mxu0 %v3517
      %v3554 = vpop.f32.mrf.mxu0
      %v3555 = vadd.f32 %v3537, %v3554
      %v3556 = vpop.f32.mrf.mxu0
      %3557 = vdwg.mxu0
      %v3561 = vunpack.c.l.b16 %v2257
      %v3562 = vunpack.c.h.b16 %v2257
      %v3563 = vunpack.c.l.b16 %v2258
      %v3564 = vunpack.c.h.b16 %v2258
      %v3565 = vunpack.c.l.b16 %v2259
      %v3566 = vunpack.c.h.b16 %v2259
      %v3567 = vpack.c.b16 %v3563, %v3561
      %v3568 = vpack.c.b16 %v3564, %v3562
      %v3569 = vpack.c.b16 %v3565, %v3565
      %v3570 = vpack.c.b16 %v3566, %v3566
      %v3600 = vunpack.c.l.b16 %v1960
      %v3601 = vunpack.c.l.b16 %v1961
      %v3602 = vunpack.c.l.b16 %v1962
      %v3603 = vunpack.c.l.b16 %v1963
      %v3604 = vunpack.c.l.b16 %v1964
      %v3605 = vunpack.c.l.b16 %v1965
      %v3606 = vunpack.c.l.b16 %v1966
      %v3607 = vunpack.c.l.b16 %v1967
      %v3608 = vunpack.c.l.b16 %v1968
      %v3609 = vunpack.c.l.b16 %v1969
      %v3610 = vunpack.c.l.b16 %v1970
      %v3611 = vunpack.c.l.b16 %v1971
      %v3612 = vunpack.c.l.b16 %v1972
      %v3613 = vunpack.c.l.b16 %v1973
      %v3614 = vunpack.c.l.b16 %v1974
      %v3615 = vunpack.c.l.b16 %v1975
      %v3616 = vunpack.c.l.b16 %v1976
      %v3617 = vunpack.c.l.b16 %v1977
      %v3618 = vunpack.c.l.b16 %v1978
      %v3619 = vunpack.c.l.b16 %v1979
      %v3620 = vunpack.c.l.b16 %v1980
      %v3621 = vunpack.c.l.b16 %v1981
      %v3622 = vunpack.c.l.b16 %v1982
      %v3623 = vunpack.c.l.b16 %v1983
      %v3624 = vunpack.c.l.b16 %v1984
      %v3625 = vunpack.c.l.b16 %v1985
      %v3626 = vunpack.c.l.b16 %v1986
      %v3627 = vpack.c.b16 %v3601, %v3600
      %v3628 = vpack.c.b16 %v3603, %v3602
      %v3629 = vpack.c.b16 %v3605, %v3604
      %v3630 = vpack.c.b16 %v3607, %v3606
      %v3631 = vpack.c.b16 %v3609, %v3608
      %v3632 = vpack.c.b16 %v3611, %v3610
      %v3633 = vpack.c.b16 %v3613, %v3612
      %v3634 = vpack.c.b16 %v3615, %v3614
      %v3635 = vpack.c.b16 %v3617, %v3616
      %v3636 = vpack.c.b16 %v3619, %v3618
      %v3637 = vpack.c.b16 %v3621, %v3620
      %v3638 = vpack.c.b16 %v3623, %v3622
      %v3639 = vpack.c.b16 %v3625, %v3624
      %v3640 = vpack.c.b16 %v3626, %v3626
      %v3655 = vsel %vm2383, %v3568, 0
      %v3658 = vsel %vm2383, %v3570, 0
      %v3661 = vsel %vm2390, %v3640, 0
      %3663 = vmatpush.bf16.msra.mxu0 %v3634
      %3664 = vmatpush.bf16.msra.mxu0 %v3633
      %3665 = vmatpush.bf16.msra.mxu0 %v3632
      %3666 = vmatpush.bf16.msra.mxu0 %v3631
      %3667 = vmatpush.bf16.msra.mxu0 %v3630
      %3668 = vmatpush.bf16.msra.mxu0 %v3629
      %3669 = vmatpush.bf16.msra.mxu0 %v3628
      %3670 = vmatpush.bf16.msra.mxu0 %v3627
      %3671 = vmatmul.bf16.gmra.mxu0 %v3567
      %v3672 = vpop.f32.mrf.mxu0
      %v3673 = vadd.f32 0.0, %v3672
      %v3674 = vpop.f32.mrf.mxu0
      %v3675 = vadd.f32 0.0, %v3674
      %3676 = vmatmul.bf16.gmra.mxu0 %v3569
      %v3677 = vpop.f32.mrf.mxu0
      %v3678 = vadd.f32 0.0, %v3677
      %v3679 = vpop.f32.mrf.mxu0
      %3680 = vdwg.mxu0
      %3681 = vmatpush.bf16.msra.mxu0 0
      %3682 = vmatpush.bf16.msra.mxu0 0
      %3683 = vmatpush.bf16.msra.mxu0 %v3661
      %3684 = vmatpush.bf16.msra.mxu0 %v3639
      %3685 = vmatpush.bf16.msra.mxu0 %v3638
      %3686 = vmatpush.bf16.msra.mxu0 %v3637
      %3687 = vmatpush.bf16.msra.mxu0 %v3636
      %3688 = vmatpush.bf16.msra.mxu0 %v3635
      %3689 = vmatmul.bf16.gmra.mxu0 %v3655
      %v3690 = vpop.f32.mrf.mxu0
      %v3691 = vadd.f32 %v3673, %v3690
      %v3692 = vpop.f32.mrf.mxu0
      %v3693 = vadd.f32 %v3675, %v3692
      %3694 = vmatmul.bf16.gmra.mxu0 %v3658
      %v3695 = vpop.f32.mrf.mxu0
      %v3696 = vadd.f32 %v3678, %v3695
      %v3697 = vpop.f32.mrf.mxu0
      %3698 = vdwg.mxu0
      %v3702 = vunpack.c.l.b16 %v2260
      %v3703 = vunpack.c.h.b16 %v2260
      %v3704 = vunpack.c.l.b16 %v2261
      %v3705 = vunpack.c.h.b16 %v2261
      %v3706 = vunpack.c.l.b16 %v2262
      %v3707 = vunpack.c.h.b16 %v2262
      %v3708 = vpack.c.b16 %v3704, %v3702
      %v3709 = vpack.c.b16 %v3705, %v3703
      %v3710 = vpack.c.b16 %v3706, %v3706
      %v3711 = vpack.c.b16 %v3707, %v3707
      %v3741 = vunpack.c.l.b16 %v1987
      %v3742 = vunpack.c.l.b16 %v1988
      %v3743 = vunpack.c.l.b16 %v1989
      %v3744 = vunpack.c.l.b16 %v1990
      %v3745 = vunpack.c.l.b16 %v1991
      %v3746 = vunpack.c.l.b16 %v1992
      %v3747 = vunpack.c.l.b16 %v1993
      %v3748 = vunpack.c.l.b16 %v1994
      %v3749 = vunpack.c.l.b16 %v1995
      %v3750 = vunpack.c.l.b16 %v1996
      %v3751 = vunpack.c.l.b16 %v1997
      %v3752 = vunpack.c.l.b16 %v1998
      %v3753 = vunpack.c.l.b16 %v1999
      %v3754 = vunpack.c.l.b16 %v2000
      %v3755 = vunpack.c.l.b16 %v2001
      %v3756 = vunpack.c.l.b16 %v2002
      %v3757 = vunpack.c.l.b16 %v2003
      %v3758 = vunpack.c.l.b16 %v2004
      %v3759 = vunpack.c.l.b16 %v2005
      %v3760 = vunpack.c.l.b16 %v2006
      %v3761 = vunpack.c.l.b16 %v2007
      %v3762 = vunpack.c.l.b16 %v2008
      %v3763 = vunpack.c.l.b16 %v2009
      %v3764 = vunpack.c.l.b16 %v2010
      %v3765 = vunpack.c.l.b16 %v2011
      %v3766 = vunpack.c.l.b16 %v2012
      %v3767 = vunpack.c.l.b16 %v2013
      %v3768 = vpack.c.b16 %v3742, %v3741
      %v3769 = vpack.c.b16 %v3744, %v3743
      %v3770 = vpack.c.b16 %v3746, %v3745
      %v3771 = vpack.c.b16 %v3748, %v3747
      %v3772 = vpack.c.b16 %v3750, %v3749
      %v3773 = vpack.c.b16 %v3752, %v3751
      %v3774 = vpack.c.b16 %v3754, %v3753
      %v3775 = vpack.c.b16 %v3756, %v3755
      %v3776 = vpack.c.b16 %v3758, %v3757
      %v3777 = vpack.c.b16 %v3760, %v3759
      %v3778 = vpack.c.b16 %v3762, %v3761
      %v3779 = vpack.c.b16 %v3764, %v3763
      %v3780 = vpack.c.b16 %v3766, %v3765
      %v3781 = vpack.c.b16 %v3767, %v3767
      %v3796 = vsel %vm2383, %v3709, 0
      %v3799 = vsel %vm2383, %v3711, 0
      %v3802 = vsel %vm2390, %v3781, 0
      %3804 = vmatpush.bf16.msra.mxu0 %v3775
      %3805 = vmatpush.bf16.msra.mxu0 %v3774
      %3806 = vmatpush.bf16.msra.mxu0 %v3773
      %3807 = vmatpush.bf16.msra.mxu0 %v3772
      %3808 = vmatpush.bf16.msra.mxu0 %v3771
      %3809 = vmatpush.bf16.msra.mxu0 %v3770
      %3810 = vmatpush.bf16.msra.mxu0 %v3769
      %3811 = vmatpush.bf16.msra.mxu0 %v3768
      %3812 = vmatmul.bf16.gmra.mxu0 %v3708
      %v3813 = vpop.f32.mrf.mxu0
      %v3814 = vadd.f32 0.0, %v3813
      %v3815 = vpop.f32.mrf.mxu0
      %v3816 = vadd.f32 0.0, %v3815
      %3817 = vmatmul.bf16.gmra.mxu0 %v3710
      %v3818 = vpop.f32.mrf.mxu0
      %v3819 = vadd.f32 0.0, %v3818
      %v3820 = vpop.f32.mrf.mxu0
      %3821 = vdwg.mxu0
      %3822 = vmatpush.bf16.msra.mxu0 0
      %3823 = vmatpush.bf16.msra.mxu0 0
      %3824 = vmatpush.bf16.msra.mxu0 %v3802
      %3825 = vmatpush.bf16.msra.mxu0 %v3780
      %3826 = vmatpush.bf16.msra.mxu0 %v3779
      %3827 = vmatpush.bf16.msra.mxu0 %v3778
      %3828 = vmatpush.bf16.msra.mxu0 %v3777
      %3829 = vmatpush.bf16.msra.mxu0 %v3776
      %3830 = vmatmul.bf16.gmra.mxu0 %v3796
      %v3831 = vpop.f32.mrf.mxu0
      %v3832 = vadd.f32 %v3814, %v3831
      %v3833 = vpop.f32.mrf.mxu0
      %v3834 = vadd.f32 %v3816, %v3833
      %3835 = vmatmul.bf16.gmra.mxu0 %v3799
      %v3836 = vpop.f32.mrf.mxu0
      %v3837 = vadd.f32 %v3819, %v3836
      %v3838 = vpop.f32.mrf.mxu0
      %3839 = vdwg.mxu0
      %v3843 = vunpack.c.l.b16 %v2263
      %v3844 = vunpack.c.h.b16 %v2263
      %v3845 = vunpack.c.l.b16 %v2264
      %v3846 = vunpack.c.h.b16 %v2264
      %v3847 = vunpack.c.l.b16 %v2265
      %v3848 = vunpack.c.h.b16 %v2265
      %v3849 = vpack.c.b16 %v3845, %v3843
      %v3850 = vpack.c.b16 %v3846, %v3844
      %v3851 = vpack.c.b16 %v3847, %v3847
      %v3852 = vpack.c.b16 %v3848, %v3848
      %v3882 = vunpack.c.l.b16 %v2014
      %v3883 = vunpack.c.l.b16 %v2015
      %v3884 = vunpack.c.l.b16 %v2016
      %v3885 = vunpack.c.l.b16 %v2017
      %v3886 = vunpack.c.l.b16 %v2018
      %v3887 = vunpack.c.l.b16 %v2019
      %v3888 = vunpack.c.l.b16 %v2020
      %v3889 = vunpack.c.l.b16 %v2021
      %v3890 = vunpack.c.l.b16 %v2022
      %v3891 = vunpack.c.l.b16 %v2023
      %v3892 = vunpack.c.l.b16 %v2024
      %v3893 = vunpack.c.l.b16 %v2025
      %v3894 = vunpack.c.l.b16 %v2026
      %v3895 = vunpack.c.l.b16 %v2027
      %v3896 = vunpack.c.l.b16 %v2028
      %v3897 = vunpack.c.l.b16 %v2029
      %v3898 = vunpack.c.l.b16 %v2030
      %v3899 = vunpack.c.l.b16 %v2031
      %v3900 = vunpack.c.l.b16 %v2032
      %v3901 = vunpack.c.l.b16 %v2033
      %v3902 = vunpack.c.l.b16 %v2034
      %v3903 = vunpack.c.l.b16 %v2035
      %v3904 = vunpack.c.l.b16 %v2036
      %v3905 = vunpack.c.l.b16 %v2037
      %v3906 = vunpack.c.l.b16 %v2038
      %v3907 = vunpack.c.l.b16 %v2039
      %v3908 = vunpack.c.l.b16 %v2040
      %v3909 = vpack.c.b16 %v3883, %v3882
      %v3910 = vpack.c.b16 %v3885, %v3884
      %v3911 = vpack.c.b16 %v3887, %v3886
      %v3912 = vpack.c.b16 %v3889, %v3888
      %v3913 = vpack.c.b16 %v3891, %v3890
      %v3914 = vpack.c.b16 %v3893, %v3892
      %v3915 = vpack.c.b16 %v3895, %v3894
      %v3916 = vpack.c.b16 %v3897, %v3896
      %v3917 = vpack.c.b16 %v3899, %v3898
      %v3918 = vpack.c.b16 %v3901, %v3900
      %v3919 = vpack.c.b16 %v3903, %v3902
      %v3920 = vpack.c.b16 %v3905, %v3904
      %v3921 = vpack.c.b16 %v3907, %v3906
      %v3922 = vpack.c.b16 %v3908, %v3908
      %v3937 = vsel %vm2383, %v3850, 0
      %v3940 = vsel %vm2383, %v3852, 0
      %v3943 = vsel %vm2390, %v3922, 0
      %3945 = vmatpush.bf16.msra.mxu0 %v3916
      %3946 = vmatpush.bf16.msra.mxu0 %v3915
      %3947 = vmatpush.bf16.msra.mxu0 %v3914
      %3948 = vmatpush.bf16.msra.mxu0 %v3913
      %3949 = vmatpush.bf16.msra.mxu0 %v3912
      %3950 = vmatpush.bf16.msra.mxu0 %v3911
      %3951 = vmatpush.bf16.msra.mxu0 %v3910
      %3952 = vmatpush.bf16.msra.mxu0 %v3909
      %3953 = vmatmul.bf16.gmra.mxu0 %v3849
      %v3954 = vpop.f32.mrf.mxu0
      %v3955 = vadd.f32 0.0, %v3954
      %v3956 = vpop.f32.mrf.mxu0
      %v3957 = vadd.f32 0.0, %v3956
      %3958 = vmatmul.bf16.gmra.mxu0 %v3851
      %v3959 = vpop.f32.mrf.mxu0
      %v3960 = vadd.f32 0.0, %v3959
      %v3961 = vpop.f32.mrf.mxu0
      %3962 = vdwg.mxu0
      %3963 = vmatpush.bf16.msra.mxu0 0
      %3964 = vmatpush.bf16.msra.mxu0 0
      %3965 = vmatpush.bf16.msra.mxu0 %v3943
      %3966 = vmatpush.bf16.msra.mxu0 %v3921
      %3967 = vmatpush.bf16.msra.mxu0 %v3920
      %3968 = vmatpush.bf16.msra.mxu0 %v3919
      %3969 = vmatpush.bf16.msra.mxu0 %v3918
      %3970 = vmatpush.bf16.msra.mxu0 %v3917
      %3971 = vmatmul.bf16.gmra.mxu0 %v3937
      %v3972 = vpop.f32.mrf.mxu0
      %v3973 = vadd.f32 %v3955, %v3972
      %v3974 = vpop.f32.mrf.mxu0
      %v3975 = vadd.f32 %v3957, %v3974
      %3976 = vmatmul.bf16.gmra.mxu0 %v3940
      %v3977 = vpop.f32.mrf.mxu0
      %v3978 = vadd.f32 %v3960, %v3977
      %v3979 = vpop.f32.mrf.mxu0
      %3980 = vdwg.mxu0
      %v3984 = vunpack.c.l.b16 %v2266
      %v3985 = vunpack.c.h.b16 %v2266
      %v3986 = vunpack.c.l.b16 %v2267
      %v3987 = vunpack.c.h.b16 %v2267
      %v3988 = vunpack.c.l.b16 %v2268
      %v3989 = vunpack.c.h.b16 %v2268
      %v3990 = vpack.c.b16 %v3986, %v3984
      %v3991 = vpack.c.b16 %v3987, %v3985
      %v3992 = vpack.c.b16 %v3988, %v3988
      %v3993 = vpack.c.b16 %v3989, %v3989
      %v4023 = vunpack.c.l.b16 %v2041
      %v4024 = vunpack.c.l.b16 %v2042
      %v4025 = vunpack.c.l.b16 %v2043
      %v4026 = vunpack.c.l.b16 %v2044
      %v4027 = vunpack.c.l.b16 %v2045
      %v4028 = vunpack.c.l.b16 %v2046
      %v4029 = vunpack.c.l.b16 %v2047
      %v4030 = vunpack.c.l.b16 %v2048
      %v4031 = vunpack.c.l.b16 %v2049
      %v4032 = vunpack.c.l.b16 %v2050
      %v4033 = vunpack.c.l.b16 %v2051
      %v4034 = vunpack.c.l.b16 %v2052
      %v4035 = vunpack.c.l.b16 %v2053
      %v4036 = vunpack.c.l.b16 %v2054
      %v4037 = vunpack.c.l.b16 %v2055
      %v4038 = vunpack.c.l.b16 %v2056
      %v4039 = vunpack.c.l.b16 %v2057
      %v4040 = vunpack.c.l.b16 %v2058
      %v4041 = vunpack.c.l.b16 %v2059
      %v4042 = vunpack.c.l.b16 %v2060
      %v4043 = vunpack.c.l.b16 %v2061
      %v4044 = vunpack.c.l.b16 %v2062
      %v4045 = vunpack.c.l.b16 %v2063
      %v4046 = vunpack.c.l.b16 %v2064
      %v4047 = vunpack.c.l.b16 %v2065
      %v4048 = vunpack.c.l.b16 %v2066
      %v4049 = vunpack.c.l.b16 %v2067
      %v4050 = vpack.c.b16 %v4024, %v4023
      %v4051 = vpack.c.b16 %v4026, %v4025
      %v4052 = vpack.c.b16 %v4028, %v4027
      %v4053 = vpack.c.b16 %v4030, %v4029
      %v4054 = vpack.c.b16 %v4032, %v4031
      %v4055 = vpack.c.b16 %v4034, %v4033
      %v4056 = vpack.c.b16 %v4036, %v4035
      %v4057 = vpack.c.b16 %v4038, %v4037
      %v4058 = vpack.c.b16 %v4040, %v4039
      %v4059 = vpack.c.b16 %v4042, %v4041
      %v4060 = vpack.c.b16 %v4044, %v4043
      %v4061 = vpack.c.b16 %v4046, %v4045
      %v4062 = vpack.c.b16 %v4048, %v4047
      %v4063 = vpack.c.b16 %v4049, %v4049
      %v4078 = vsel %vm2383, %v3991, 0
      %v4081 = vsel %vm2383, %v3993, 0
      %v4084 = vsel %vm2390, %v4063, 0
      %4086 = vmatpush.bf16.msra.mxu0 %v4057
      %4087 = vmatpush.bf16.msra.mxu0 %v4056
      %4088 = vmatpush.bf16.msra.mxu0 %v4055
      %4089 = vmatpush.bf16.msra.mxu0 %v4054
      %4090 = vmatpush.bf16.msra.mxu0 %v4053
      %4091 = vmatpush.bf16.msra.mxu0 %v4052
      %4092 = vmatpush.bf16.msra.mxu0 %v4051
      %4093 = vmatpush.bf16.msra.mxu0 %v4050
      %4094 = vmatmul.bf16.gmra.mxu0 %v3990
      %v4095 = vpop.f32.mrf.mxu0
      %v4096 = vadd.f32 0.0, %v4095
      %v4097 = vpop.f32.mrf.mxu0
      %v4098 = vadd.f32 0.0, %v4097
      %4099 = vmatmul.bf16.gmra.mxu0 %v3992
      %v4100 = vpop.f32.mrf.mxu0
      %v4101 = vadd.f32 0.0, %v4100
      %v4102 = vpop.f32.mrf.mxu0
      %4103 = vdwg.mxu0
      %4104 = vmatpush.bf16.msra.mxu0 0
      %4105 = vmatpush.bf16.msra.mxu0 0
      %4106 = vmatpush.bf16.msra.mxu0 %v4084
      %4107 = vmatpush.bf16.msra.mxu0 %v4062
      %4108 = vmatpush.bf16.msra.mxu0 %v4061
      %4109 = vmatpush.bf16.msra.mxu0 %v4060
      %4110 = vmatpush.bf16.msra.mxu0 %v4059
      %4111 = vmatpush.bf16.msra.mxu0 %v4058
      %4112 = vmatmul.bf16.gmra.mxu0 %v4078
      %v4113 = vpop.f32.mrf.mxu0
      %v4114 = vadd.f32 %v4096, %v4113
      %v4115 = vpop.f32.mrf.mxu0
      %v4116 = vadd.f32 %v4098, %v4115
      %4117 = vmatmul.bf16.gmra.mxu0 %v4081
      %v4118 = vpop.f32.mrf.mxu0
      %v4119 = vadd.f32 %v4101, %v4118
      %v4120 = vpop.f32.mrf.mxu0
      %4121 = vdwg.mxu0
      %v4125 = vunpack.c.l.b16 %v2269
      %v4126 = vunpack.c.h.b16 %v2269
      %v4127 = vunpack.c.l.b16 %v2270
      %v4128 = vunpack.c.h.b16 %v2270
      %v4129 = vunpack.c.l.b16 %v2271
      %v4130 = vunpack.c.h.b16 %v2271
      %v4131 = vpack.c.b16 %v4127, %v4125
      %v4132 = vpack.c.b16 %v4128, %v4126
      %v4133 = vpack.c.b16 %v4129, %v4129
      %v4134 = vpack.c.b16 %v4130, %v4130
      %v4164 = vunpack.c.l.b16 %v2068
      %v4165 = vunpack.c.l.b16 %v2069
      %v4166 = vunpack.c.l.b16 %v2070
      %v4167 = vunpack.c.l.b16 %v2071
      %v4168 = vunpack.c.l.b16 %v2072
      %v4169 = vunpack.c.l.b16 %v2073
      %v4170 = vunpack.c.l.b16 %v2074
      %v4171 = vunpack.c.l.b16 %v2075
      %v4172 = vunpack.c.l.b16 %v2076
      %v4173 = vunpack.c.l.b16 %v2077
      %v4174 = vunpack.c.l.b16 %v2078
      %v4175 = vunpack.c.l.b16 %v2079
      %v4176 = vunpack.c.l.b16 %v2080
      %v4177 = vunpack.c.l.b16 %v2081
      %v4178 = vunpack.c.l.b16 %v2082
      %v4179 = vunpack.c.l.b16 %v2083
      %v4180 = vunpack.c.l.b16 %v2084
      %v4181 = vunpack.c.l.b16 %v2085
      %v4182 = vunpack.c.l.b16 %v2086
      %v4183 = vunpack.c.l.b16 %v2087
      %v4184 = vunpack.c.l.b16 %v2088
      %v4185 = vunpack.c.l.b16 %v2089
      %v4186 = vunpack.c.l.b16 %v2090
      %v4187 = vunpack.c.l.b16 %v2091
      %v4188 = vunpack.c.l.b16 %v2092
      %v4189 = vunpack.c.l.b16 %v2093
      %v4190 = vunpack.c.l.b16 %v2094
      %v4191 = vpack.c.b16 %v4165, %v4164
      %v4192 = vpack.c.b16 %v4167, %v4166
      %v4193 = vpack.c.b16 %v4169, %v4168
      %v4194 = vpack.c.b16 %v4171, %v4170
      %v4195 = vpack.c.b16 %v4173, %v4172
      %v4196 = vpack.c.b16 %v4175, %v4174
      %v4197 = vpack.c.b16 %v4177, %v4176
      %v4198 = vpack.c.b16 %v4179, %v4178
      %v4199 = vpack.c.b16 %v4181, %v4180
      %v4200 = vpack.c.b16 %v4183, %v4182
      %v4201 = vpack.c.b16 %v4185, %v4184
      %v4202 = vpack.c.b16 %v4187, %v4186
      %v4203 = vpack.c.b16 %v4189, %v4188
      %v4204 = vpack.c.b16 %v4190, %v4190
      %v4219 = vsel %vm2383, %v4132, 0
      %v4222 = vsel %vm2383, %v4134, 0
      %v4225 = vsel %vm2390, %v4204, 0
      %4227 = vmatpush.bf16.msra.mxu0 %v4198
      %4228 = vmatpush.bf16.msra.mxu0 %v4197
      %4229 = vmatpush.bf16.msra.mxu0 %v4196
      %4230 = vmatpush.bf16.msra.mxu0 %v4195
      %4231 = vmatpush.bf16.msra.mxu0 %v4194
      %4232 = vmatpush.bf16.msra.mxu0 %v4193
      %4233 = vmatpush.bf16.msra.mxu0 %v4192
      %4234 = vmatpush.bf16.msra.mxu0 %v4191
      %4235 = vmatmul.bf16.gmra.mxu0 %v4131
      %v4236 = vpop.f32.mrf.mxu0
      %v4237 = vadd.f32 0.0, %v4236
      %v4238 = vpop.f32.mrf.mxu0
      %v4239 = vadd.f32 0.0, %v4238
      %4240 = vmatmul.bf16.gmra.mxu0 %v4133
      %v4241 = vpop.f32.mrf.mxu0
      %v4242 = vadd.f32 0.0, %v4241
      %v4243 = vpop.f32.mrf.mxu0
      %4244 = vdwg.mxu0
      %4245 = vmatpush.bf16.msra.mxu0 0
      %4246 = vmatpush.bf16.msra.mxu0 0
      %4247 = vmatpush.bf16.msra.mxu0 %v4225
      %4248 = vmatpush.bf16.msra.mxu0 %v4203
      %4249 = vmatpush.bf16.msra.mxu0 %v4202
      %4250 = vmatpush.bf16.msra.mxu0 %v4201
      %4251 = vmatpush.bf16.msra.mxu0 %v4200
      %4252 = vmatpush.bf16.msra.mxu0 %v4199
      %4253 = vmatmul.bf16.gmra.mxu0 %v4219
      %v4254 = vpop.f32.mrf.mxu0
      %v4255 = vadd.f32 %v4237, %v4254
      %v4256 = vpop.f32.mrf.mxu0
      %v4257 = vadd.f32 %v4239, %v4256
      %4258 = vmatmul.bf16.gmra.mxu0 %v4222
      %v4259 = vpop.f32.mrf.mxu0
      %v4260 = vadd.f32 %v4242, %v4259
      %v4261 = vpop.f32.mrf.mxu0
      %4262 = vdwg.mxu0
      %v4266 = vunpack.c.l.b16 %v2272
      %v4267 = vunpack.c.h.b16 %v2272
      %v4268 = vunpack.c.l.b16 %v2273
      %v4269 = vunpack.c.h.b16 %v2273
      %v4270 = vunpack.c.l.b16 %v2274
      %v4271 = vunpack.c.h.b16 %v2274
      %v4272 = vpack.c.b16 %v4268, %v4266
      %v4273 = vpack.c.b16 %v4269, %v4267
      %v4274 = vpack.c.b16 %v4270, %v4270
      %v4275 = vpack.c.b16 %v4271, %v4271
      %v4305 = vunpack.c.l.b16 %v2095
      %v4306 = vunpack.c.l.b16 %v2096
      %v4307 = vunpack.c.l.b16 %v2097
      %v4308 = vunpack.c.l.b16 %v2098
      %v4309 = vunpack.c.l.b16 %v2099
      %v4310 = vunpack.c.l.b16 %v2100
      %v4311 = vunpack.c.l.b16 %v2101
      %v4312 = vunpack.c.l.b16 %v2102
      %v4313 = vunpack.c.l.b16 %v2103
      %v4314 = vunpack.c.l.b16 %v2104
      %v4315 = vunpack.c.l.b16 %v2105
      %v4316 = vunpack.c.l.b16 %v2106
      %v4317 = vunpack.c.l.b16 %v2107
      %v4318 = vunpack.c.l.b16 %v2108
      %v4319 = vunpack.c.l.b16 %v2109
      %v4320 = vunpack.c.l.b16 %v2110
      %v4321 = vunpack.c.l.b16 %v2111
      %v4322 = vunpack.c.l.b16 %v2112
      %v4323 = vunpack.c.l.b16 %v2113
      %v4324 = vunpack.c.l.b16 %v2114
      %v4325 = vunpack.c.l.b16 %v2115
      %v4326 = vunpack.c.l.b16 %v2116
      %v4327 = vunpack.c.l.b16 %v2117
      %v4328 = vunpack.c.l.b16 %v2118
      %v4329 = vunpack.c.l.b16 %v2119
      %v4330 = vunpack.c.l.b16 %v2120
      %v4331 = vunpack.c.l.b16 %v2121
      %v4332 = vpack.c.b16 %v4306, %v4305
      %v4333 = vpack.c.b16 %v4308, %v4307
      %v4334 = vpack.c.b16 %v4310, %v4309
      %v4335 = vpack.c.b16 %v4312, %v4311
      %v4336 = vpack.c.b16 %v4314, %v4313
      %v4337 = vpack.c.b16 %v4316, %v4315
      %v4338 = vpack.c.b16 %v4318, %v4317
      %v4339 = vpack.c.b16 %v4320, %v4319
      %v4340 = vpack.c.b16 %v4322, %v4321
      %v4341 = vpack.c.b16 %v4324, %v4323
      %v4342 = vpack.c.b16 %v4326, %v4325
      %v4343 = vpack.c.b16 %v4328, %v4327
      %v4344 = vpack.c.b16 %v4330, %v4329
      %v4345 = vpack.c.b16 %v4331, %v4331
      %v4360 = vsel %vm2383, %v4273, 0
      %v4363 = vsel %vm2383, %v4275, 0
      %v4366 = vsel %vm2390, %v4345, 0
      %4368 = vmatpush.bf16.msra.mxu0 %v4339
      %4369 = vmatpush.bf16.msra.mxu0 %v4338
      %4370 = vmatpush.bf16.msra.mxu0 %v4337
      %4371 = vmatpush.bf16.msra.mxu0 %v4336
      %4372 = vmatpush.bf16.msra.mxu0 %v4335
      %4373 = vmatpush.bf16.msra.mxu0 %v4334
      %4374 = vmatpush.bf16.msra.mxu0 %v4333
      %4375 = vmatpush.bf16.msra.mxu0 %v4332
      %4376 = vmatmul.bf16.gmra.mxu0 %v4272
      %v4377 = vpop.f32.mrf.mxu0
      %v4378 = vadd.f32 0.0, %v4377
      %v4379 = vpop.f32.mrf.mxu0
      %v4380 = vadd.f32 0.0, %v4379
      %4381 = vmatmul.bf16.gmra.mxu0 %v4274
      %v4382 = vpop.f32.mrf.mxu0
      %v4383 = vadd.f32 0.0, %v4382
      %v4384 = vpop.f32.mrf.mxu0
      %4385 = vdwg.mxu0
      %4386 = vmatpush.bf16.msra.mxu0 0
      %4387 = vmatpush.bf16.msra.mxu0 0
      %4388 = vmatpush.bf16.msra.mxu0 %v4366
      %4389 = vmatpush.bf16.msra.mxu0 %v4344
      %4390 = vmatpush.bf16.msra.mxu0 %v4343
      %4391 = vmatpush.bf16.msra.mxu0 %v4342
      %4392 = vmatpush.bf16.msra.mxu0 %v4341
      %4393 = vmatpush.bf16.msra.mxu0 %v4340
      %4394 = vmatmul.bf16.gmra.mxu0 %v4360
      %v4395 = vpop.f32.mrf.mxu0
      %v4396 = vadd.f32 %v4378, %v4395
      %v4397 = vpop.f32.mrf.mxu0
      %v4398 = vadd.f32 %v4380, %v4397
      %4399 = vmatmul.bf16.gmra.mxu0 %v4363
      %v4400 = vpop.f32.mrf.mxu0
      %v4401 = vadd.f32 %v4383, %v4400
      %v4402 = vpop.f32.mrf.mxu0
      %4403 = vdwg.mxu0
      %v4407 = vunpack.c.l.b16 %v2275
      %v4408 = vunpack.c.h.b16 %v2275
      %v4409 = vunpack.c.l.b16 %v2276
      %v4410 = vunpack.c.h.b16 %v2276
      %v4411 = vunpack.c.l.b16 %v2277
      %v4412 = vunpack.c.h.b16 %v2277
      %v4413 = vpack.c.b16 %v4409, %v4407
      %v4414 = vpack.c.b16 %v4410, %v4408
      %v4415 = vpack.c.b16 %v4411, %v4411
      %v4416 = vpack.c.b16 %v4412, %v4412
      %v4446 = vunpack.c.l.b16 %v2122
      %v4447 = vunpack.c.l.b16 %v2123
      %v4448 = vunpack.c.l.b16 %v2124
      %v4449 = vunpack.c.l.b16 %v2125
      %v4450 = vunpack.c.l.b16 %v2126
      %v4451 = vunpack.c.l.b16 %v2127
      %v4452 = vunpack.c.l.b16 %v2128
      %v4453 = vunpack.c.l.b16 %v2129
      %v4454 = vunpack.c.l.b16 %v2130
      %v4455 = vunpack.c.l.b16 %v2131
      %v4456 = vunpack.c.l.b16 %v2132
      %v4457 = vunpack.c.l.b16 %v2133
      %v4458 = vunpack.c.l.b16 %v2134
      %v4459 = vunpack.c.l.b16 %v2135
      %v4460 = vunpack.c.l.b16 %v2136
      %v4461 = vunpack.c.l.b16 %v2137
      %v4462 = vunpack.c.l.b16 %v2138
      %v4463 = vunpack.c.l.b16 %v2139
      %v4464 = vunpack.c.l.b16 %v2140
      %v4465 = vunpack.c.l.b16 %v2141
      %v4466 = vunpack.c.l.b16 %v2142
      %v4467 = vunpack.c.l.b16 %v2143
      %v4468 = vunpack.c.l.b16 %v2144
      %v4469 = vunpack.c.l.b16 %v2145
      %v4470 = vunpack.c.l.b16 %v2146
      %v4471 = vunpack.c.l.b16 %v2147
      %v4472 = vunpack.c.l.b16 %v2148
      %v4473 = vpack.c.b16 %v4447, %v4446
      %v4474 = vpack.c.b16 %v4449, %v4448
      %v4475 = vpack.c.b16 %v4451, %v4450
      %v4476 = vpack.c.b16 %v4453, %v4452
      %v4477 = vpack.c.b16 %v4455, %v4454
      %v4478 = vpack.c.b16 %v4457, %v4456
      %v4479 = vpack.c.b16 %v4459, %v4458
      %v4480 = vpack.c.b16 %v4461, %v4460
      %v4481 = vpack.c.b16 %v4463, %v4462
      %v4482 = vpack.c.b16 %v4465, %v4464
      %v4483 = vpack.c.b16 %v4467, %v4466
      %v4484 = vpack.c.b16 %v4469, %v4468
      %v4485 = vpack.c.b16 %v4471, %v4470
      %v4486 = vpack.c.b16 %v4472, %v4472
      %v4501 = vsel %vm2383, %v4414, 0
      %v4504 = vsel %vm2383, %v4416, 0
      %v4507 = vsel %vm2390, %v4486, 0
      %4509 = vmatpush.bf16.msra.mxu0 %v4480
      %4510 = vmatpush.bf16.msra.mxu0 %v4479
      %4511 = vmatpush.bf16.msra.mxu0 %v4478
      %4512 = vmatpush.bf16.msra.mxu0 %v4477
      %4513 = vmatpush.bf16.msra.mxu0 %v4476
      %4514 = vmatpush.bf16.msra.mxu0 %v4475
      %4515 = vmatpush.bf16.msra.mxu0 %v4474
      %4516 = vmatpush.bf16.msra.mxu0 %v4473
      %4517 = vmatmul.bf16.gmra.mxu0 %v4413
      %v4518 = vpop.f32.mrf.mxu0
      %v4519 = vadd.f32 0.0, %v4518
      %v4520 = vpop.f32.mrf.mxu0
      %v4521 = vadd.f32 0.0, %v4520
      %4522 = vmatmul.bf16.gmra.mxu0 %v4415
      %v4523 = vpop.f32.mrf.mxu0
      %v4524 = vadd.f32 0.0, %v4523
      %v4525 = vpop.f32.mrf.mxu0
      %4526 = vdwg.mxu0
      %4527 = vmatpush.bf16.msra.mxu0 0
      %4528 = vmatpush.bf16.msra.mxu0 0
      %4529 = vmatpush.bf16.msra.mxu0 %v4507
      %4530 = vmatpush.bf16.msra.mxu0 %v4485
      %4531 = vmatpush.bf16.msra.mxu0 %v4484
      %4532 = vmatpush.bf16.msra.mxu0 %v4483
      %4533 = vmatpush.bf16.msra.mxu0 %v4482
      %4534 = vmatpush.bf16.msra.mxu0 %v4481
      %4535 = vmatmul.bf16.gmra.mxu0 %v4501
      %v4536 = vpop.f32.mrf.mxu0
      %v4537 = vadd.f32 %v4519, %v4536
      %v4538 = vpop.f32.mrf.mxu0
      %v4539 = vadd.f32 %v4521, %v4538
      %4540 = vmatmul.bf16.gmra.mxu0 %v4504
      %v4541 = vpop.f32.mrf.mxu0
      %v4542 = vadd.f32 %v4524, %v4541
      %v4543 = vpop.f32.mrf.mxu0
      %4544 = vdwg.mxu0
      %v4548 = vunpack.c.l.b16 %v2278
      %v4549 = vunpack.c.h.b16 %v2278
      %v4550 = vunpack.c.l.b16 %v2279
      %v4551 = vunpack.c.h.b16 %v2279
      %v4552 = vunpack.c.l.b16 %v2280
      %v4553 = vunpack.c.h.b16 %v2280
      %v4554 = vpack.c.b16 %v4550, %v4548
      %v4555 = vpack.c.b16 %v4551, %v4549
      %v4556 = vpack.c.b16 %v4552, %v4552
      %v4557 = vpack.c.b16 %v4553, %v4553
      %v4587 = vunpack.c.l.b16 %v2149
      %v4588 = vunpack.c.l.b16 %v2150
      %v4589 = vunpack.c.l.b16 %v2151
      %v4590 = vunpack.c.l.b16 %v2152
      %v4591 = vunpack.c.l.b16 %v2153
      %v4592 = vunpack.c.l.b16 %v2154
      %v4593 = vunpack.c.l.b16 %v2155
      %v4594 = vunpack.c.l.b16 %v2156
      %v4595 = vunpack.c.l.b16 %v2157
      %v4596 = vunpack.c.l.b16 %v2158
      %v4597 = vunpack.c.l.b16 %v2159
      %v4598 = vunpack.c.l.b16 %v2160
      %v4599 = vunpack.c.l.b16 %v2161
      %v4600 = vunpack.c.l.b16 %v2162
      %v4601 = vunpack.c.l.b16 %v2163
      %v4602 = vunpack.c.l.b16 %v2164
      %v4603 = vunpack.c.l.b16 %v2165
      %v4604 = vunpack.c.l.b16 %v2166
      %v4605 = vunpack.c.l.b16 %v2167
      %v4606 = vunpack.c.l.b16 %v2168
      %v4607 = vunpack.c.l.b16 %v2169
      %v4608 = vunpack.c.l.b16 %v2170
      %v4609 = vunpack.c.l.b16 %v2171
      %v4610 = vunpack.c.l.b16 %v2172
      %v4611 = vunpack.c.l.b16 %v2173
      %v4612 = vunpack.c.l.b16 %v2174
      %v4613 = vunpack.c.l.b16 %v2175
      %v4614 = vpack.c.b16 %v4588, %v4587
      %v4615 = vpack.c.b16 %v4590, %v4589
      %v4616 = vpack.c.b16 %v4592, %v4591
      %v4617 = vpack.c.b16 %v4594, %v4593
      %v4618 = vpack.c.b16 %v4596, %v4595
      %v4619 = vpack.c.b16 %v4598, %v4597
      %v4620 = vpack.c.b16 %v4600, %v4599
      %v4621 = vpack.c.b16 %v4602, %v4601
      %v4622 = vpack.c.b16 %v4604, %v4603
      %v4623 = vpack.c.b16 %v4606, %v4605
      %v4624 = vpack.c.b16 %v4608, %v4607
      %v4625 = vpack.c.b16 %v4610, %v4609
      %v4626 = vpack.c.b16 %v4612, %v4611
      %v4627 = vpack.c.b16 %v4613, %v4613
      %v4642 = vsel %vm2383, %v4555, 0
      %v4645 = vsel %vm2383, %v4557, 0
      %v4648 = vsel %vm2390, %v4627, 0
      %4650 = vmatpush.bf16.msra.mxu0 %v4621
      %4651 = vmatpush.bf16.msra.mxu0 %v4620
      %4652 = vmatpush.bf16.msra.mxu0 %v4619
      %4653 = vmatpush.bf16.msra.mxu0 %v4618
      %4654 = vmatpush.bf16.msra.mxu0 %v4617
      %4655 = vmatpush.bf16.msra.mxu0 %v4616
      %4656 = vmatpush.bf16.msra.mxu0 %v4615
      %4657 = vmatpush.bf16.msra.mxu0 %v4614
      %4658 = vmatmul.bf16.gmra.mxu0 %v4554
      %v4659 = vpop.f32.mrf.mxu0
      %v4660 = vadd.f32 0.0, %v4659
      %v4661 = vpop.f32.mrf.mxu0
      %v4662 = vadd.f32 0.0, %v4661
      %4663 = vmatmul.bf16.gmra.mxu0 %v4556
      %v4664 = vpop.f32.mrf.mxu0
      %v4665 = vadd.f32 0.0, %v4664
      %v4666 = vpop.f32.mrf.mxu0
      %4667 = vdwg.mxu0
      %4668 = vmatpush.bf16.msra.mxu0 0
      %4669 = vmatpush.bf16.msra.mxu0 0
      %4670 = vmatpush.bf16.msra.mxu0 %v4648
      %4671 = vmatpush.bf16.msra.mxu0 %v4626
      %4672 = vmatpush.bf16.msra.mxu0 %v4625
      %4673 = vmatpush.bf16.msra.mxu0 %v4624
      %4674 = vmatpush.bf16.msra.mxu0 %v4623
      %4675 = vmatpush.bf16.msra.mxu0 %v4622
      %4676 = vmatmul.bf16.gmra.mxu0 %v4642
      %v4677 = vpop.f32.mrf.mxu0
      %v4678 = vadd.f32 %v4660, %v4677
      %v4679 = vpop.f32.mrf.mxu0
      %v4680 = vadd.f32 %v4662, %v4679
      %4681 = vmatmul.bf16.gmra.mxu0 %v4645
      %v4682 = vpop.f32.mrf.mxu0
      %v4683 = vadd.f32 %v4665, %v4682
      %v4684 = vpop.f32.mrf.mxu0
      %4685 = vdwg.mxu0
      %v4689 = vunpack.c.l.b16 %v2281
      %v4690 = vunpack.c.h.b16 %v2281
      %v4691 = vunpack.c.l.b16 %v2282
      %v4692 = vunpack.c.h.b16 %v2282
      %v4693 = vunpack.c.l.b16 %v2283
      %v4694 = vunpack.c.h.b16 %v2283
      %v4695 = vpack.c.b16 %v4691, %v4689
      %v4696 = vpack.c.b16 %v4692, %v4690
      %v4697 = vpack.c.b16 %v4693, %v4693
      %v4698 = vpack.c.b16 %v4694, %v4694
      %v4728 = vunpack.c.l.b16 %v2176
      %v4729 = vunpack.c.l.b16 %v2177
      %v4730 = vunpack.c.l.b16 %v2178
      %v4731 = vunpack.c.l.b16 %v2179
      %v4732 = vunpack.c.l.b16 %v2180
      %v4733 = vunpack.c.l.b16 %v2181
      %v4734 = vunpack.c.l.b16 %v2182
      %v4735 = vunpack.c.l.b16 %v2183
      %v4736 = vunpack.c.l.b16 %v2184
      %v4737 = vunpack.c.l.b16 %v2185
      %v4738 = vunpack.c.l.b16 %v2186
      %v4739 = vunpack.c.l.b16 %v2187
      %v4740 = vunpack.c.l.b16 %v2188
      %v4741 = vunpack.c.l.b16 %v2189
      %v4742 = vunpack.c.l.b16 %v2190
      %v4743 = vunpack.c.l.b16 %v2191
      %v4744 = vunpack.c.l.b16 %v2192
      %v4745 = vunpack.c.l.b16 %v2193
      %v4746 = vunpack.c.l.b16 %v2194
      %v4747 = vunpack.c.l.b16 %v2195
      %v4748 = vunpack.c.l.b16 %v2196
      %v4749 = vunpack.c.l.b16 %v2197
      %v4750 = vunpack.c.l.b16 %v2198
      %v4751 = vunpack.c.l.b16 %v2199
      %v4752 = vunpack.c.l.b16 %v2200
      %v4753 = vunpack.c.l.b16 %v2201
      %v4754 = vunpack.c.l.b16 %v2202
      %v4755 = vpack.c.b16 %v4729, %v4728
      %v4756 = vpack.c.b16 %v4731, %v4730
      %v4757 = vpack.c.b16 %v4733, %v4732
      %v4758 = vpack.c.b16 %v4735, %v4734
      %v4759 = vpack.c.b16 %v4737, %v4736
      %v4760 = vpack.c.b16 %v4739, %v4738
      %v4761 = vpack.c.b16 %v4741, %v4740
      %v4762 = vpack.c.b16 %v4743, %v4742
      %v4763 = vpack.c.b16 %v4745, %v4744
      %v4764 = vpack.c.b16 %v4747, %v4746
      %v4765 = vpack.c.b16 %v4749, %v4748
      %v4766 = vpack.c.b16 %v4751, %v4750
      %v4767 = vpack.c.b16 %v4753, %v4752
      %v4768 = vpack.c.b16 %v4754, %v4754
      %v4783 = vsel %vm2383, %v4696, 0
      %v4786 = vsel %vm2383, %v4698, 0
      %v4789 = vsel %vm2390, %v4768, 0
      %4791 = vmatpush.bf16.msra.mxu0 %v4762
      %4792 = vmatpush.bf16.msra.mxu0 %v4761
      %4793 = vmatpush.bf16.msra.mxu0 %v4760
      %4794 = vmatpush.bf16.msra.mxu0 %v4759
      %4795 = vmatpush.bf16.msra.mxu0 %v4758
      %4796 = vmatpush.bf16.msra.mxu0 %v4757
      %4797 = vmatpush.bf16.msra.mxu0 %v4756
      %4798 = vmatpush.bf16.msra.mxu0 %v4755
      %4799 = vmatmul.bf16.gmra.mxu0 %v4695
      %v4800 = vpop.f32.mrf.mxu0
      %v4801 = vadd.f32 0.0, %v4800
      %v4802 = vpop.f32.mrf.mxu0
      %v4803 = vadd.f32 0.0, %v4802
      %4804 = vmatmul.bf16.gmra.mxu0 %v4697
      %v4805 = vpop.f32.mrf.mxu0
      %v4806 = vadd.f32 0.0, %v4805
      %v4807 = vpop.f32.mrf.mxu0
      %4808 = vdwg.mxu0
      %4809 = vmatpush.bf16.msra.mxu0 0
      %4810 = vmatpush.bf16.msra.mxu0 0
      %4811 = vmatpush.bf16.msra.mxu0 %v4789
      %4812 = vmatpush.bf16.msra.mxu0 %v4767
      %4813 = vmatpush.bf16.msra.mxu0 %v4766
      %4814 = vmatpush.bf16.msra.mxu0 %v4765
      %4815 = vmatpush.bf16.msra.mxu0 %v4764
      %4816 = vmatpush.bf16.msra.mxu0 %v4763
      %4817 = vmatmul.bf16.gmra.mxu0 %v4783
      %v4818 = vpop.f32.mrf.mxu0
      %v4819 = vadd.f32 %v4801, %v4818
      %v4820 = vpop.f32.mrf.mxu0
      %v4821 = vadd.f32 %v4803, %v4820
      %4822 = vmatmul.bf16.gmra.mxu0 %v4786
      %v4823 = vpop.f32.mrf.mxu0
      %v4824 = vadd.f32 %v4806, %v4823
      %v4825 = vpop.f32.mrf.mxu0
      %4826 = vdwg.mxu0
      %v4830 = vunpack.c.l.b16 %v2284
      %v4831 = vunpack.c.h.b16 %v2284
      %v4832 = vunpack.c.l.b16 %v2285
      %v4833 = vunpack.c.h.b16 %v2285
      %v4834 = vunpack.c.l.b16 %v2286
      %v4835 = vunpack.c.h.b16 %v2286
      %v4836 = vpack.c.b16 %v4832, %v4830
      %v4837 = vpack.c.b16 %v4833, %v4831
      %v4838 = vpack.c.b16 %v4834, %v4834
      %v4839 = vpack.c.b16 %v4835, %v4835
      %v4869 = vunpack.c.l.b16 %v2203
      %v4870 = vunpack.c.l.b16 %v2204
      %v4871 = vunpack.c.l.b16 %v2205
      %v4872 = vunpack.c.l.b16 %v2206
      %v4873 = vunpack.c.l.b16 %v2207
      %v4874 = vunpack.c.l.b16 %v2208
      %v4875 = vunpack.c.l.b16 %v2209
      %v4876 = vunpack.c.l.b16 %v2210
      %v4877 = vunpack.c.l.b16 %v2211
      %v4878 = vunpack.c.l.b16 %v2212
      %v4879 = vunpack.c.l.b16 %v2213
      %v4880 = vunpack.c.l.b16 %v2214
      %v4881 = vunpack.c.l.b16 %v2215
      %v4882 = vunpack.c.l.b16 %v2216
      %v4883 = vunpack.c.l.b16 %v2217
      %v4884 = vunpack.c.l.b16 %v2218
      %v4885 = vunpack.c.l.b16 %v2219
      %v4886 = vunpack.c.l.b16 %v2220
      %v4887 = vunpack.c.l.b16 %v2221
      %v4888 = vunpack.c.l.b16 %v2222
      %v4889 = vunpack.c.l.b16 %v2223
      %v4890 = vunpack.c.l.b16 %v2224
      %v4891 = vunpack.c.l.b16 %v2225
      %v4892 = vunpack.c.l.b16 %v2226
      %v4893 = vunpack.c.l.b16 %v2227
      %v4894 = vunpack.c.l.b16 %v2228
      %v4895 = vunpack.c.l.b16 %v2229
      %v4896 = vpack.c.b16 %v4870, %v4869
      %v4897 = vpack.c.b16 %v4872, %v4871
      %v4898 = vpack.c.b16 %v4874, %v4873
      %v4899 = vpack.c.b16 %v4876, %v4875
      %v4900 = vpack.c.b16 %v4878, %v4877
      %v4901 = vpack.c.b16 %v4880, %v4879
      %v4902 = vpack.c.b16 %v4882, %v4881
      %v4903 = vpack.c.b16 %v4884, %v4883
      %v4904 = vpack.c.b16 %v4886, %v4885
      %v4905 = vpack.c.b16 %v4888, %v4887
      %v4906 = vpack.c.b16 %v4890, %v4889
      %v4907 = vpack.c.b16 %v4892, %v4891
      %v4908 = vpack.c.b16 %v4894, %v4893
      %v4909 = vpack.c.b16 %v4895, %v4895
      %v4924 = vsel %vm2383, %v4837, 0
      %v4927 = vsel %vm2383, %v4839, 0
      %v4930 = vsel %vm2390, %v4909, 0
      %4932 = vmatpush.bf16.msra.mxu0 %v4903
      %4933 = vmatpush.bf16.msra.mxu0 %v4902
      %4934 = vmatpush.bf16.msra.mxu0 %v4901
      %4935 = vmatpush.bf16.msra.mxu0 %v4900
      %4936 = vmatpush.bf16.msra.mxu0 %v4899
      %4937 = vmatpush.bf16.msra.mxu0 %v4898
      %4938 = vmatpush.bf16.msra.mxu0 %v4897
      %4939 = vmatpush.bf16.msra.mxu0 %v4896
      %4940 = vmatmul.bf16.gmra.mxu0 %v4836
      %v4941 = vpop.f32.mrf.mxu0
      %v4942 = vadd.f32 0.0, %v4941
      %v4943 = vpop.f32.mrf.mxu0
      %v4944 = vadd.f32 0.0, %v4943
      %4945 = vmatmul.bf16.gmra.mxu0 %v4838
      %v4946 = vpop.f32.mrf.mxu0
      %v4947 = vadd.f32 0.0, %v4946
      %v4948 = vpop.f32.mrf.mxu0
      %4949 = vdwg.mxu0
      %4950 = vmatpush.bf16.msra.mxu0 0
      %4951 = vmatpush.bf16.msra.mxu0 0
      %4952 = vmatpush.bf16.msra.mxu0 %v4930
      %4953 = vmatpush.bf16.msra.mxu0 %v4908
      %4954 = vmatpush.bf16.msra.mxu0 %v4907
      %4955 = vmatpush.bf16.msra.mxu0 %v4906
      %4956 = vmatpush.bf16.msra.mxu0 %v4905
      %4957 = vmatpush.bf16.msra.mxu0 %v4904
      %4958 = vmatmul.bf16.gmra.mxu0 %v4924
      %v4959 = vpop.f32.mrf.mxu0
      %v4960 = vadd.f32 %v4942, %v4959
      %v4961 = vpop.f32.mrf.mxu0
      %v4962 = vadd.f32 %v4944, %v4961
      %4963 = vmatmul.bf16.gmra.mxu0 %v4927
      %v4964 = vpop.f32.mrf.mxu0
      %v4965 = vadd.f32 %v4947, %v4964
      %v4966 = vpop.f32.mrf.mxu0
      %4967 = vdwg.mxu0
      %vm4968 = vcmask 400384
      %4969 = vst.msk [vmem:[%s175] sm:$0xff] %vm4968, %v2422
      %4970 = vst.msk [vmem:[%s175 + $0x8] sm:$0xff] %vm4968, %v2424
      %4971 = vst.msk [vmem:[%s175 + $0x10] sm:$0xff] %vm4968, %v2427
      %4972 = vst.msk [vmem:[%s175 + $0x18] sm:$0xff] %vm4968, %v2563
      %4973 = vst.msk [vmem:[%s175 + $0x20] sm:$0xff] %vm4968, %v2565
      %4974 = vst.msk [vmem:[%s175 + $0x28] sm:$0xff] %vm4968, %v2568
      %4975 = vst.msk [vmem:[%s175 + $0x30] sm:$0xff] %vm4968, %v2704
      %4976 = vst.msk [vmem:[%s175 + $0x38] sm:$0xff] %vm4968, %v2706
      %4977 = vst.msk [vmem:[%s175 + $0x40] sm:$0xff] %vm4968, %v2709
      %4978 = vst.msk [vmem:[%s175 + $0x48] sm:$0xff] %vm4968, %v2845
      %4979 = vst.msk [vmem:[%s175 + $0x50] sm:$0xff] %vm4968, %v2847
      %4980 = vst.msk [vmem:[%s175 + $0x58] sm:$0xff] %vm4968, %v2850
      %4981 = vst.msk [vmem:[%s175 + $0x60] sm:$0xff] %vm4968, %v2986
      %4982 = vst.msk [vmem:[%s175 + $0x68] sm:$0xff] %vm4968, %v2988
      %4983 = vst.msk [vmem:[%s175 + $0x70] sm:$0xff] %vm4968, %v2991
      %4984 = vst.msk [vmem:[%s175 + $0x78] sm:$0xff] %vm4968, %v3127
      %4985 = vst.msk [vmem:[%s175 + $0x80] sm:$0xff] %vm4968, %v3129
      %4986 = vst.msk [vmem:[%s175 + $0x88] sm:$0xff] %vm4968, %v3132
      %4987 = vst.msk [vmem:[%s175 + $0x90] sm:$0xff] %vm4968, %v3268
      %4988 = vst.msk [vmem:[%s175 + $0x98] sm:$0xff] %vm4968, %v3270
      %4989 = vst.msk [vmem:[%s175 + $0xa0] sm:$0xff] %vm4968, %v3273
      %4990 = vst.msk [vmem:[%s175 + $0xa8] sm:$0xff] %vm4968, %v3409
      %4991 = vst.msk [vmem:[%s175 + $0xb0] sm:$0xff] %vm4968, %v3411
      %4992 = vst.msk [vmem:[%s175 + $0xb8] sm:$0xff] %vm4968, %v3414
      %4993 = vst.msk [vmem:[%s175 + $0xc0] sm:$0xff] %vm4968, %v3550
      %4994 = vst.msk [vmem:[%s175 + $0xc8] sm:$0xff] %vm4968, %v3552
      %4995 = vst.msk [vmem:[%s175 + $0xd0] sm:$0xff] %vm4968, %v3555
      %4996 = vst.msk [vmem:[%s175 + $0xd8] sm:$0xff] %vm4968, %v3691
      %4997 = vst.msk [vmem:[%s175 + $0xe0] sm:$0xff] %vm4968, %v3693
      %4998 = vst.msk [vmem:[%s175 + $0xe8] sm:$0xff] %vm4968, %v3696
      %4999 = vst.msk [vmem:[%s175 + $0xf0] sm:$0xff] %vm4968, %v3832
      %5000 = vst.msk [vmem:[%s175 + $0xf8] sm:$0xff] %vm4968, %v3834
      %5001 = vst.msk [vmem:[%s175 + $0x100] sm:$0xff] %vm4968, %v3837
      %5002 = vst.msk [vmem:[%s175 + $0x108] sm:$0xff] %vm4968, %v3973
      %5003 = vst.msk [vmem:[%s175 + $0x110] sm:$0xff] %vm4968, %v3975
      %5004 = vst.msk [vmem:[%s175 + $0x118] sm:$0xff] %vm4968, %v3978
      %5005 = vst.msk [vmem:[%s175 + $0x120] sm:$0xff] %vm4968, %v4114
      %5006 = vst.msk [vmem:[%s175 + $0x128] sm:$0xff] %vm4968, %v4116
      %5007 = vst.msk [vmem:[%s175 + $0x130] sm:$0xff] %vm4968, %v4119
      %5008 = vst.msk [vmem:[%s175 + $0x138] sm:$0xff] %vm4968, %v4255
      %5009 = vst.msk [vmem:[%s175 + $0x140] sm:$0xff] %vm4968, %v4257
      %5010 = vst.msk [vmem:[%s175 + $0x148] sm:$0xff] %vm4968, %v4260
      %5011 = vst.msk [vmem:[%s175 + $0x150] sm:$0xff] %vm4968, %v4396
      %5012 = vst.msk [vmem:[%s175 + $0x158] sm:$0xff] %vm4968, %v4398
      %5013 = vst.msk [vmem:[%s175 + $0x160] sm:$0xff] %vm4968, %v4401
      %5014 = vst.msk [vmem:[%s175 + $0x168] sm:$0xff] %vm4968, %v4537
      %5015 = vst.msk [vmem:[%s175 + $0x170] sm:$0xff] %vm4968, %v4539
      %5016 = vst.msk [vmem:[%s175 + $0x178] sm:$0xff] %vm4968, %v4542
      %5017 = vst.msk [vmem:[%s175 + $0x180] sm:$0xff] %vm4968, %v4678
      %5018 = vst.msk [vmem:[%s175 + $0x188] sm:$0xff] %vm4968, %v4680
      %5019 = vst.msk [vmem:[%s175 + $0x190] sm:$0xff] %vm4968, %v4683
      %5020 = vst.msk [vmem:[%s175 + $0x198] sm:$0xff] %vm4968, %v4819
      %5021 = vst.msk [vmem:[%s175 + $0x1a0] sm:$0xff] %vm4968, %v4821
      %5022 = vst.msk [vmem:[%s175 + $0x1a8] sm:$0xff] %vm4968, %v4824
      %5023 = vst.msk [vmem:[%s175 + $0x1b0] sm:$0xff] %vm4968, %v4960
      %5024 = vst.msk [vmem:[%s175 + $0x1b8] sm:$0xff] %vm4968, %v4962
      %5025 = vst.msk [vmem:[%s175 + $0x1c0] sm:$0xff] %vm4968, %v4965
      %s5026 = smul.u32 19, %s13
      %p5027 = scmp.lt.s32.totalorder %s5026, 37
      %s5028 = scalar_select %p5027, %s5026, 37
      %s5029 = smul.addr %s5028, 3
      %s5030 = smul.addr %s5029, 8
      %s5031 = scalar_lea.vmem %s2, %s5030
      // Predicated region
      $region29: #{relu_grouped_conv2d.1} parent=27 // pred_check
        %p5032 = pneg %p83
      $region30: #{relu_grouped_conv2d.1} parent=27 // pred_check_branch
        %5034 = sbr.rel (%p5032) target = $region32
      $region31: #{relu_grouped_conv2d.1} parent=27 // pred_region
        %s5035 = smul.u32 19, %s13
      $region32: #{relu_grouped_conv2d.1} parent=27 // pred_fallthru
        _
    $region28: #{relu_grouped_conv2d.1} parent=5 // pred_fallthru
      _
    %p5036 = scmp.le.s32.totalorder 2, %s8
    // Predicated region
    $region33: #{relu_grouped_conv2d.1} parent=5 // pred_check
      %p5037 = pneg %p5036
    $region34: #{relu_grouped_conv2d.1} parent=5 // pred_check_branch
      %5039 = sbr.rel (%p5037) target = $region36
    $region35: #{relu_grouped_conv2d.1} parent=5 // pred_region
      %s5040 = ssub.s32 %s8, 2
      // Predicated region
      $region37: #{relu_grouped_conv2d.1} parent=35 // pred_check
        %p5041 = pneg %p89
      $region38: #{relu_grouped_conv2d.1} parent=35 // pred_check_branch
        %5043 = sbr.rel (%p5041) target = $region40
      $region39: #{relu_grouped_conv2d.1} parent=35 // pred_region
        %s5044 = smul.u32 19, %s14
        %p5045 = scmp.lt.s32.totalorder %s5044, 37
        %s5046 = scalar_select %p5045, %s5044, 37
        %s5047 = smul.addr %s5046, 3
        %s5048 = smul.addr %s5047, 8
        %s5049 = scalar_lea.vmem %s2, %s5048
      $region40: #{relu_grouped_conv2d.1} parent=35 // pred_fallthru
        _
    $region36: #{relu_grouped_conv2d.1} parent=5 // pred_fallthru
      _
  $region6: #{relu_grouped_conv2d.1} parent=0 // loop_footer
    %s12 = sadd.s32 1, %s8
  $region7: #{relu_grouped_conv2d.1} parent=0 // loop_footer_branch
    %7 = sbr.rel target = $region3
  $region8: #{relu_grouped_conv2d.1} parent=0 // loop_exit
    _

</llo_original>
